<compile_context>
chip_gen: v5e
topology: v5e:2x2
jax: 0.10.0
libtpu: 0.0.40
codegen_flags: <defaults>
</compile_context>

<pallas_src>
import numpy as np
import jax
import jax.numpy as jnp
from jax.experimental import pallas as pl
from jax.experimental.pallas import tpu as pltpu

# Module hyperparameters (small but structurally faithful: 8 layers, skip=(4,), viewdirs head)
D_INPUT = 3
N_LAYERS = 8
D_FILTER = 32
SKIP = (4,)
D_VIEWDIRS = 3
D_PTS = D_INPUT + D_VIEWDIRS   # combined point-slab feature dim


# --------------------------------------------------------------------------- #
# Kernel
# --------------------------------------------------------------------------- #
def nerf_kernel(pts_ref, w_in_ref, wmid_ref, btrunk_ref,
                wra_ref, bra_ref, wbh_ref, wbv_ref, bb_ref, wo_ref, bo_ref,
                out_ref):
    f32, bf16 = jnp.float32, jnp.bfloat16
    pts = pts_ref[...]                                # (6, TN) bf16: rows 0:3 = x, 3:6 = viewdirs

    def mm(w, h):                                     # bf16 x bf16 -> f32 accumulate on the MXU
        return jnp.dot(w, h, preferred_element_type=f32)

    # fused [W0 | 0 ; W5x | 0] @ pts : one MXU weight setup for both x consumers
    xin = mm(w_in_ref[...], pts)                      # (64, TN) f32
    h = jnp.maximum(xin[:D_FILTER, :] + btrunk_ref[0], 0.0)
    skip_pre = xin[D_FILTER:, :]                      # W5x @ x, re-used at the skip layer

    # ---- trunk MLP (feature-major: h is (d_filter, TN), lane-dense) ----
    for j in range(N_LAYERS - 1):                     # static unroll: layers 1..7
        layer = j + 1
        z = mm(wmid_ref[j], h.astype(bf16)) + btrunk_ref[layer]
        if (layer - 1) in SKIP:                       # layer 5 consumes cat([h, x_input])
            z = z + skip_pre
        h = jnp.maximum(z, 0.0)

    # ---- fused rgb_filters + alpha head: [Wr; Wa] @ h -> (33, TN) ----
    ra = mm(wra_ref[...], h.astype(bf16)) + bra_ref[...]
    rgb_feat = ra[:D_FILTER, :]                       # rgb_filters output (no ReLU, matches torch)
    alpha = ra[D_FILTER:, :]                          # (1, TN)

    # ---- view-direction branch: consumes cat([rgb_feat, viewdirs]) -> split matmuls ----
    hb = jnp.maximum(mm(wbh_ref[...], rgb_feat.astype(bf16))
                     + mm(wbv_ref[...], pts)          # Wbv zero-padded over the x rows
                     + bb_ref[...], 0.0)
    rgb = mm(wo_ref[...], hb.astype(bf16)) + bo_ref[...]   # (3, TN)

    # direct lane-dense slice stores (no concat intermediate)
    out_ref[0:3, :] = rgb
    out_ref[3:4, :] = alpha


# --------------------------------------------------------------------------- #
# Wrapper
# --------------------------------------------------------------------------- #
def nerf_forward(pts_t, packed, tile_n=1024):
    """pts_t: (6, N) feature-major [x rows 0:3, viewdirs rows 3:6] -> (4, N) [rgb(3), alpha(1)]."""
    assert pts_t.shape[0] == D_PTS
    n = pts_t.shape[1]

    # cast once to bf16 (halves point HBM traffic; MXU is natively bf16)
    pts = pts_t.astype(jnp.bfloat16)

    # pad ragged N instead of asserting divisibility; padded (zero) points are sliced off
    n_pad = pl.cdiv(n, tile_n) * tile_n
    if n_pad != n:
        pts = jnp.pad(pts, ((0, 0), (0, n_pad - n)))
    grid = (n_pad // tile_n,)

    def full_spec(shape):
        nd = len(shape)
        return pl.BlockSpec(shape, lambda i, _nd=nd: (0,) * _nd)   # grid-invariant weights

    param_specs = [full_spec(p.shape) for p in packed]
    weight_bytes = sum(int(np.prod(p.shape)) * p.dtype.itemsize for p in packed)

    flops_per_pt = 2 * (2 * D_FILTER * D_PTS                        # fused [W0;W5x] @ pts
                        + (N_LAYERS - 1) * D_FILTER * D_FILTER      # trunk layers 1..7
                        + (D_FILTER + 1) * D_FILTER                 # fused rgb_filters + alpha
                        + (D_FILTER // 2) * D_FILTER                # branch (rgb_feat part)
                        + (D_FILTER // 2) * D_PTS                   # branch (viewdirs part)
                        + 3 * (D_FILTER // 2))                      # output layer
    cost = pl.CostEstimate(
        flops=flops_per_pt * n_pad,
        transcendentals=0,
        bytes_accessed=(D_PTS * 2 + 4 * 4) * n_pad + weight_bytes)

    out_t = pl.pallas_call(
        nerf_kernel,
        out_shape=jax.ShapeDtypeStruct((4, n_pad), jnp.float32),
        grid=grid,
        in_specs=[pl.BlockSpec((D_PTS, tile_n), lambda i: (0, i))] + param_specs,
        out_specs=pl.BlockSpec((4, tile_n), lambda i: (0, i)),
        compiler_params=pltpu.CompilerParams(dimension_semantics=("parallel",)),
        cost_estimate=cost,
    )(pts, *packed)

    return out_t[:, :n] if n_pad != n else out_t


# --------------------------------------------------------------------------- #
# Parameter init / packing / pure-JAX reference
# --------------------------------------------------------------------------- #
def init_raw_params(key):
    """Per-layer (W (d_out,d_in), b (d_out,)) mimicking nn.Linear's uniform init."""
    def linear(k, d_in, d_out):
        k1, k2 = jax.random.split(k)
        bound = 1.0 / np.sqrt(d_in)
        W = jax.random.uniform(k1, (d_out, d_in), jnp.float32, -bound, bound)
        b = jax.random.uniform(k2, (d_out,), jnp.float32, -bound, bound)
        return W, b

    keys = jax.random.split(key, N_LAYERS + 4)
    Ws, bs = [], []
    W, b = linear(keys[0], D_INPUT, D_FILTER)
    Ws.append(W); bs.append(b)
    for i in range(1, N_LAYERS):
        d_in = D_FILTER + D_INPUT if (i - 1) in SKIP else D_FILTER
        W, b = linear(keys[i], d_in, D_FILTER)
        Ws.append(W); bs.append(b)
    Wa, ba = linear(keys[N_LAYERS + 0], D_FILTER, 1)                            # alpha_out
    Wr, br = linear(keys[N_LAYERS + 1], D_FILTER, D_FILTER)                     # rgb_filters
    Wb, bb = linear(keys[N_LAYERS + 2], D_FILTER + D_VIEWDIRS, D_FILTER // 2)   # branch
    Wo, bo = linear(keys[N_LAYERS + 3], D_FILTER // 2, 3)                       # output
    return (Ws, bs, Wa, ba, Wr, br, Wb, bb, Wo, bo)


def pack_params(raw):
    """Consolidate the 26 small tensors into 10 kernel inputs; matmul weights in bf16."""
    Ws, bs, Wa, ba, Wr, br, Wb, bb_, Wo, bo_ = raw
    bf16 = jnp.bfloat16

    w_mid, w5x = [], None
    for L in range(1, N_LAYERS):
        W = Ws[L]
        if (L - 1) in SKIP:                              # skip-consumer: split off the x-part
            w_mid.append(W[:, :D_FILTER])
            w5x = W[:, D_FILTER:]                        # (32, d_input)
        else:
            w_mid.append(W)

    zx = jnp.zeros((D_FILTER, D_VIEWDIRS), jnp.float32)
    # fused x-consumers, zero-padded over the viewdirs rows of the point slab
    w_in = jnp.concatenate([jnp.concatenate([Ws[0], zx], axis=1),
                            jnp.concatenate([w5x, zx], axis=1)], axis=0).astype(bf16)  # (64, 6)
    w_mid = jnp.stack(w_mid).astype(bf16)                # (7, 32, 32)
    b_trunk = jnp.stack(bs)[:, :, None]                  # (8, 32, 1) f32
    w_ra = jnp.concatenate([Wr, Wa], axis=0).astype(bf16)    # (33, 32) fused rgb_filters+alpha
    b_ra = jnp.concatenate([br, ba])[:, None]            # (33, 1) f32
    wbh = Wb[:, :D_FILTER].astype(bf16)                  # (16, 32)
    # viewdirs weight, zero-padded over the x rows of the point slab
    wbv = jnp.concatenate([jnp.zeros((D_FILTER // 2, D_INPUT), jnp.float32),
                           Wb[:, D_FILTER:]], axis=1).astype(bf16)                     # (16, 6)
    bb = bb_[:, None]                                    # (16, 1) f32
    wo = Wo.astype(bf16)                                 # (3, 16)
    bo = bo_[:, None]                                    # (3, 1) f32
    return (w_in, w_mid, b_trunk, w_ra, b_ra, wbh, wbv, bb, wo, bo)


def nerf_ref(x, viewdirs, raw):
    """Pure-JAX f32 reference mirroring the PyTorch forward exactly (with real concats)."""
    Ws, bs, Wa, ba, Wr, br, Wb, bb_, Wo, bo_ = raw
    x_in = x
    h = x
    for i in range(N_LAYERS):
        h = jax.nn.relu(h @ Ws[i].T + bs[i])
        if i in SKIP:
            h = jnp.concatenate([h, x_in], axis=-1)
    alpha = h @ Wa.T + ba
    h = h @ Wr.T + br
    h = jnp.concatenate([h, viewdirs], axis=-1)
    h = jax.nn.relu(h @ Wb.T + bb_)
    rgb = h @ Wo.T + bo_
    return jnp.concatenate([rgb, alpha], axis=-1)


# --------------------------------------------------------------------------- #
# Main
# --------------------------------------------------------------------------- #
if __name__ == "__main__":
    key = jax.random.PRNGKey(0)
    k_param, k_pts = jax.random.split(key)

    N = 8000          # ragged on purpose -> exercises the padding path (pads to 8192 = 8 grid steps)
    TILE_N = 1024     # large point tile amortizes per-step pipeline overhead; sweep 2048-8192 for prod N

    raw = init_raw_params(k_param)
    packed = pack_params(raw)

    # feature-major point slab: rows 0:3 = x, rows 3:6 = viewdirs (no wrapper transposes)
    pts_t = jax.random.normal(k_pts, (D_PTS, N), jnp.float32)

    fwd = jax.jit(nerf_forward, static_argnames=("tile_n",))
    out_t = fwd(pts_t, packed, tile_n=TILE_N)            # (4, N)
    out_t = jax.block_until_ready(out_t)

    # reference check (pure f32, point-major, real concats); bf16 matmuls => relaxed tolerance
    x = pts_t[:D_INPUT].T
    viewdirs = pts_t[D_INPUT:].T
    ref = nerf_ref(x, viewdirs, raw)                      # (N, 4)
    np.testing.assert_allclose(np.asarray(out_t.T), np.asarray(ref), atol=3e-2, rtol=3e-2)

    print("KERNEL_OK")
</pallas_src>

<mosaic_0001>
module attributes {stable_mosaic.version = 11 : i64} {
  func.func @nerf_kernel(%arg0: i32, %arg1: memref<6x1024xbf16, #tpu.memory_space<vmem>>, %arg2: memref<64x6xbf16, #tpu.memory_space<vmem>>, %arg3: memref<7x32x32xbf16, #tpu.memory_space<vmem>>, %arg4: memref<8x32x1xf32, #tpu.memory_space<vmem>>, %arg5: memref<33x32xbf16, #tpu.memory_space<vmem>>, %arg6: memref<33x1xf32, #tpu.memory_space<vmem>>, %arg7: memref<16x32xbf16, #tpu.memory_space<vmem>>, %arg8: memref<16x6xbf16, #tpu.memory_space<vmem>>, %arg9: memref<16x1xf32, #tpu.memory_space<vmem>>, %arg10: memref<3x16xbf16, #tpu.memory_space<vmem>>, %arg11: memref<3x1xf32, #tpu.memory_space<vmem>>, %arg12: memref<4x1024xf32, #tpu.memory_space<vmem>>) attributes {dimension_semantics = [#tpu.dimension_semantics<parallel>], iteration_bounds = array<i64: 8>, scalar_prefetch = 0 : i64, scratch_operands = 0 : i64, tpu.core_type = #tpu.core_type<tc>, window_params = [{transform_indices = @transform_0, window_bounds = array<i64: 6, 1024>}, {pipeline_mode = #tpu.pipeline_mode<synchronous>, transform_indices = @transform_1, window_bounds = array<i64: 64, 6>}, {pipeline_mode = #tpu.pipeline_mode<synchronous>, transform_indices = @transform_2, window_bounds = array<i64: 7, 32, 32>}, {pipeline_mode = #tpu.pipeline_mode<synchronous>, transform_indices = @transform_3, window_bounds = array<i64: 8, 32, 1>}, {pipeline_mode = #tpu.pipeline_mode<synchronous>, transform_indices = @transform_4, window_bounds = array<i64: 33, 32>}, {pipeline_mode = #tpu.pipeline_mode<synchronous>, transform_indices = @transform_5, window_bounds = array<i64: 33, 1>}, {pipeline_mode = #tpu.pipeline_mode<synchronous>, transform_indices = @transform_6, window_bounds = array<i64: 16, 32>}, {pipeline_mode = #tpu.pipeline_mode<synchronous>, transform_indices = @transform_7, window_bounds = array<i64: 16, 6>}, {pipeline_mode = #tpu.pipeline_mode<synchronous>, transform_indices = @transform_8, window_bounds = array<i64: 16, 1>}, {pipeline_mode = #tpu.pipeline_mode<synchronous>, transform_indices = @transform_9, window_bounds = array<i64: 3, 16>}, {pipeline_mode = #tpu.pipeline_mode<synchronous>, transform_indices = @transform_10, window_bounds = array<i64: 3, 1>}, {transform_indices = @transform_11, window_bounds = array<i64: 4, 1024>}]} {
    %c0 = arith.constant 0 : index
    %c0_0 = arith.constant 0 : index
    %0 = vector.load %arg1[%c0, %c0_0] : memref<6x1024xbf16, #tpu.memory_space<vmem>>, vector<6x1024xbf16>
    %c0_1 = arith.constant 0 : index
    %c0_2 = arith.constant 0 : index
    %1 = vector.load %arg2[%c0_1, %c0_2] : memref<64x6xbf16, #tpu.memory_space<vmem>>, vector<64x6xbf16>
    %cst = arith.constant dense<0.000000e+00> : vector<64x1024xf32>
    %2 = tpu.matmul %1, %0, %cst {dimension_numbers = #tpu.dot_dimension_numbers<[1], [0], [0], [1], [0, 0, 1, 1], [], []>} : vector<64x6xbf16>, vector<6x1024xbf16>, vector<64x1024xf32> -> vector<64x1024xf32>
    %3 = vector.extract_strided_slice %2 {offsets = [0, 0], sizes = [32, 1024], strides = [1, 1]} : vector<64x1024xf32> to vector<32x1024xf32>
    %c0_3 = arith.constant 0 : index
    %c0_4 = arith.constant 0 : index
    %c0_5 = arith.constant 0 : index
    %4 = vector.load %arg4[%c0_3, %c0_4, %c0_5] : memref<8x32x1xf32, #tpu.memory_space<vmem>>, vector<1x32x1xf32>
    %5 = vector.shape_cast %4 : vector<1x32x1xf32> to vector<32x1xf32>
    %6 = vector.broadcast %5 : vector<32x1xf32> to vector<32x1024xf32>
    %7 = arith.addf %3, %6 : vector<32x1024xf32>
    %cst_6 = arith.constant 0.000000e+00 : f32
    %8 = vector.broadcast %cst_6 : f32 to vector<32x1024xf32>
    %9 = arith.maximumf %7, %8 : vector<32x1024xf32>
    %10 = vector.extract_strided_slice %2 {offsets = [32, 0], sizes = [32, 1024], strides = [1, 1]} : vector<64x1024xf32> to vector<32x1024xf32>
    %c0_7 = arith.constant 0 : index
    %c0_8 = arith.constant 0 : index
    %c0_9 = arith.constant 0 : index
    %11 = vector.load %arg3[%c0_7, %c0_8, %c0_9] : memref<7x32x32xbf16, #tpu.memory_space<vmem>>, vector<1x32x32xbf16>
    %12 = vector.shape_cast %11 : vector<1x32x32xbf16> to vector<32x32xbf16>
    %13 = arith.truncf %9 : vector<32x1024xf32> to vector<32x1024xbf16>
    %cst_10 = arith.constant dense<0.000000e+00> : vector<32x1024xf32>
    %14 = tpu.matmul %12, %13, %cst_10 {dimension_numbers = #tpu.dot_dimension_numbers<[1], [0], [0], [1], [0, 0, 1, 1], [], []>} : vector<32x32xbf16>, vector<32x1024xbf16>, vector<32x1024xf32> -> vector<32x1024xf32>
    %c1 = arith.constant 1 : index
    %c0_11 = arith.constant 0 : index
    %c0_12 = arith.constant 0 : index
    %15 = vector.load %arg4[%c1, %c0_11, %c0_12] : memref<8x32x1xf32, #tpu.memory_space<vmem>>, vector<1x32x1xf32>
    %16 = vector.shape_cast %15 : vector<1x32x1xf32> to vector<32x1xf32>
    %17 = vector.broadcast %16 : vector<32x1xf32> to vector<32x1024xf32>
    %18 = arith.addf %14, %17 : vector<32x1024xf32>
    %cst_13 = arith.constant 0.000000e+00 : f32
    %19 = vector.broadcast %cst_13 : f32 to vector<32x1024xf32>
    %20 = arith.maximumf %18, %19 : vector<32x1024xf32>
    %c1_14 = arith.constant 1 : index
    %c0_15 = arith.constant 0 : index
    %c0_16 = arith.constant 0 : index
    %21 = vector.load %arg3[%c1_14, %c0_15, %c0_16] : memref<7x32x32xbf16, #tpu.memory_space<vmem>>, vector<1x32x32xbf16>
    %22 = vector.shape_cast %21 : vector<1x32x32xbf16> to vector<32x32xbf16>
    %23 = arith.truncf %20 : vector<32x1024xf32> to vector<32x1024xbf16>
    %cst_17 = arith.constant dense<0.000000e+00> : vector<32x1024xf32>
    %24 = tpu.matmul %22, %23, %cst_17 {dimension_numbers = #tpu.dot_dimension_numbers<[1], [0], [0], [1], [0, 0, 1, 1], [], []>} : vector<32x32xbf16>, vector<32x1024xbf16>, vector<32x1024xf32> -> vector<32x1024xf32>
    %c2 = arith.constant 2 : index
    %c0_18 = arith.constant 0 : index
    %c0_19 = arith.constant 0 : index
    %25 = vector.load %arg4[%c2, %c0_18, %c0_19] : memref<8x32x1xf32, #tpu.memory_space<vmem>>, vector<1x32x1xf32>
    %26 = vector.shape_cast %25 : vector<1x32x1xf32> to vector<32x1xf32>
    %27 = vector.broadcast %26 : vector<32x1xf32> to vector<32x1024xf32>
    %28 = arith.addf %24, %27 : vector<32x1024xf32>
    %cst_20 = arith.constant 0.000000e+00 : f32
    %29 = vector.broadcast %cst_20 : f32 to vector<32x1024xf32>
    %30 = arith.maximumf %28, %29 : vector<32x1024xf32>
    %c2_21 = arith.constant 2 : index
    %c0_22 = arith.constant 0 : index
    %c0_23 = arith.constant 0 : index
    %31 = vector.load %arg3[%c2_21, %c0_22, %c0_23] : memref<7x32x32xbf16, #tpu.memory_space<vmem>>, vector<1x32x32xbf16>
    %32 = vector.shape_cast %31 : vector<1x32x32xbf16> to vector<32x32xbf16>
    %33 = arith.truncf %30 : vector<32x1024xf32> to vector<32x1024xbf16>
    %cst_24 = arith.constant dense<0.000000e+00> : vector<32x1024xf32>
    %34 = tpu.matmul %32, %33, %cst_24 {dimension_numbers = #tpu.dot_dimension_numbers<[1], [0], [0], [1], [0, 0, 1, 1], [], []>} : vector<32x32xbf16>, vector<32x1024xbf16>, vector<32x1024xf32> -> vector<32x1024xf32>
    %c3 = arith.constant 3 : index
    %c0_25 = arith.constant 0 : index
    %c0_26 = arith.constant 0 : index
    %35 = vector.load %arg4[%c3, %c0_25, %c0_26] : memref<8x32x1xf32, #tpu.memory_space<vmem>>, vector<1x32x1xf32>
    %36 = vector.shape_cast %35 : vector<1x32x1xf32> to vector<32x1xf32>
    %37 = vector.broadcast %36 : vector<32x1xf32> to vector<32x1024xf32>
    %38 = arith.addf %34, %37 : vector<32x1024xf32>
    %cst_27 = arith.constant 0.000000e+00 : f32
    %39 = vector.broadcast %cst_27 : f32 to vector<32x1024xf32>
    %40 = arith.maximumf %38, %39 : vector<32x1024xf32>
    %c3_28 = arith.constant 3 : index
    %c0_29 = arith.constant 0 : index
    %c0_30 = arith.constant 0 : index
    %41 = vector.load %arg3[%c3_28, %c0_29, %c0_30] : memref<7x32x32xbf16, #tpu.memory_space<vmem>>, vector<1x32x32xbf16>
    %42 = vector.shape_cast %41 : vector<1x32x32xbf16> to vector<32x32xbf16>
    %43 = arith.truncf %40 : vector<32x1024xf32> to vector<32x1024xbf16>
    %cst_31 = arith.constant dense<0.000000e+00> : vector<32x1024xf32>
    %44 = tpu.matmul %42, %43, %cst_31 {dimension_numbers = #tpu.dot_dimension_numbers<[1], [0], [0], [1], [0, 0, 1, 1], [], []>} : vector<32x32xbf16>, vector<32x1024xbf16>, vector<32x1024xf32> -> vector<32x1024xf32>
    %c4 = arith.constant 4 : index
    %c0_32 = arith.constant 0 : index
    %c0_33 = arith.constant 0 : index
    %45 = vector.load %arg4[%c4, %c0_32, %c0_33] : memref<8x32x1xf32, #tpu.memory_space<vmem>>, vector<1x32x1xf32>
    %46 = vector.shape_cast %45 : vector<1x32x1xf32> to vector<32x1xf32>
    %47 = vector.broadcast %46 : vector<32x1xf32> to vector<32x1024xf32>
    %48 = arith.addf %44, %47 : vector<32x1024xf32>
    %cst_34 = arith.constant 0.000000e+00 : f32
    %49 = vector.broadcast %cst_34 : f32 to vector<32x1024xf32>
    %50 = arith.maximumf %48, %49 : vector<32x1024xf32>
    %c4_35 = arith.constant 4 : index
    %c0_36 = arith.constant 0 : index
    %c0_37 = arith.constant 0 : index
    %51 = vector.load %arg3[%c4_35, %c0_36, %c0_37] : memref<7x32x32xbf16, #tpu.memory_space<vmem>>, vector<1x32x32xbf16>
    %52 = vector.shape_cast %51 : vector<1x32x32xbf16> to vector<32x32xbf16>
    %53 = arith.truncf %50 : vector<32x1024xf32> to vector<32x1024xbf16>
    %cst_38 = arith.constant dense<0.000000e+00> : vector<32x1024xf32>
    %54 = tpu.matmul %52, %53, %cst_38 {dimension_numbers = #tpu.dot_dimension_numbers<[1], [0], [0], [1], [0, 0, 1, 1], [], []>} : vector<32x32xbf16>, vector<32x1024xbf16>, vector<32x1024xf32> -> vector<32x1024xf32>
    %c5 = arith.constant 5 : index
    %c0_39 = arith.constant 0 : index
    %c0_40 = arith.constant 0 : index
    %55 = vector.load %arg4[%c5, %c0_39, %c0_40] : memref<8x32x1xf32, #tpu.memory_space<vmem>>, vector<1x32x1xf32>
    %56 = vector.shape_cast %55 : vector<1x32x1xf32> to vector<32x1xf32>
    %57 = vector.broadcast %56 : vector<32x1xf32> to vector<32x1024xf32>
    %58 = arith.addf %54, %57 : vector<32x1024xf32>
    %59 = arith.addf %58, %10 : vector<32x1024xf32>
    %cst_41 = arith.constant 0.000000e+00 : f32
    %60 = vector.broadcast %cst_41 : f32 to vector<32x1024xf32>
    %61 = arith.maximumf %59, %60 : vector<32x1024xf32>
    %c5_42 = arith.constant 5 : index
    %c0_43 = arith.constant 0 : index
    %c0_44 = arith.constant 0 : index
    %62 = vector.load %arg3[%c5_42, %c0_43, %c0_44] : memref<7x32x32xbf16, #tpu.memory_space<vmem>>, vector<1x32x32xbf16>
    %63 = vector.shape_cast %62 : vector<1x32x32xbf16> to vector<32x32xbf16>
    %64 = arith.truncf %61 : vector<32x1024xf32> to vector<32x1024xbf16>
    %cst_45 = arith.constant dense<0.000000e+00> : vector<32x1024xf32>
    %65 = tpu.matmul %63, %64, %cst_45 {dimension_numbers = #tpu.dot_dimension_numbers<[1], [0], [0], [1], [0, 0, 1, 1], [], []>} : vector<32x32xbf16>, vector<32x1024xbf16>, vector<32x1024xf32> -> vector<32x1024xf32>
    %c6 = arith.constant 6 : index
    %c0_46 = arith.constant 0 : index
    %c0_47 = arith.constant 0 : index
    %66 = vector.load %arg4[%c6, %c0_46, %c0_47] : memref<8x32x1xf32, #tpu.memory_space<vmem>>, vector<1x32x1xf32>
    %67 = vector.shape_cast %66 : vector<1x32x1xf32> to vector<32x1xf32>
    %68 = vector.broadcast %67 : vector<32x1xf32> to vector<32x1024xf32>
    %69 = arith.addf %65, %68 : vector<32x1024xf32>
    %cst_48 = arith.constant 0.000000e+00 : f32
    %70 = vector.broadcast %cst_48 : f32 to vector<32x1024xf32>
    %71 = arith.maximumf %69, %70 : vector<32x1024xf32>
    %c6_49 = arith.constant 6 : index
    %c0_50 = arith.constant 0 : index
    %c0_51 = arith.constant 0 : index
    %72 = vector.load %arg3[%c6_49, %c0_50, %c0_51] : memref<7x32x32xbf16, #tpu.memory_space<vmem>>, vector<1x32x32xbf16>
    %73 = vector.shape_cast %72 : vector<1x32x32xbf16> to vector<32x32xbf16>
    %74 = arith.truncf %71 : vector<32x1024xf32> to vector<32x1024xbf16>
    %cst_52 = arith.constant dense<0.000000e+00> : vector<32x1024xf32>
    %75 = tpu.matmul %73, %74, %cst_52 {dimension_numbers = #tpu.dot_dimension_numbers<[1], [0], [0], [1], [0, 0, 1, 1], [], []>} : vector<32x32xbf16>, vector<32x1024xbf16>, vector<32x1024xf32> -> vector<32x1024xf32>
    %c7 = arith.constant 7 : index
    %c0_53 = arith.constant 0 : index
    %c0_54 = arith.constant 0 : index
    %76 = vector.load %arg4[%c7, %c0_53, %c0_54] : memref<8x32x1xf32, #tpu.memory_space<vmem>>, vector<1x32x1xf32>
    %77 = vector.shape_cast %76 : vector<1x32x1xf32> to vector<32x1xf32>
    %78 = vector.broadcast %77 : vector<32x1xf32> to vector<32x1024xf32>
    %79 = arith.addf %75, %78 : vector<32x1024xf32>
    %cst_55 = arith.constant 0.000000e+00 : f32
    %80 = vector.broadcast %cst_55 : f32 to vector<32x1024xf32>
    %81 = arith.maximumf %79, %80 : vector<32x1024xf32>
    %c0_56 = arith.constant 0 : index
    %c0_57 = arith.constant 0 : index
    %82 = vector.load %arg5[%c0_56, %c0_57] : memref<33x32xbf16, #tpu.memory_space<vmem>>, vector<33x32xbf16>
    %83 = arith.truncf %81 : vector<32x1024xf32> to vector<32x1024xbf16>
    %cst_58 = arith.constant dense<0.000000e+00> : vector<33x1024xf32>
    %84 = tpu.matmul %82, %83, %cst_58 {dimension_numbers = #tpu.dot_dimension_numbers<[1], [0], [0], [1], [0, 0, 1, 1], [], []>} : vector<33x32xbf16>, vector<32x1024xbf16>, vector<33x1024xf32> -> vector<33x1024xf32>
    %c0_59 = arith.constant 0 : index
    %c0_60 = arith.constant 0 : index
    %85 = vector.load %arg6[%c0_59, %c0_60] : memref<33x1xf32, #tpu.memory_space<vmem>>, vector<33x1xf32>
    %86 = vector.broadcast %85 : vector<33x1xf32> to vector<33x1024xf32>
    %87 = arith.addf %84, %86 : vector<33x1024xf32>
    %88 = vector.extract_strided_slice %87 {offsets = [0, 0], sizes = [32, 1024], strides = [1, 1]} : vector<33x1024xf32> to vector<32x1024xf32>
    %89 = vector.extract_strided_slice %87 {offsets = [32, 0], sizes = [1, 1024], strides = [1, 1]} : vector<33x1024xf32> to vector<1x1024xf32>
    %c0_61 = arith.constant 0 : index
    %c0_62 = arith.constant 0 : index
    %90 = vector.load %arg7[%c0_61, %c0_62] : memref<16x32xbf16, #tpu.memory_space<vmem>>, vector<16x32xbf16>
    %91 = arith.truncf %88 : vector<32x1024xf32> to vector<32x1024xbf16>
    %cst_63 = arith.constant dense<0.000000e+00> : vector<16x1024xf32>
    %92 = tpu.matmul %90, %91, %cst_63 {dimension_numbers = #tpu.dot_dimension_numbers<[1], [0], [0], [1], [0, 0, 1, 1], [], []>} : vector<16x32xbf16>, vector<32x1024xbf16>, vector<16x1024xf32> -> vector<16x1024xf32>
    %c0_64 = arith.constant 0 : index
    %c0_65 = arith.constant 0 : index
    %93 = vector.load %arg8[%c0_64, %c0_65] : memref<16x6xbf16, #tpu.memory_space<vmem>>, vector<16x6xbf16>
    %cst_66 = arith.constant dense<0.000000e+00> : vector<16x1024xf32>
    %94 = tpu.matmul %93, %0, %cst_66 {dimension_numbers = #tpu.dot_dimension_numbers<[1], [0], [0], [1], [0, 0, 1, 1], [], []>} : vector<16x6xbf16>, vector<6x1024xbf16>, vector<16x1024xf32> -> vector<16x1024xf32>
    %95 = arith.addf %92, %94 : vector<16x1024xf32>
    %c0_67 = arith.constant 0 : index
    %c0_68 = arith.constant 0 : index
    %96 = vector.load %arg9[%c0_67, %c0_68] : memref<16x1xf32, #tpu.memory_space<vmem>>, vector<16x1xf32>
    %97 = vector.broadcast %96 : vector<16x1xf32> to vector<16x1024xf32>
    %98 = arith.addf %95, %97 : vector<16x1024xf32>
    %cst_69 = arith.constant 0.000000e+00 : f32
    %99 = vector.broadcast %cst_69 : f32 to vector<16x1024xf32>
    %100 = arith.maximumf %98, %99 : vector<16x1024xf32>
    %c0_70 = arith.constant 0 : index
    %c0_71 = arith.constant 0 : index
    %101 = vector.load %arg10[%c0_70, %c0_71] : memref<3x16xbf16, #tpu.memory_space<vmem>>, vector<3x16xbf16>
    %102 = arith.truncf %100 : vector<16x1024xf32> to vector<16x1024xbf16>
    %cst_72 = arith.constant dense<0.000000e+00> : vector<3x1024xf32>
    %103 = tpu.matmul %101, %102, %cst_72 {dimension_numbers = #tpu.dot_dimension_numbers<[1], [0], [0], [1], [0, 0, 1, 1], [], []>} : vector<3x16xbf16>, vector<16x1024xbf16>, vector<3x1024xf32> -> vector<3x1024xf32>
    %c0_73 = arith.constant 0 : index
    %c0_74 = arith.constant 0 : index
    %104 = vector.load %arg11[%c0_73, %c0_74] : memref<3x1xf32, #tpu.memory_space<vmem>>, vector<3x1xf32>
    %105 = vector.broadcast %104 : vector<3x1xf32> to vector<3x1024xf32>
    %106 = arith.addf %103, %105 : vector<3x1024xf32>
    %c0_75 = arith.constant 0 : index
    %c0_76 = arith.constant 0 : index
    %107 = vector.load %arg12[%c0_75, %c0_76] : memref<4x1024xf32, #tpu.memory_space<vmem>>, vector<3x1024xf32>
    tpu.vector_store %arg12[%c0_75, %c0_76], %106 {strides = array<i32>} : memref<4x1024xf32, #tpu.memory_space<vmem>>, vector<3x1024xf32>,
    %c3_77 = arith.constant 3 : index
    %c0_78 = arith.constant 0 : index
    %108 = vector.load %arg12[%c3_77, %c0_78] : memref<4x1024xf32, #tpu.memory_space<vmem>>, vector<1x1024xf32>
    tpu.vector_store %arg12[%c3_77, %c0_78], %89 {strides = array<i32>} : memref<4x1024xf32, #tpu.memory_space<vmem>>, vector<1x1024xf32>,
    return
  }
  func.func @transform_0(%arg0: i32) -> (i32, i32) {
    %c0_i32 = arith.constant 0 : i32
    %c0_i32_0 = arith.constant 0 : i32
    return %c0_i32, %arg0 : i32, i32
  }
  func.func @transform_1(%arg0: i32) -> (i32, i32) {
    %c0_i32 = arith.constant 0 : i32
    %c0_i32_0 = arith.constant 0 : i32
    %c0_i32_1 = arith.constant 0 : i32
    return %c0_i32, %c0_i32_0 : i32, i32
  }
  func.func @transform_2(%arg0: i32) -> (i32, i32, i32) {
    %c0_i32 = arith.constant 0 : i32
    %c0_i32_0 = arith.constant 0 : i32
    %c0_i32_1 = arith.constant 0 : i32
    %c0_i32_2 = arith.constant 0 : i32
    return %c0_i32, %c0_i32_0, %c0_i32_1 : i32, i32, i32
  }
  func.func @transform_3(%arg0: i32) -> (i32, i32, i32) {
    %c0_i32 = arith.constant 0 : i32
    %c0_i32_0 = arith.constant 0 : i32
    %c0_i32_1 = arith.constant 0 : i32
    %c0_i32_2 = arith.constant 0 : i32
    return %c0_i32, %c0_i32_0, %c0_i32_1 : i32, i32, i32
  }
  func.func @transform_4(%arg0: i32) -> (i32, i32) {
    %c0_i32 = arith.constant 0 : i32
    %c0_i32_0 = arith.constant 0 : i32
    %c0_i32_1 = arith.constant 0 : i32
    return %c0_i32, %c0_i32_0 : i32, i32
  }
  func.func @transform_5(%arg0: i32) -> (i32, i32) {
    %c0_i32 = arith.constant 0 : i32
    %c0_i32_0 = arith.constant 0 : i32
    %c0_i32_1 = arith.constant 0 : i32
    return %c0_i32, %c0_i32_0 : i32, i32
  }
  func.func @transform_6(%arg0: i32) -> (i32, i32) {
    %c0_i32 = arith.constant 0 : i32
    %c0_i32_0 = arith.constant 0 : i32
    %c0_i32_1 = arith.constant 0 : i32
    return %c0_i32, %c0_i32_0 : i32, i32
  }
  func.func @transform_7(%arg0: i32) -> (i32, i32) {
    %c0_i32 = arith.constant 0 : i32
    %c0_i32_0 = arith.constant 0 : i32
    %c0_i32_1 = arith.constant 0 : i32
    return %c0_i32, %c0_i32_0 : i32, i32
  }
  func.func @transform_8(%arg0: i32) -> (i32, i32) {
    %c0_i32 = arith.constant 0 : i32
    %c0_i32_0 = arith.constant 0 : i32
    %c0_i32_1 = arith.constant 0 : i32
    return %c0_i32, %c0_i32_0 : i32, i32
  }
  func.func @transform_9(%arg0: i32) -> (i32, i32) {
    %c0_i32 = arith.constant 0 : i32
    %c0_i32_0 = arith.constant 0 : i32
    %c0_i32_1 = arith.constant 0 : i32
    return %c0_i32, %c0_i32_0 : i32, i32
  }
  func.func @transform_10(%arg0: i32) -> (i32, i32) {
    %c0_i32 = arith.constant 0 : i32
    %c0_i32_0 = arith.constant 0 : i32
    %c0_i32_1 = arith.constant 0 : i32
    return %c0_i32, %c0_i32_0 : i32, i32
  }
  func.func @transform_11(%arg0: i32) -> (i32, i32) {
    %c0_i32 = arith.constant 0 : i32
    %c0_i32_0 = arith.constant 0 : i32
    return %c0_i32, %arg0 : i32, i32
  }
}

</mosaic_0001>

<llo_original>
// kernel: nerf_forward.1
$region0: #{nerf_forward.1}
  #allocation0 [shape = 'u32[]', space=smem, size = 0x4, offset = 0x4, fixed_abs, tag = 'smem constant byte address 0x4 - core index']
  #allocation1 [shape = 'u32[72,128]{1,0:T(1,128)}', space=vmem, size = 0x9000, scoped, tag = 'internal scratch']
  %s0 = inlined_call_operand.vmem [shape: bf16[6,8192], index: 0, kind: input, shape index: {}]
  %s1 = inlined_call_operand.vmem [shape: bf16[64,6], index: 1, kind: input, shape index: {}]
  %s2 = inlined_call_operand.vmem [shape: bf16[7,32,32], index: 2, kind: input, shape index: {}]
  %s3 = inlined_call_operand.vmem [shape: f32[8,32,1], index: 3, kind: input, shape index: {}]
  %s4 = inlined_call_operand.vmem [shape: bf16[33,32], index: 4, kind: input, shape index: {}]
  %s5 = inlined_call_operand.vmem [shape: f32[33,1], index: 5, kind: input, shape index: {}]
  %s6 = inlined_call_operand.vmem [shape: bf16[16,32], index: 6, kind: input, shape index: {}]
  %s7 = inlined_call_operand.vmem [shape: bf16[16,6], index: 7, kind: input, shape index: {}]
  %s8 = inlined_call_operand.vmem [shape: f32[16,1], index: 8, kind: input, shape index: {}]
  %s9 = inlined_call_operand.vmem [shape: bf16[3,16], index: 9, kind: input, shape index: {}]
  %s10 = inlined_call_operand.vmem [shape: f32[3,1], index: 10, kind: input, shape index: {}]
  %s11 = inlined_call_operand.vmem [shape: f32[4,8192], index: 11, kind: output, shape index: {}]
  %s12 = sld [smem:[#allocation0]]
  $region77: #{nerf_forward.1} parent=0
    _
  %s14 = ssub.s32 1, %s12
  %s15 = scalar_select 0, %s14, %s12
  loop: start=0, step=1, limit=10
  $region2: #{nerf_forward.1} parent=0 // loop_pre_header
    _
  $region3: #{nerf_forward.1} parent=0 // loop_header
    %s17 = sphi 0, %s21
    %p18 = scmp.ge.s32.totalorder %s17, 10
    %s27 = sphi 0, %s29
    %s30 = sphi 0, %s27
    %s31 = sphi 0, %s30
    %s47 = sphi 0, %s31
    %s51 = sphi 0, %s51
    %s53 = sphi 0, %s51
    %s54 = sphi 0, %s53
    %s68 = sphi 0, %s54
    %s72 = sphi 0, %s72
    %s74 = sphi 0, %s72
    %s75 = sphi 0, %s74
    %s89 = sphi 0, %s75
    %s93 = sphi 0, %s93
    %s95 = sphi 0, %s93
    %s96 = sphi 0, %s95
    %s110 = sphi 0, %s96
    %s114 = sphi 0, %s114
    %s116 = sphi 0, %s114
    %s117 = sphi 0, %s116
    %s131 = sphi 0, %s117
    %s135 = sphi 0, %s135
    %s137 = sphi 0, %s135
    %s138 = sphi 0, %s137
    %s152 = sphi 0, %s138
    %s156 = sphi 0, %s156
    %s158 = sphi 0, %s156
    %s159 = sphi 0, %s158
    %s173 = sphi 0, %s159
    %s177 = sphi 0, %s177
    %s179 = sphi 0, %s177
    %s180 = sphi 0, %s179
    %s194 = sphi 0, %s180
    %s198 = sphi 0, %s198
    %s200 = sphi 0, %s198
    %s201 = sphi 0, %s200
    %s215 = sphi 0, %s201
    %s219 = sphi 0, %s219
    %s221 = sphi 0, %s219
    %s222 = sphi 0, %s221
    %s236 = sphi 0, %s222
    %s240 = sphi 0, %s240
    %s242 = sphi 0, %s240
    %s243 = sphi 0, %s242
    %s257 = sphi 0, %s243
    %s263 = sphi 0, %s265
    %s266 = sphi 0, %s263
    %s267 = sphi 0, %s266
    %s283 = sphi 0, %s267
  $region4: #{nerf_forward.1} parent=0 // loop_header_branch
    %20 = sbr.rel (%p18) target = $region8
  $region5: #{nerf_forward.1} parent=0 // loop_body
    %s22 = ssub.s32 %s17, 1
    %s23 = ssub.s32 %s17, 2
    %s24 = sadd.s32 %s17, 1
    %s25 = ssub.s32 %s17, %s24
    %p26 = scmp.eq.s32.totalorder %s25, 0
    %s28 = sadd.s32 %s27, 1
    %s29 = scalar_select %p26, %s27, %s28
    %p32 = pneg %p26
    %p33 = scmp.eq.s32.totalorder %s17, 7
    %p34 = por %p32, %p33
    %p35 = scmp.ne.s32.totalorder %s27, %s30
    %p36 = scmp.eq.s32.totalorder %s17, 0
    %p37 = por %p35, %p36
    %p38 = scmp.ne.s32.totalorder %s27, %s30
    %p39 = scmp.eq.s32.totalorder %s22, 7
    %p40 = por %p38, %p39
    %p41 = scmp.ne.s32.totalorder %s30, %s31
    %p42 = scmp.eq.s32.totalorder %s22, 0
    %p43 = por %p41, %p42
    %p44 = scmp.ne.s32.totalorder %s30, %s31
    %p45 = scmp.eq.s32.totalorder %s23, 7
    %p46 = por %p44, %p45
    %p48 = scmp.ne.s32.totalorder %s31, %s47
    %p49 = scmp.eq.s32.totalorder %s23, 0
    %p50 = por %p48, %p49
    %s52 = sadd.s32 %s51, 1
    %p55 = scmp.eq.s32.totalorder %s17, 7
    %p56 = scmp.ne.s32.totalorder %s51, %s53
    %p57 = scmp.eq.s32.totalorder %s17, 0
    %p58 = por %p56, %p57
    %p59 = scmp.ne.s32.totalorder %s51, %s53
    %p60 = scmp.eq.s32.totalorder %s22, 7
    %p61 = por %p59, %p60
    %p62 = scmp.ne.s32.totalorder %s53, %s54
    %p63 = scmp.eq.s32.totalorder %s22, 0
    %p64 = por %p62, %p63
    %p65 = scmp.ne.s32.totalorder %s53, %s54
    %p66 = scmp.eq.s32.totalorder %s23, 7
    %p67 = por %p65, %p66
    %p69 = scmp.ne.s32.totalorder %s54, %s68
    %p70 = scmp.eq.s32.totalorder %s23, 0
    %p71 = por %p69, %p70
    %s73 = sadd.s32 %s72, 1
    %p76 = scmp.eq.s32.totalorder %s17, 7
    %p77 = scmp.ne.s32.totalorder %s72, %s74
    %p78 = scmp.eq.s32.totalorder %s17, 0
    %p79 = por %p77, %p78
    %p80 = scmp.ne.s32.totalorder %s72, %s74
    %p81 = scmp.eq.s32.totalorder %s22, 7
    %p82 = por %p80, %p81
    %p83 = scmp.ne.s32.totalorder %s74, %s75
    %p84 = scmp.eq.s32.totalorder %s22, 0
    %p85 = por %p83, %p84
    %p86 = scmp.ne.s32.totalorder %s74, %s75
    %p87 = scmp.eq.s32.totalorder %s23, 7
    %p88 = por %p86, %p87
    %p90 = scmp.ne.s32.totalorder %s75, %s89
    %p91 = scmp.eq.s32.totalorder %s23, 0
    %p92 = por %p90, %p91
    %s94 = sadd.s32 %s93, 1
    %p97 = scmp.eq.s32.totalorder %s17, 7
    %p98 = scmp.ne.s32.totalorder %s93, %s95
    %p99 = scmp.eq.s32.totalorder %s17, 0
    %p100 = por %p98, %p99
    %p101 = scmp.ne.s32.totalorder %s93, %s95
    %p102 = scmp.eq.s32.totalorder %s22, 7
    %p103 = por %p101, %p102
    %p104 = scmp.ne.s32.totalorder %s95, %s96
    %p105 = scmp.eq.s32.totalorder %s22, 0
    %p106 = por %p104, %p105
    %p107 = scmp.ne.s32.totalorder %s95, %s96
    %p108 = scmp.eq.s32.totalorder %s23, 7
    %p109 = por %p107, %p108
    %p111 = scmp.ne.s32.totalorder %s96, %s110
    %p112 = scmp.eq.s32.totalorder %s23, 0
    %p113 = por %p111, %p112
    %s115 = sadd.s32 %s114, 1
    %p118 = scmp.eq.s32.totalorder %s17, 7
    %p119 = scmp.ne.s32.totalorder %s114, %s116
    %p120 = scmp.eq.s32.totalorder %s17, 0
    %p121 = por %p119, %p120
    %p122 = scmp.ne.s32.totalorder %s114, %s116
    %p123 = scmp.eq.s32.totalorder %s22, 7
    %p124 = por %p122, %p123
    %p125 = scmp.ne.s32.totalorder %s116, %s117
    %p126 = scmp.eq.s32.totalorder %s22, 0
    %p127 = por %p125, %p126
    %p128 = scmp.ne.s32.totalorder %s116, %s117
    %p129 = scmp.eq.s32.totalorder %s23, 7
    %p130 = por %p128, %p129
    %p132 = scmp.ne.s32.totalorder %s117, %s131
    %p133 = scmp.eq.s32.totalorder %s23, 0
    %p134 = por %p132, %p133
    %s136 = sadd.s32 %s135, 1
    %p139 = scmp.eq.s32.totalorder %s17, 7
    %p140 = scmp.ne.s32.totalorder %s135, %s137
    %p141 = scmp.eq.s32.totalorder %s17, 0
    %p142 = por %p140, %p141
    %p143 = scmp.ne.s32.totalorder %s135, %s137
    %p144 = scmp.eq.s32.totalorder %s22, 7
    %p145 = por %p143, %p144
    %p146 = scmp.ne.s32.totalorder %s137, %s138
    %p147 = scmp.eq.s32.totalorder %s22, 0
    %p148 = por %p146, %p147
    %p149 = scmp.ne.s32.totalorder %s137, %s138
    %p150 = scmp.eq.s32.totalorder %s23, 7
    %p151 = por %p149, %p150
    %p153 = scmp.ne.s32.totalorder %s138, %s152
    %p154 = scmp.eq.s32.totalorder %s23, 0
    %p155 = por %p153, %p154
    %s157 = sadd.s32 %s156, 1
    %p160 = scmp.eq.s32.totalorder %s17, 7
    %p161 = scmp.ne.s32.totalorder %s156, %s158
    %p162 = scmp.eq.s32.totalorder %s17, 0
    %p163 = por %p161, %p162
    %p164 = scmp.ne.s32.totalorder %s156, %s158
    %p165 = scmp.eq.s32.totalorder %s22, 7
    %p166 = por %p164, %p165
    %p167 = scmp.ne.s32.totalorder %s158, %s159
    %p168 = scmp.eq.s32.totalorder %s22, 0
    %p169 = por %p167, %p168
    %p170 = scmp.ne.s32.totalorder %s158, %s159
    %p171 = scmp.eq.s32.totalorder %s23, 7
    %p172 = por %p170, %p171
    %p174 = scmp.ne.s32.totalorder %s159, %s173
    %p175 = scmp.eq.s32.totalorder %s23, 0
    %p176 = por %p174, %p175
    %s178 = sadd.s32 %s177, 1
    %p181 = scmp.eq.s32.totalorder %s17, 7
    %p182 = scmp.ne.s32.totalorder %s177, %s179
    %p183 = scmp.eq.s32.totalorder %s17, 0
    %p184 = por %p182, %p183
    %p185 = scmp.ne.s32.totalorder %s177, %s179
    %p186 = scmp.eq.s32.totalorder %s22, 7
    %p187 = por %p185, %p186
    %p188 = scmp.ne.s32.totalorder %s179, %s180
    %p189 = scmp.eq.s32.totalorder %s22, 0
    %p190 = por %p188, %p189
    %p191 = scmp.ne.s32.totalorder %s179, %s180
    %p192 = scmp.eq.s32.totalorder %s23, 7
    %p193 = por %p191, %p192
    %p195 = scmp.ne.s32.totalorder %s180, %s194
    %p196 = scmp.eq.s32.totalorder %s23, 0
    %p197 = por %p195, %p196
    %s199 = sadd.s32 %s198, 1
    %p202 = scmp.eq.s32.totalorder %s17, 7
    %p203 = scmp.ne.s32.totalorder %s198, %s200
    %p204 = scmp.eq.s32.totalorder %s17, 0
    %p205 = por %p203, %p204
    %p206 = scmp.ne.s32.totalorder %s198, %s200
    %p207 = scmp.eq.s32.totalorder %s22, 7
    %p208 = por %p206, %p207
    %p209 = scmp.ne.s32.totalorder %s200, %s201
    %p210 = scmp.eq.s32.totalorder %s22, 0
    %p211 = por %p209, %p210
    %p212 = scmp.ne.s32.totalorder %s200, %s201
    %p213 = scmp.eq.s32.totalorder %s23, 7
    %p214 = por %p212, %p213
    %p216 = scmp.ne.s32.totalorder %s201, %s215
    %p217 = scmp.eq.s32.totalorder %s23, 0
    %p218 = por %p216, %p217
    %s220 = sadd.s32 %s219, 1
    %p223 = scmp.eq.s32.totalorder %s17, 7
    %p224 = scmp.ne.s32.totalorder %s219, %s221
    %p225 = scmp.eq.s32.totalorder %s17, 0
    %p226 = por %p224, %p225
    %p227 = scmp.ne.s32.totalorder %s219, %s221
    %p228 = scmp.eq.s32.totalorder %s22, 7
    %p229 = por %p227, %p228
    %p230 = scmp.ne.s32.totalorder %s221, %s222
    %p231 = scmp.eq.s32.totalorder %s22, 0
    %p232 = por %p230, %p231
    %p233 = scmp.ne.s32.totalorder %s221, %s222
    %p234 = scmp.eq.s32.totalorder %s23, 7
    %p235 = por %p233, %p234
    %p237 = scmp.ne.s32.totalorder %s222, %s236
    %p238 = scmp.eq.s32.totalorder %s23, 0
    %p239 = por %p237, %p238
    %s241 = sadd.s32 %s240, 1
    %p244 = scmp.eq.s32.totalorder %s17, 7
    %p245 = scmp.ne.s32.totalorder %s240, %s242
    %p246 = scmp.eq.s32.totalorder %s17, 0
    %p247 = por %p245, %p246
    %p248 = scmp.ne.s32.totalorder %s240, %s242
    %p249 = scmp.eq.s32.totalorder %s22, 7
    %p250 = por %p248, %p249
    %p251 = scmp.ne.s32.totalorder %s242, %s243
    %p252 = scmp.eq.s32.totalorder %s22, 0
    %p253 = por %p251, %p252
    %p254 = scmp.ne.s32.totalorder %s242, %s243
    %p255 = scmp.eq.s32.totalorder %s23, 7
    %p256 = por %p254, %p255
    %p258 = scmp.ne.s32.totalorder %s243, %s257
    %p259 = scmp.eq.s32.totalorder %s23, 0
    %p260 = por %p258, %p259
    %s261 = ssub.s32 %s17, %s24
    %p262 = scmp.eq.s32.totalorder %s261, 0
    %s264 = sadd.s32 %s263, 1
    %s265 = scalar_select %p262, %s263, %s264
    %p268 = pneg %p262
    %p269 = scmp.eq.s32.totalorder %s17, 7
    %p270 = por %p268, %p269
    %p271 = scmp.ne.s32.totalorder %s263, %s266
    %p272 = scmp.eq.s32.totalorder %s17, 0
    %p273 = por %p271, %p272
    %p274 = scmp.ne.s32.totalorder %s263, %s266
    %p275 = scmp.eq.s32.totalorder %s22, 7
    %p276 = por %p274, %p275
    %p277 = scmp.ne.s32.totalorder %s266, %s267
    %p278 = scmp.eq.s32.totalorder %s22, 0
    %p279 = por %p277, %p278
    %p280 = scmp.ne.s32.totalorder %s266, %s267
    %p281 = scmp.eq.s32.totalorder %s23, 7
    %p282 = por %p280, %p281
    %p284 = scmp.ne.s32.totalorder %s267, %s283
    %p285 = scmp.eq.s32.totalorder %s23, 0
    %p286 = por %p284, %p285
    %p287 = scmp.le.s32.totalorder 1, %s17
    %p288 = scmp.lt.s32.totalorder %s17, 9
    %p289 = pnand %p287, %p288
    %p290 = pneg %p289
    // Predicated region
    $region9: #{nerf_forward.1} parent=5 // pred_check
      _
    $region10: #{nerf_forward.1} parent=5 // pred_check_branch
      %292 = sbr.rel (%p289) target = $region12
    $region11: #{nerf_forward.1} parent=5 // pred_region
      %s293 = ssub.s32 %s17, 1
      // Predicated region
      $region13: #{nerf_forward.1} parent=11 // pred_check
        %p294 = pneg %p64
      $region14: #{nerf_forward.1} parent=11 // pred_check_branch
        %296 = sbr.rel (%p294) target = $region16
      $region15: #{nerf_forward.1} parent=11 // pred_region
        _
      $region16: #{nerf_forward.1} parent=11 // pred_fallthru
        _
      // Predicated region
      $region17: #{nerf_forward.1} parent=11 // pred_check
        %p297 = pneg %p85
      $region18: #{nerf_forward.1} parent=11 // pred_check_branch
        %299 = sbr.rel (%p297) target = $region20
      $region19: #{nerf_forward.1} parent=11 // pred_region
        _
      $region20: #{nerf_forward.1} parent=11 // pred_fallthru
        _
      // Predicated region
      $region21: #{nerf_forward.1} parent=11 // pred_check
        %p300 = pneg %p106
      $region22: #{nerf_forward.1} parent=11 // pred_check_branch
        %302 = sbr.rel (%p300) target = $region24
      $region23: #{nerf_forward.1} parent=11 // pred_region
        _
      $region24: #{nerf_forward.1} parent=11 // pred_fallthru
        _
      // Predicated region
      $region25: #{nerf_forward.1} parent=11 // pred_check
        %p303 = pneg %p127
      $region26: #{nerf_forward.1} parent=11 // pred_check_branch
        %305 = sbr.rel (%p303) target = $region28
      $region27: #{nerf_forward.1} parent=11 // pred_region
        _
      $region28: #{nerf_forward.1} parent=11 // pred_fallthru
        _
      // Predicated region
      $region29: #{nerf_forward.1} parent=11 // pred_check
        %p306 = pneg %p148
      $region30: #{nerf_forward.1} parent=11 // pred_check_branch
        %308 = sbr.rel (%p306) target = $region32
      $region31: #{nerf_forward.1} parent=11 // pred_region
        _
      $region32: #{nerf_forward.1} parent=11 // pred_fallthru
        _
      // Predicated region
      $region33: #{nerf_forward.1} parent=11 // pred_check
        %p309 = pneg %p169
      $region34: #{nerf_forward.1} parent=11 // pred_check_branch
        %311 = sbr.rel (%p309) target = $region36
      $region35: #{nerf_forward.1} parent=11 // pred_region
        _
      $region36: #{nerf_forward.1} parent=11 // pred_fallthru
        _
      // Predicated region
      $region37: #{nerf_forward.1} parent=11 // pred_check
        %p312 = pneg %p190
      $region38: #{nerf_forward.1} parent=11 // pred_check_branch
        %314 = sbr.rel (%p312) target = $region40
      $region39: #{nerf_forward.1} parent=11 // pred_region
        _
      $region40: #{nerf_forward.1} parent=11 // pred_fallthru
        _
      // Predicated region
      $region41: #{nerf_forward.1} parent=11 // pred_check
        %p315 = pneg %p211
      $region42: #{nerf_forward.1} parent=11 // pred_check_branch
        %317 = sbr.rel (%p315) target = $region44
      $region43: #{nerf_forward.1} parent=11 // pred_region
        _
      $region44: #{nerf_forward.1} parent=11 // pred_fallthru
        _
      // Predicated region
      $region45: #{nerf_forward.1} parent=11 // pred_check
        %p318 = pneg %p232
      $region46: #{nerf_forward.1} parent=11 // pred_check_branch
        %320 = sbr.rel (%p318) target = $region48
      $region47: #{nerf_forward.1} parent=11 // pred_region
        _
      $region48: #{nerf_forward.1} parent=11 // pred_fallthru
        _
      // Predicated region
      $region49: #{nerf_forward.1} parent=11 // pred_check
        %p321 = pneg %p253
      $region50: #{nerf_forward.1} parent=11 // pred_check_branch
        %323 = sbr.rel (%p321) target = $region52
      $region51: #{nerf_forward.1} parent=11 // pred_region
        _
      $region52: #{nerf_forward.1} parent=11 // pred_fallthru
        _
    $region12: #{nerf_forward.1} parent=5 // pred_fallthru
      _
    %p324 = scmp.lt.s32.totalorder %s17, 8
    // Predicated region
    $region53: #{nerf_forward.1} parent=5 // pred_check
      %p325 = pneg %p324
    $region54: #{nerf_forward.1} parent=5 // pred_check_branch
      %327 = sbr.rel (%p325) target = $region56
    $region55: #{nerf_forward.1} parent=5 // pred_region
      // Predicated region
      $region57: #{nerf_forward.1} parent=55 // pred_check
        %p328 = pneg %p37
      $region58: #{nerf_forward.1} parent=55 // pred_check_branch
        %330 = sbr.rel (%p328) target = $region60
      $region59: #{nerf_forward.1} parent=55 // pred_region
        %s331 = smul.u32 8, %s17
        %p332 = scmp.lt.s32.totalorder %s331, 63
        %s333 = scalar_select %p332, %s331, 63
        %s334 = smul.addr %s333, 4
        %s335 = scalar_lea.vmem %s0, %s334
        %s336 = smul.u32 8, %s17
      $region60: #{nerf_forward.1} parent=55 // pred_fallthru
        _
    $region56: #{nerf_forward.1} parent=5 // pred_fallthru
      _
    %p337 = scmp.le.s32.totalorder 1, %s17
    %p338 = scmp.lt.s32.totalorder %s17, 9
    %p339 = pnand %p337, %p338
    %p340 = pneg %p339
    // Predicated region
    $region61: #{nerf_forward.1} parent=5 // pred_check
      _
    $region62: #{nerf_forward.1} parent=5 // pred_check_branch
      %342 = sbr.rel (%p339) target = $region64
    $region63: #{nerf_forward.1} parent=5 // pred_region
      %s343 = ssub.s32 %s17, 1
      %s344 = smul.u32 8, %s22
      %p345 = scmp.lt.s32.totalorder %s344, 63
      %s346 = scalar_select %p345, %s344, 63
      %s347 = smul.addr %s346, 4
      %s348 = scalar_lea.vmem %s0, %s347
      %p349 = pneg %p43
      %p350 = pneg %p40
      %p351 = pneg %p64
      %p352 = pneg %p61
      %p353 = pneg %p85
      %p354 = pneg %p82
      %p355 = pneg %p106
      %p356 = pneg %p103
      %p357 = pneg %p127
      %p358 = pneg %p124
      %p359 = pneg %p148
      %p360 = pneg %p145
      %p361 = pneg %p169
      %p362 = pneg %p166
      %p363 = pneg %p190
      %p364 = pneg %p187
      %p365 = pneg %p211
      %p366 = pneg %p208
      %p367 = pneg %p232
      %p368 = pneg %p229
      %p369 = pneg %p253
      %p370 = pneg %p250
      %p371 = pneg %p279
      %p372 = pneg %p276
      %s373 = smul.u32 8, %s22
      %p374 = scmp.lt.s32.totalorder %s373, 63
      %s375 = scalar_select %p374, %s373, 63
      %s376 = smul.addr %s375, 4
      %s377 = scalar_lea.vmem %s11, %s376
      %s378 = smul.u32 8, %s22
      %p379 = scmp.lt.s32.totalorder %s378, 63
      %s380 = scalar_select %p379, %s378, 63
      %s381 = smul.addr %s380, 4
      %s382 = scalar_lea.vmem %s0, %s381
      %s383 = smul.u32 8, %s22
      %s384 = smul.u32 8, %s22
      %p385 = scmp.lt.s32.totalorder %s384, 63
      %s386 = scalar_select %p385, %s384, 63
      %s387 = smul.addr %s386, 4
      %s388 = scalar_lea.vmem %s11, %s387
      %s389 = smul.u32 8, %s22
      %v391 = vld [vmem:[%s382] sm:$0x77]
      %v392 = vld [vmem:[%s382 + $0x8] sm:$0x77]
      %v393 = vld [vmem:[%s382 + $0x10] sm:$0x77]
      %v394 = vld [vmem:[%s382 + $0x18] sm:$0x77]
      %v395 = vld [vmem:[%s1] sm:$0xf]
      %v396 = vld [vmem:[%s1 + $0x4] sm:$0xf]
      %v397 = vld [vmem:[%s1 + $0x8] sm:$0xf]
      %v398 = vld [vmem:[%s1 + $0xc] sm:$0xf]
      %v399 = vld [vmem:[%s1 + $0x10] sm:$0xf]
      %v400 = vld [vmem:[%s1 + $0x14] sm:$0xf]
      %v401 = vld [vmem:[%s1 + $0x18] sm:$0xf]
      %v402 = vld [vmem:[%s1 + $0x1c] sm:$0xf]
      %v411 = vunpack.c.l.b16 %v395
      %v412 = vunpack.c.l.b16 %v396
      %v413 = vunpack.c.l.b16 %v397
      %v414 = vunpack.c.l.b16 %v398
      %v415 = vunpack.c.l.b16 %v399
      %v416 = vunpack.c.l.b16 %v400
      %v417 = vunpack.c.l.b16 %v401
      %v418 = vunpack.c.l.b16 %v402
      %v419 = vpack.c.b16 %v412, %v411
      %v420 = vpack.c.b16 %v414, %v413
      %v421 = vpack.c.b16 %v416, %v415
      %v422 = vpack.c.b16 %v418, %v417
      %v427 = vunpack.c.l.b16 %v391
      %v428 = vunpack.c.h.b16 %v391
      %v429 = vunpack.c.l.b16 %v392
      %v430 = vunpack.c.h.b16 %v392
      %v431 = vunpack.c.l.b16 %v393
      %v432 = vunpack.c.h.b16 %v393
      %v433 = vunpack.c.l.b16 %v394
      %v434 = vunpack.c.h.b16 %v394
      %v435 = vpack.c.b16 %v427, %v427
      %v436 = vpack.c.b16 %v428, %v428
      %v437 = vpack.c.b16 %v429, %v429
      %v438 = vpack.c.b16 %v430, %v430
      %v439 = vpack.c.b16 %v431, %v431
      %v440 = vpack.c.b16 %v432, %v432
      %v441 = vpack.c.b16 %v433, %v433
      %v442 = vpack.c.b16 %v434, %v434
      %vm443 = vcmask 48128
      %v445 = vsel %vm443, %v419, 0
      %v448 = vsel %vm443, %v420, 0
      %v451 = vsel %vm443, %v421, 0
      %v454 = vsel %vm443, %v422, 0
      %vm456 = vcmask 1042432
      %v458 = vsel %vm456, %v435, 0
      %v461 = vsel %vm456, %v436, 0
      %v464 = vsel %vm456, %v437, 0
      %v467 = vsel %vm456, %v438, 0
      %v470 = vsel %vm456, %v439, 0
      %v473 = vsel %vm456, %v440, 0
      %v476 = vsel %vm456, %v441, 0
      %v479 = vsel %vm456, %v442, 0
      %481 = vmatpush.bf16.msra.mxu0 0
      %482 = vmatpush.bf16.msra.mxu0 0
      %483 = vmatpush.bf16.msra.mxu0 0
      %484 = vmatpush.bf16.msra.mxu0 0
      %485 = vmatpush.bf16.msra.mxu0 0
      %486 = vmatpush.bf16.msra.mxu0 0
      %487 = vmatpush.bf16.msra.mxu0 0
      %488 = vmatpush.bf16.msra.mxu0 %v458
      %489 = vmatmul.bf16.gmra.mxu0 %v445
      %v490 = vpop.f32.mrf.mxu0
      %v491 = vadd.f32 0.0, %v490
      %v492 = vpop.f32.mrf.mxu0
      %v493 = vadd.f32 0.0, %v492
      %494 = vmatmul.bf16.gmra.mxu0 %v448
      %v495 = vpop.f32.mrf.mxu0
      %v496 = vadd.f32 0.0, %v495
      %v497 = vpop.f32.mrf.mxu0
      %v498 = vadd.f32 0.0, %v497
      %499 = vmatmul.bf16.gmra.mxu0 %v451
      %v500 = vpop.f32.mrf.mxu0
      %v501 = vadd.f32 0.0, %v500
      %v502 = vpop.f32.mrf.mxu0
      %v503 = vadd.f32 0.0, %v502
      %504 = vmatmul.bf16.gmra.mxu0 %v454
      %v505 = vpop.f32.mrf.mxu0
      %v506 = vadd.f32 0.0, %v505
      %v507 = vpop.f32.mrf.mxu0
      %v508 = vadd.f32 0.0, %v507
      %509 = vdwg.mxu0
      %510 = vmatpush.bf16.msra.mxu0 0
      %511 = vmatpush.bf16.msra.mxu0 0
      %512 = vmatpush.bf16.msra.mxu0 0
      %513 = vmatpush.bf16.msra.mxu0 0
      %514 = vmatpush.bf16.msra.mxu0 0
      %515 = vmatpush.bf16.msra.mxu0 0
      %516 = vmatpush.bf16.msra.mxu0 0
      %517 = vmatpush.bf16.msra.mxu0 %v461
      %518 = vmatmul.bf16.gmra.mxu0 %v445
      %v519 = vpop.f32.mrf.mxu0
      %v520 = vadd.f32 0.0, %v519
      %v521 = vpop.f32.mrf.mxu0
      %v522 = vadd.f32 0.0, %v521
      %523 = vmatmul.bf16.gmra.mxu0 %v448
      %v524 = vpop.f32.mrf.mxu0
      %v525 = vadd.f32 0.0, %v524
      %v526 = vpop.f32.mrf.mxu0
      %v527 = vadd.f32 0.0, %v526
      %528 = vmatmul.bf16.gmra.mxu0 %v451
      %v529 = vpop.f32.mrf.mxu0
      %v530 = vadd.f32 0.0, %v529
      %v531 = vpop.f32.mrf.mxu0
      %v532 = vadd.f32 0.0, %v531
      %533 = vmatmul.bf16.gmra.mxu0 %v454
      %v534 = vpop.f32.mrf.mxu0
      %v535 = vadd.f32 0.0, %v534
      %v536 = vpop.f32.mrf.mxu0
      %v537 = vadd.f32 0.0, %v536
      %538 = vdwg.mxu0
      %539 = vmatpush.bf16.msra.mxu0 0
      %540 = vmatpush.bf16.msra.mxu0 0
      %541 = vmatpush.bf16.msra.mxu0 0
      %542 = vmatpush.bf16.msra.mxu0 0
      %543 = vmatpush.bf16.msra.mxu0 0
      %544 = vmatpush.bf16.msra.mxu0 0
      %545 = vmatpush.bf16.msra.mxu0 0
      %546 = vmatpush.bf16.msra.mxu0 %v464
      %547 = vmatmul.bf16.gmra.mxu0 %v445
      %v548 = vpop.f32.mrf.mxu0
      %v549 = vadd.f32 0.0, %v548
      %v550 = vpop.f32.mrf.mxu0
      %v551 = vadd.f32 0.0, %v550
      %552 = vmatmul.bf16.gmra.mxu0 %v448
      %v553 = vpop.f32.mrf.mxu0
      %v554 = vadd.f32 0.0, %v553
      %v555 = vpop.f32.mrf.mxu0
      %v556 = vadd.f32 0.0, %v555
      %557 = vmatmul.bf16.gmra.mxu0 %v451
      %v558 = vpop.f32.mrf.mxu0
      %v559 = vadd.f32 0.0, %v558
      %v560 = vpop.f32.mrf.mxu0
      %v561 = vadd.f32 0.0, %v560
      %562 = vmatmul.bf16.gmra.mxu0 %v454
      %v563 = vpop.f32.mrf.mxu0
      %v564 = vadd.f32 0.0, %v563
      %v565 = vpop.f32.mrf.mxu0
      %v566 = vadd.f32 0.0, %v565
      %567 = vdwg.mxu0
      %568 = vmatpush.bf16.msra.mxu0 0
      %569 = vmatpush.bf16.msra.mxu0 0
      %570 = vmatpush.bf16.msra.mxu0 0
      %571 = vmatpush.bf16.msra.mxu0 0
      %572 = vmatpush.bf16.msra.mxu0 0
      %573 = vmatpush.bf16.msra.mxu0 0
      %574 = vmatpush.bf16.msra.mxu0 0
      %575 = vmatpush.bf16.msra.mxu0 %v467
      %576 = vmatmul.bf16.gmra.mxu0 %v445
      %v577 = vpop.f32.mrf.mxu0
      %v578 = vadd.f32 0.0, %v577
      %v579 = vpop.f32.mrf.mxu0
      %v580 = vadd.f32 0.0, %v579
      %581 = vmatmul.bf16.gmra.mxu0 %v448
      %v582 = vpop.f32.mrf.mxu0
      %v583 = vadd.f32 0.0, %v582
      %v584 = vpop.f32.mrf.mxu0
      %v585 = vadd.f32 0.0, %v584
      %586 = vmatmul.bf16.gmra.mxu0 %v451
      %v587 = vpop.f32.mrf.mxu0
      %v588 = vadd.f32 0.0, %v587
      %v589 = vpop.f32.mrf.mxu0
      %v590 = vadd.f32 0.0, %v589
      %591 = vmatmul.bf16.gmra.mxu0 %v454
      %v592 = vpop.f32.mrf.mxu0
      %v593 = vadd.f32 0.0, %v592
      %v594 = vpop.f32.mrf.mxu0
      %v595 = vadd.f32 0.0, %v594
      %596 = vdwg.mxu0
      %597 = vmatpush.bf16.msra.mxu0 0
      %598 = vmatpush.bf16.msra.mxu0 0
      %599 = vmatpush.bf16.msra.mxu0 0
      %600 = vmatpush.bf16.msra.mxu0 0
      %601 = vmatpush.bf16.msra.mxu0 0
      %602 = vmatpush.bf16.msra.mxu0 0
      %603 = vmatpush.bf16.msra.mxu0 0
      %604 = vmatpush.bf16.msra.mxu0 %v470
      %605 = vmatmul.bf16.gmra.mxu0 %v445
      %v606 = vpop.f32.mrf.mxu0
      %v607 = vadd.f32 0.0, %v606
      %v608 = vpop.f32.mrf.mxu0
      %v609 = vadd.f32 0.0, %v608
      %610 = vmatmul.bf16.gmra.mxu0 %v448
      %v611 = vpop.f32.mrf.mxu0
      %v612 = vadd.f32 0.0, %v611
      %v613 = vpop.f32.mrf.mxu0
      %v614 = vadd.f32 0.0, %v613
      %615 = vmatmul.bf16.gmra.mxu0 %v451
      %v616 = vpop.f32.mrf.mxu0
      %v617 = vadd.f32 0.0, %v616
      %v618 = vpop.f32.mrf.mxu0
      %v619 = vadd.f32 0.0, %v618
      %620 = vmatmul.bf16.gmra.mxu0 %v454
      %v621 = vpop.f32.mrf.mxu0
      %v622 = vadd.f32 0.0, %v621
      %v623 = vpop.f32.mrf.mxu0
      %v624 = vadd.f32 0.0, %v623
      %625 = vdwg.mxu0
      %626 = vmatpush.bf16.msra.mxu0 0
      %627 = vmatpush.bf16.msra.mxu0 0
      %628 = vmatpush.bf16.msra.mxu0 0
      %629 = vmatpush.bf16.msra.mxu0 0
      %630 = vmatpush.bf16.msra.mxu0 0
      %631 = vmatpush.bf16.msra.mxu0 0
      %632 = vmatpush.bf16.msra.mxu0 0
      %633 = vmatpush.bf16.msra.mxu0 %v473
      %634 = vmatmul.bf16.gmra.mxu0 %v445
      %v635 = vpop.f32.mrf.mxu0
      %v636 = vadd.f32 0.0, %v635
      %v637 = vpop.f32.mrf.mxu0
      %v638 = vadd.f32 0.0, %v637
      %639 = vmatmul.bf16.gmra.mxu0 %v448
      %v640 = vpop.f32.mrf.mxu0
      %v641 = vadd.f32 0.0, %v640
      %v642 = vpop.f32.mrf.mxu0
      %v643 = vadd.f32 0.0, %v642
      %644 = vmatmul.bf16.gmra.mxu0 %v451
      %v645 = vpop.f32.mrf.mxu0
      %v646 = vadd.f32 0.0, %v645
      %v647 = vpop.f32.mrf.mxu0
      %v648 = vadd.f32 0.0, %v647
      %649 = vmatmul.bf16.gmra.mxu0 %v454
      %v650 = vpop.f32.mrf.mxu0
      %v651 = vadd.f32 0.0, %v650
      %v652 = vpop.f32.mrf.mxu0
      %v653 = vadd.f32 0.0, %v652
      %654 = vdwg.mxu0
      %655 = vmatpush.bf16.msra.mxu0 0
      %656 = vmatpush.bf16.msra.mxu0 0
      %657 = vmatpush.bf16.msra.mxu0 0
      %658 = vmatpush.bf16.msra.mxu0 0
      %659 = vmatpush.bf16.msra.mxu0 0
      %660 = vmatpush.bf16.msra.mxu0 0
      %661 = vmatpush.bf16.msra.mxu0 0
      %662 = vmatpush.bf16.msra.mxu0 %v476
      %663 = vmatmul.bf16.gmra.mxu0 %v445
      %v664 = vpop.f32.mrf.mxu0
      %v665 = vadd.f32 0.0, %v664
      %v666 = vpop.f32.mrf.mxu0
      %v667 = vadd.f32 0.0, %v666
      %668 = vmatmul.bf16.gmra.mxu0 %v448
      %v669 = vpop.f32.mrf.mxu0
      %v670 = vadd.f32 0.0, %v669
      %v671 = vpop.f32.mrf.mxu0
      %v672 = vadd.f32 0.0, %v671
      %673 = vmatmul.bf16.gmra.mxu0 %v451
      %v674 = vpop.f32.mrf.mxu0
      %v675 = vadd.f32 0.0, %v674
      %v676 = vpop.f32.mrf.mxu0
      %v677 = vadd.f32 0.0, %v676
      %678 = vmatmul.bf16.gmra.mxu0 %v454
      %v679 = vpop.f32.mrf.mxu0
      %v680 = vadd.f32 0.0, %v679
      %v681 = vpop.f32.mrf.mxu0
      %v682 = vadd.f32 0.0, %v681
      %683 = vdwg.mxu0
      %684 = vmatpush.bf16.msra.mxu0 0
      %685 = vmatpush.bf16.msra.mxu0 0
      %686 = vmatpush.bf16.msra.mxu0 0
      %687 = vmatpush.bf16.msra.mxu0 0
      %688 = vmatpush.bf16.msra.mxu0 0
      %689 = vmatpush.bf16.msra.mxu0 0
      %690 = vmatpush.bf16.msra.mxu0 0
      %691 = vmatpush.bf16.msra.mxu0 %v479
      %692 = vmatmul.bf16.gmra.mxu0 %v445
      %v693 = vpop.f32.mrf.mxu0
      %v694 = vadd.f32 0.0, %v693
      %v695 = vpop.f32.mrf.mxu0
      %v696 = vadd.f32 0.0, %v695
      %697 = vmatmul.bf16.gmra.mxu0 %v448
      %v698 = vpop.f32.mrf.mxu0
      %v699 = vadd.f32 0.0, %v698
      %v700 = vpop.f32.mrf.mxu0
      %v701 = vadd.f32 0.0, %v700
      %702 = vmatmul.bf16.gmra.mxu0 %v451
      %v703 = vpop.f32.mrf.mxu0
      %v704 = vadd.f32 0.0, %v703
      %v705 = vpop.f32.mrf.mxu0
      %v706 = vadd.f32 0.0, %v705
      %707 = vmatmul.bf16.gmra.mxu0 %v454
      %v708 = vpop.f32.mrf.mxu0
      %v709 = vadd.f32 0.0, %v708
      %v710 = vpop.f32.mrf.mxu0
      %v711 = vadd.f32 0.0, %v710
      %712 = vdwg.mxu0
      %v713 = vld [vmem:[%s3] sm:$0xff]
      %v714 = vld [vmem:[%s3 + $0x8] sm:$0xff]
      %v715 = vld [vmem:[%s3 + $0x10] sm:$0xff]
      %v716 = vld [vmem:[%s3 + $0x18] sm:$0xff]
      %718 = vset.pattern.permute.xlu0 0
      %719 = vperm.xlu0 %718, %v713
      %v720 = vpop.permute.xlu0 %719
      %723 = vset.pattern.permute.xlu0 0
      %724 = vperm.xlu0 %723, %v714
      %v725 = vpop.permute.xlu0 %724
      %728 = vset.pattern.permute.xlu0 0
      %729 = vperm.xlu0 %728, %v715
      %v730 = vpop.permute.xlu0 %729
      %733 = vset.pattern.permute.xlu0 0
      %734 = vperm.xlu0 %733, %v716
      %v735 = vpop.permute.xlu0 %734
      %v737 = vadd.f32 %v491, %v720
      %v738 = vadd.f32 %v520, %v720
      %v739 = vadd.f32 %v549, %v720
      %v740 = vadd.f32 %v578, %v720
      %v741 = vadd.f32 %v607, %v720
      %v742 = vadd.f32 %v636, %v720
      %v743 = vadd.f32 %v665, %v720
      %v744 = vadd.f32 %v694, %v720
      %v745 = vadd.f32 %v493, %v725
      %v746 = vadd.f32 %v522, %v725
      %v747 = vadd.f32 %v551, %v725
      %v748 = vadd.f32 %v580, %v725
      %v749 = vadd.f32 %v609, %v725
      %v750 = vadd.f32 %v638, %v725
      %v751 = vadd.f32 %v667, %v725
      %v752 = vadd.f32 %v696, %v725
      %v753 = vadd.f32 %v496, %v730
      %v754 = vadd.f32 %v525, %v730
      %v755 = vadd.f32 %v554, %v730
      %v756 = vadd.f32 %v583, %v730
      %v757 = vadd.f32 %v612, %v730
      %v758 = vadd.f32 %v641, %v730
      %v759 = vadd.f32 %v670, %v730
      %v760 = vadd.f32 %v699, %v730
      %v761 = vadd.f32 %v498, %v735
      %v762 = vadd.f32 %v527, %v735
      %v763 = vadd.f32 %v556, %v735
      %v764 = vadd.f32 %v585, %v735
      %v765 = vadd.f32 %v614, %v735
      %v766 = vadd.f32 %v643, %v735
      %v767 = vadd.f32 %v672, %v735
      %v768 = vadd.f32 %v701, %v735
      %v769 = vmax.f32 %v737, 0.0
      %v770 = vmax.f32 %v738, 0.0
      %v771 = vmax.f32 %v739, 0.0
      %v772 = vmax.f32 %v740, 0.0
      %v773 = vmax.f32 %v741, 0.0
      %v774 = vmax.f32 %v742, 0.0
      %v775 = vmax.f32 %v743, 0.0
      %v776 = vmax.f32 %v744, 0.0
      %v777 = vmax.f32 %v745, 0.0
      %v778 = vmax.f32 %v746, 0.0
      %v779 = vmax.f32 %v747, 0.0
      %v780 = vmax.f32 %v748, 0.0
      %v781 = vmax.f32 %v749, 0.0
      %v782 = vmax.f32 %v750, 0.0
      %v783 = vmax.f32 %v751, 0.0
      %v784 = vmax.f32 %v752, 0.0
      %v785 = vmax.f32 %v753, 0.0
      %v786 = vmax.f32 %v754, 0.0
      %v787 = vmax.f32 %v755, 0.0
      %v788 = vmax.f32 %v756, 0.0
      %v789 = vmax.f32 %v757, 0.0
      %v790 = vmax.f32 %v758, 0.0
      %v791 = vmax.f32 %v759, 0.0
      %v792 = vmax.f32 %v760, 0.0
      %v793 = vmax.f32 %v761, 0.0
      %v794 = vmax.f32 %v762, 0.0
      %v795 = vmax.f32 %v763, 0.0
      %v796 = vmax.f32 %v764, 0.0
      %v797 = vmax.f32 %v765, 0.0
      %v798 = vmax.f32 %v766, 0.0
      %v799 = vmax.f32 %v767, 0.0
      %v800 = vmax.f32 %v768, 0.0
      %v801 = vld [vmem:[%s2] sm:$0xf]
      %v802 = vld [vmem:[%s2 + $0x4] sm:$0xf]
      %v803 = vld [vmem:[%s2 + $0x8] sm:$0xf]
      %v804 = vld [vmem:[%s2 + $0xc] sm:$0xf]
      %v805 = vpack.c.bf16 %v777, %v769
      %v806 = vpack.c.bf16 %v778, %v770
      %v807 = vpack.c.bf16 %v779, %v771
      %v808 = vpack.c.bf16 %v780, %v772
      %v809 = vpack.c.bf16 %v781, %v773
      %v810 = vpack.c.bf16 %v782, %v774
      %v811 = vpack.c.bf16 %v783, %v775
      %v812 = vpack.c.bf16 %v784, %v776
      %v813 = vpack.c.bf16 %v793, %v785
      %v814 = vpack.c.bf16 %v794, %v786
      %v815 = vpack.c.bf16 %v795, %v787
      %v816 = vpack.c.bf16 %v796, %v788
      %v817 = vpack.c.bf16 %v797, %v789
      %v818 = vpack.c.bf16 %v798, %v790
      %v819 = vpack.c.bf16 %v799, %v791
      %v820 = vpack.c.bf16 %v800, %v792
      %s821 = scalar_lea.vmem %s3, 32
      %v822 = vld [vmem:[%s821] sm:$0xff]
      %v823 = vld [vmem:[%s821 + $0x8] sm:$0xff]
      %v824 = vld [vmem:[%s821 + $0x10] sm:$0xff]
      %v825 = vld [vmem:[%s821 + $0x18] sm:$0xff]
      %827 = vset.pattern.permute.xlu0 0
      %828 = vperm.xlu0 %827, %v822
      %v829 = vpop.permute.xlu0 %828
      %832 = vset.pattern.permute.xlu0 0
      %833 = vperm.xlu0 %832, %v823
      %v834 = vpop.permute.xlu0 %833
      %837 = vset.pattern.permute.xlu0 0
      %838 = vperm.xlu0 %837, %v824
      %v839 = vpop.permute.xlu0 %838
      %842 = vset.pattern.permute.xlu0 0
      %843 = vperm.xlu0 %842, %v825
      %v844 = vpop.permute.xlu0 %843
      %v850 = vunpack.c.l.b16 %v801
      %v851 = vunpack.c.l.b16 %v802
      %v852 = vunpack.c.l.b16 %v803
      %v853 = vunpack.c.l.b16 %v804
      %v854 = vpack.c.b16 %v851, %v850
      %v855 = vpack.c.b16 %v853, %v852
      %vm856 = vcmask 261120
      %v858 = vsel %vm856, %v854, 0
      %v861 = vsel %vm856, %v855, 0
      %863 = vmatpush.bf16.msra.mxu0 0
      %864 = vmatpush.bf16.msra.mxu0 0
      %865 = vmatpush.bf16.msra.mxu0 0
      %866 = vmatpush.bf16.msra.mxu0 0
      %867 = vmatpush.bf16.msra.mxu0 0
      %868 = vmatpush.bf16.msra.mxu0 0
      %869 = vmatpush.bf16.msra.mxu0 %v813
      %870 = vmatpush.bf16.msra.mxu0 %v805
      %871 = vmatmul.bf16.gmra.mxu0 %v858
      %v872 = vpop.f32.mrf.mxu0
      %v873 = vadd.f32 %v829, %v872
      %v874 = vpop.f32.mrf.mxu0
      %v875 = vadd.f32 %v834, %v874
      %876 = vmatmul.bf16.gmra.mxu0 %v861
      %v877 = vpop.f32.mrf.mxu0
      %v878 = vadd.f32 %v839, %v877
      %v879 = vpop.f32.mrf.mxu0
      %v880 = vadd.f32 %v844, %v879
      %881 = vdwg.mxu0
      %882 = vmatpush.bf16.msra.mxu0 0
      %883 = vmatpush.bf16.msra.mxu0 0
      %884 = vmatpush.bf16.msra.mxu0 0
      %885 = vmatpush.bf16.msra.mxu0 0
      %886 = vmatpush.bf16.msra.mxu0 0
      %887 = vmatpush.bf16.msra.mxu0 0
      %888 = vmatpush.bf16.msra.mxu0 %v814
      %889 = vmatpush.bf16.msra.mxu0 %v806
      %890 = vmatmul.bf16.gmra.mxu0 %v858
      %v891 = vpop.f32.mrf.mxu0
      %v892 = vadd.f32 %v829, %v891
      %v893 = vpop.f32.mrf.mxu0
      %v894 = vadd.f32 %v834, %v893
      %895 = vmatmul.bf16.gmra.mxu0 %v861
      %v896 = vpop.f32.mrf.mxu0
      %v897 = vadd.f32 %v839, %v896
      %v898 = vpop.f32.mrf.mxu0
      %v899 = vadd.f32 %v844, %v898
      %900 = vdwg.mxu0
      %901 = vmatpush.bf16.msra.mxu0 0
      %902 = vmatpush.bf16.msra.mxu0 0
      %903 = vmatpush.bf16.msra.mxu0 0
      %904 = vmatpush.bf16.msra.mxu0 0
      %905 = vmatpush.bf16.msra.mxu0 0
      %906 = vmatpush.bf16.msra.mxu0 0
      %907 = vmatpush.bf16.msra.mxu0 %v815
      %908 = vmatpush.bf16.msra.mxu0 %v807
      %909 = vmatmul.bf16.gmra.mxu0 %v858
      %v910 = vpop.f32.mrf.mxu0
      %v911 = vadd.f32 %v829, %v910
      %v912 = vpop.f32.mrf.mxu0
      %v913 = vadd.f32 %v834, %v912
      %914 = vmatmul.bf16.gmra.mxu0 %v861
      %v915 = vpop.f32.mrf.mxu0
      %v916 = vadd.f32 %v839, %v915
      %v917 = vpop.f32.mrf.mxu0
      %v918 = vadd.f32 %v844, %v917
      %919 = vdwg.mxu0
      %920 = vmatpush.bf16.msra.mxu0 0
      %921 = vmatpush.bf16.msra.mxu0 0
      %922 = vmatpush.bf16.msra.mxu0 0
      %923 = vmatpush.bf16.msra.mxu0 0
      %924 = vmatpush.bf16.msra.mxu0 0
      %925 = vmatpush.bf16.msra.mxu0 0
      %926 = vmatpush.bf16.msra.mxu0 %v816
      %927 = vmatpush.bf16.msra.mxu0 %v808
      %928 = vmatmul.bf16.gmra.mxu0 %v858
      %v929 = vpop.f32.mrf.mxu0
      %v930 = vadd.f32 %v829, %v929
      %v931 = vpop.f32.mrf.mxu0
      %v932 = vadd.f32 %v834, %v931
      %933 = vmatmul.bf16.gmra.mxu0 %v861
      %v934 = vpop.f32.mrf.mxu0
      %v935 = vadd.f32 %v839, %v934
      %v936 = vpop.f32.mrf.mxu0
      %v937 = vadd.f32 %v844, %v936
      %938 = vdwg.mxu0
      %939 = vmatpush.bf16.msra.mxu0 0
      %940 = vmatpush.bf16.msra.mxu0 0
      %941 = vmatpush.bf16.msra.mxu0 0
      %942 = vmatpush.bf16.msra.mxu0 0
      %943 = vmatpush.bf16.msra.mxu0 0
      %944 = vmatpush.bf16.msra.mxu0 0
      %945 = vmatpush.bf16.msra.mxu0 %v817
      %946 = vmatpush.bf16.msra.mxu0 %v809
      %947 = vmatmul.bf16.gmra.mxu0 %v858
      %v948 = vpop.f32.mrf.mxu0
      %v949 = vadd.f32 %v829, %v948
      %v950 = vpop.f32.mrf.mxu0
      %v951 = vadd.f32 %v834, %v950
      %952 = vmatmul.bf16.gmra.mxu0 %v861
      %v953 = vpop.f32.mrf.mxu0
      %v954 = vadd.f32 %v839, %v953
      %v955 = vpop.f32.mrf.mxu0
      %v956 = vadd.f32 %v844, %v955
      %957 = vdwg.mxu0
      %958 = vmatpush.bf16.msra.mxu0 0
      %959 = vmatpush.bf16.msra.mxu0 0
      %960 = vmatpush.bf16.msra.mxu0 0
      %961 = vmatpush.bf16.msra.mxu0 0
      %962 = vmatpush.bf16.msra.mxu0 0
      %963 = vmatpush.bf16.msra.mxu0 0
      %964 = vmatpush.bf16.msra.mxu0 %v818
      %965 = vmatpush.bf16.msra.mxu0 %v810
      %966 = vmatmul.bf16.gmra.mxu0 %v858
      %v967 = vpop.f32.mrf.mxu0
      %v968 = vadd.f32 %v829, %v967
      %v969 = vpop.f32.mrf.mxu0
      %v970 = vadd.f32 %v834, %v969
      %971 = vmatmul.bf16.gmra.mxu0 %v861
      %v972 = vpop.f32.mrf.mxu0
      %v973 = vadd.f32 %v839, %v972
      %v974 = vpop.f32.mrf.mxu0
      %v975 = vadd.f32 %v844, %v974
      %976 = vdwg.mxu0
      %977 = vmatpush.bf16.msra.mxu0 0
      %978 = vmatpush.bf16.msra.mxu0 0
      %979 = vmatpush.bf16.msra.mxu0 0
      %980 = vmatpush.bf16.msra.mxu0 0
      %981 = vmatpush.bf16.msra.mxu0 0
      %982 = vmatpush.bf16.msra.mxu0 0
      %983 = vmatpush.bf16.msra.mxu0 %v819
      %984 = vmatpush.bf16.msra.mxu0 %v811
      %985 = vmatmul.bf16.gmra.mxu0 %v858
      %v986 = vpop.f32.mrf.mxu0
      %v987 = vadd.f32 %v829, %v986
      %v988 = vpop.f32.mrf.mxu0
      %v989 = vadd.f32 %v834, %v988
      %990 = vmatmul.bf16.gmra.mxu0 %v861
      %v991 = vpop.f32.mrf.mxu0
      %v992 = vadd.f32 %v839, %v991
      %v993 = vpop.f32.mrf.mxu0
      %v994 = vadd.f32 %v844, %v993
      %995 = vdwg.mxu0
      %996 = vmatpush.bf16.msra.mxu0 0
      %997 = vmatpush.bf16.msra.mxu0 0
      %998 = vmatpush.bf16.msra.mxu0 0
      %999 = vmatpush.bf16.msra.mxu0 0
      %1000 = vmatpush.bf16.msra.mxu0 0
      %1001 = vmatpush.bf16.msra.mxu0 0
      %1002 = vmatpush.bf16.msra.mxu0 %v820
      %1003 = vmatpush.bf16.msra.mxu0 %v812
      %1004 = vmatmul.bf16.gmra.mxu0 %v858
      %v1005 = vpop.f32.mrf.mxu0
      %v1006 = vadd.f32 %v829, %v1005
      %v1007 = vpop.f32.mrf.mxu0
      %v1008 = vadd.f32 %v834, %v1007
      %1009 = vmatmul.bf16.gmra.mxu0 %v861
      %v1010 = vpop.f32.mrf.mxu0
      %v1011 = vadd.f32 %v839, %v1010
      %v1012 = vpop.f32.mrf.mxu0
      %v1013 = vadd.f32 %v844, %v1012
      %1014 = vdwg.mxu0
      %v1015 = vmax.f32 %v873, 0.0
      %v1016 = vmax.f32 %v892, 0.0
      %v1017 = vmax.f32 %v911, 0.0
      %v1018 = vmax.f32 %v930, 0.0
      %v1019 = vmax.f32 %v949, 0.0
      %v1020 = vmax.f32 %v968, 0.0
      %v1021 = vmax.f32 %v987, 0.0
      %v1022 = vmax.f32 %v1006, 0.0
      %v1023 = vmax.f32 %v875, 0.0
      %v1024 = vmax.f32 %v894, 0.0
      %v1025 = vmax.f32 %v913, 0.0
      %v1026 = vmax.f32 %v932, 0.0
      %v1027 = vmax.f32 %v951, 0.0
      %v1028 = vmax.f32 %v970, 0.0
      %v1029 = vmax.f32 %v989, 0.0
      %v1030 = vmax.f32 %v1008, 0.0
      %v1031 = vmax.f32 %v878, 0.0
      %v1032 = vmax.f32 %v897, 0.0
      %v1033 = vmax.f32 %v916, 0.0
      %v1034 = vmax.f32 %v935, 0.0
      %v1035 = vmax.f32 %v954, 0.0
      %v1036 = vmax.f32 %v973, 0.0
      %v1037 = vmax.f32 %v992, 0.0
      %v1038 = vmax.f32 %v1011, 0.0
      %v1039 = vmax.f32 %v880, 0.0
      %v1040 = vmax.f32 %v899, 0.0
      %v1041 = vmax.f32 %v918, 0.0
      %v1042 = vmax.f32 %v937, 0.0
      %v1043 = vmax.f32 %v956, 0.0
      %v1044 = vmax.f32 %v975, 0.0
      %v1045 = vmax.f32 %v994, 0.0
      %v1046 = vmax.f32 %v1013, 0.0
      %s1047 = scalar_lea.vmem %s2, 16
      %v1048 = vld [vmem:[%s1047] sm:$0xf]
      %v1049 = vld [vmem:[%s1047 + $0x4] sm:$0xf]
      %v1050 = vld [vmem:[%s1047 + $0x8] sm:$0xf]
      %v1051 = vld [vmem:[%s1047 + $0xc] sm:$0xf]
      %v1052 = vpack.c.bf16 %v1023, %v1015
      %v1053 = vpack.c.bf16 %v1024, %v1016
      %v1054 = vpack.c.bf16 %v1025, %v1017
      %v1055 = vpack.c.bf16 %v1026, %v1018
      %v1056 = vpack.c.bf16 %v1027, %v1019
      %v1057 = vpack.c.bf16 %v1028, %v1020
      %v1058 = vpack.c.bf16 %v1029, %v1021
      %v1059 = vpack.c.bf16 %v1030, %v1022
      %v1060 = vpack.c.bf16 %v1039, %v1031
      %v1061 = vpack.c.bf16 %v1040, %v1032
      %v1062 = vpack.c.bf16 %v1041, %v1033
      %v1063 = vpack.c.bf16 %v1042, %v1034
      %v1064 = vpack.c.bf16 %v1043, %v1035
      %v1065 = vpack.c.bf16 %v1044, %v1036
      %v1066 = vpack.c.bf16 %v1045, %v1037
      %v1067 = vpack.c.bf16 %v1046, %v1038
      %s1068 = scalar_lea.vmem %s3, 64
      %v1069 = vld [vmem:[%s1068] sm:$0xff]
      %v1070 = vld [vmem:[%s1068 + $0x8] sm:$0xff]
      %v1071 = vld [vmem:[%s1068 + $0x10] sm:$0xff]
      %v1072 = vld [vmem:[%s1068 + $0x18] sm:$0xff]
      %1074 = vset.pattern.permute.xlu0 0
      %1075 = vperm.xlu0 %1074, %v1069
      %v1076 = vpop.permute.xlu0 %1075
      %1079 = vset.pattern.permute.xlu0 0
      %1080 = vperm.xlu0 %1079, %v1070
      %v1081 = vpop.permute.xlu0 %1080
      %1084 = vset.pattern.permute.xlu0 0
      %1085 = vperm.xlu0 %1084, %v1071
      %v1086 = vpop.permute.xlu0 %1085
      %1089 = vset.pattern.permute.xlu0 0
      %1090 = vperm.xlu0 %1089, %v1072
      %v1091 = vpop.permute.xlu0 %1090
      %v1097 = vunpack.c.l.b16 %v1048
      %v1098 = vunpack.c.l.b16 %v1049
      %v1099 = vunpack.c.l.b16 %v1050
      %v1100 = vunpack.c.l.b16 %v1051
      %v1101 = vpack.c.b16 %v1098, %v1097
      %v1102 = vpack.c.b16 %v1100, %v1099
      %v1104 = vsel %vm856, %v1101, 0
      %v1107 = vsel %vm856, %v1102, 0
      %1109 = vmatpush.bf16.msra.mxu0 0
      %1110 = vmatpush.bf16.msra.mxu0 0
      %1111 = vmatpush.bf16.msra.mxu0 0
      %1112 = vmatpush.bf16.msra.mxu0 0
      %1113 = vmatpush.bf16.msra.mxu0 0
      %1114 = vmatpush.bf16.msra.mxu0 0
      %1115 = vmatpush.bf16.msra.mxu0 %v1060
      %1116 = vmatpush.bf16.msra.mxu0 %v1052
      %1117 = vmatmul.bf16.gmra.mxu0 %v1104
      %v1118 = vpop.f32.mrf.mxu0
      %v1119 = vadd.f32 %v1076, %v1118
      %v1120 = vpop.f32.mrf.mxu0
      %v1121 = vadd.f32 %v1081, %v1120
      %1122 = vmatmul.bf16.gmra.mxu0 %v1107
      %v1123 = vpop.f32.mrf.mxu0
      %v1124 = vadd.f32 %v1086, %v1123
      %v1125 = vpop.f32.mrf.mxu0
      %v1126 = vadd.f32 %v1091, %v1125
      %1127 = vdwg.mxu0
      %1128 = vmatpush.bf16.msra.mxu0 0
      %1129 = vmatpush.bf16.msra.mxu0 0
      %1130 = vmatpush.bf16.msra.mxu0 0
      %1131 = vmatpush.bf16.msra.mxu0 0
      %1132 = vmatpush.bf16.msra.mxu0 0
      %1133 = vmatpush.bf16.msra.mxu0 0
      %1134 = vmatpush.bf16.msra.mxu0 %v1061
      %1135 = vmatpush.bf16.msra.mxu0 %v1053
      %1136 = vmatmul.bf16.gmra.mxu0 %v1104
      %v1137 = vpop.f32.mrf.mxu0
      %v1138 = vadd.f32 %v1076, %v1137
      %v1139 = vpop.f32.mrf.mxu0
      %v1140 = vadd.f32 %v1081, %v1139
      %1141 = vmatmul.bf16.gmra.mxu0 %v1107
      %v1142 = vpop.f32.mrf.mxu0
      %v1143 = vadd.f32 %v1086, %v1142
      %v1144 = vpop.f32.mrf.mxu0
      %v1145 = vadd.f32 %v1091, %v1144
      %1146 = vdwg.mxu0
      %1147 = vmatpush.bf16.msra.mxu0 0
      %1148 = vmatpush.bf16.msra.mxu0 0
      %1149 = vmatpush.bf16.msra.mxu0 0
      %1150 = vmatpush.bf16.msra.mxu0 0
      %1151 = vmatpush.bf16.msra.mxu0 0
      %1152 = vmatpush.bf16.msra.mxu0 0
      %1153 = vmatpush.bf16.msra.mxu0 %v1062
      %1154 = vmatpush.bf16.msra.mxu0 %v1054
      %1155 = vmatmul.bf16.gmra.mxu0 %v1104
      %v1156 = vpop.f32.mrf.mxu0
      %v1157 = vadd.f32 %v1076, %v1156
      %v1158 = vpop.f32.mrf.mxu0
      %v1159 = vadd.f32 %v1081, %v1158
      %1160 = vmatmul.bf16.gmra.mxu0 %v1107
      %v1161 = vpop.f32.mrf.mxu0
      %v1162 = vadd.f32 %v1086, %v1161
      %v1163 = vpop.f32.mrf.mxu0
      %v1164 = vadd.f32 %v1091, %v1163
      %1165 = vdwg.mxu0
      %1166 = vmatpush.bf16.msra.mxu0 0
      %1167 = vmatpush.bf16.msra.mxu0 0
      %1168 = vmatpush.bf16.msra.mxu0 0
      %1169 = vmatpush.bf16.msra.mxu0 0
      %1170 = vmatpush.bf16.msra.mxu0 0
      %1171 = vmatpush.bf16.msra.mxu0 0
      %1172 = vmatpush.bf16.msra.mxu0 %v1063
      %1173 = vmatpush.bf16.msra.mxu0 %v1055
      %1174 = vmatmul.bf16.gmra.mxu0 %v1104
      %v1175 = vpop.f32.mrf.mxu0
      %v1176 = vadd.f32 %v1076, %v1175
      %v1177 = vpop.f32.mrf.mxu0
      %v1178 = vadd.f32 %v1081, %v1177
      %1179 = vmatmul.bf16.gmra.mxu0 %v1107
      %v1180 = vpop.f32.mrf.mxu0
      %v1181 = vadd.f32 %v1086, %v1180
      %v1182 = vpop.f32.mrf.mxu0
      %v1183 = vadd.f32 %v1091, %v1182
      %1184 = vdwg.mxu0
      %1185 = vmatpush.bf16.msra.mxu0 0
      %1186 = vmatpush.bf16.msra.mxu0 0
      %1187 = vmatpush.bf16.msra.mxu0 0
      %1188 = vmatpush.bf16.msra.mxu0 0
      %1189 = vmatpush.bf16.msra.mxu0 0
      %1190 = vmatpush.bf16.msra.mxu0 0
      %1191 = vmatpush.bf16.msra.mxu0 %v1064
      %1192 = vmatpush.bf16.msra.mxu0 %v1056
      %1193 = vmatmul.bf16.gmra.mxu0 %v1104
      %v1194 = vpop.f32.mrf.mxu0
      %v1195 = vadd.f32 %v1076, %v1194
      %v1196 = vpop.f32.mrf.mxu0
      %v1197 = vadd.f32 %v1081, %v1196
      %1198 = vmatmul.bf16.gmra.mxu0 %v1107
      %v1199 = vpop.f32.mrf.mxu0
      %v1200 = vadd.f32 %v1086, %v1199
      %v1201 = vpop.f32.mrf.mxu0
      %v1202 = vadd.f32 %v1091, %v1201
      %1203 = vdwg.mxu0
      %1204 = vmatpush.bf16.msra.mxu0 0
      %1205 = vmatpush.bf16.msra.mxu0 0
      %1206 = vmatpush.bf16.msra.mxu0 0
      %1207 = vmatpush.bf16.msra.mxu0 0
      %1208 = vmatpush.bf16.msra.mxu0 0
      %1209 = vmatpush.bf16.msra.mxu0 0
      %1210 = vmatpush.bf16.msra.mxu0 %v1065
      %1211 = vmatpush.bf16.msra.mxu0 %v1057
      %1212 = vmatmul.bf16.gmra.mxu0 %v1104
      %v1213 = vpop.f32.mrf.mxu0
      %v1214 = vadd.f32 %v1076, %v1213
      %v1215 = vpop.f32.mrf.mxu0
      %v1216 = vadd.f32 %v1081, %v1215
      %1217 = vmatmul.bf16.gmra.mxu0 %v1107
      %v1218 = vpop.f32.mrf.mxu0
      %v1219 = vadd.f32 %v1086, %v1218
      %v1220 = vpop.f32.mrf.mxu0
      %v1221 = vadd.f32 %v1091, %v1220
      %1222 = vdwg.mxu0
      %1223 = vmatpush.bf16.msra.mxu0 0
      %1224 = vmatpush.bf16.msra.mxu0 0
      %1225 = vmatpush.bf16.msra.mxu0 0
      %1226 = vmatpush.bf16.msra.mxu0 0
      %1227 = vmatpush.bf16.msra.mxu0 0
      %1228 = vmatpush.bf16.msra.mxu0 0
      %1229 = vmatpush.bf16.msra.mxu0 %v1066
      %1230 = vmatpush.bf16.msra.mxu0 %v1058
      %1231 = vmatmul.bf16.gmra.mxu0 %v1104
      %v1232 = vpop.f32.mrf.mxu0
      %v1233 = vadd.f32 %v1076, %v1232
      %v1234 = vpop.f32.mrf.mxu0
      %v1235 = vadd.f32 %v1081, %v1234
      %1236 = vmatmul.bf16.gmra.mxu0 %v1107
      %v1237 = vpop.f32.mrf.mxu0
      %v1238 = vadd.f32 %v1086, %v1237
      %v1239 = vpop.f32.mrf.mxu0
      %v1240 = vadd.f32 %v1091, %v1239
      %1241 = vdwg.mxu0
      %1242 = vmatpush.bf16.msra.mxu0 0
      %1243 = vmatpush.bf16.msra.mxu0 0
      %1244 = vmatpush.bf16.msra.mxu0 0
      %1245 = vmatpush.bf16.msra.mxu0 0
      %1246 = vmatpush.bf16.msra.mxu0 0
      %1247 = vmatpush.bf16.msra.mxu0 0
      %1248 = vmatpush.bf16.msra.mxu0 %v1067
      %1249 = vmatpush.bf16.msra.mxu0 %v1059
      %1250 = vmatmul.bf16.gmra.mxu0 %v1104
      %v1251 = vpop.f32.mrf.mxu0
      %v1252 = vadd.f32 %v1076, %v1251
      %v1253 = vpop.f32.mrf.mxu0
      %v1254 = vadd.f32 %v1081, %v1253
      %1255 = vmatmul.bf16.gmra.mxu0 %v1107
      %v1256 = vpop.f32.mrf.mxu0
      %v1257 = vadd.f32 %v1086, %v1256
      %v1258 = vpop.f32.mrf.mxu0
      %v1259 = vadd.f32 %v1091, %v1258
      %1260 = vdwg.mxu0
      %v1261 = vmax.f32 %v1119, 0.0
      %v1262 = vmax.f32 %v1138, 0.0
      %v1263 = vmax.f32 %v1157, 0.0
      %v1264 = vmax.f32 %v1176, 0.0
      %v1265 = vmax.f32 %v1195, 0.0
      %v1266 = vmax.f32 %v1214, 0.0
      %v1267 = vmax.f32 %v1233, 0.0
      %v1268 = vmax.f32 %v1252, 0.0
      %v1269 = vmax.f32 %v1121, 0.0
      %v1270 = vmax.f32 %v1140, 0.0
      %v1271 = vmax.f32 %v1159, 0.0
      %v1272 = vmax.f32 %v1178, 0.0
      %v1273 = vmax.f32 %v1197, 0.0
      %v1274 = vmax.f32 %v1216, 0.0
      %v1275 = vmax.f32 %v1235, 0.0
      %v1276 = vmax.f32 %v1254, 0.0
      %v1277 = vmax.f32 %v1124, 0.0
      %v1278 = vmax.f32 %v1143, 0.0
      %v1279 = vmax.f32 %v1162, 0.0
      %v1280 = vmax.f32 %v1181, 0.0
      %v1281 = vmax.f32 %v1200, 0.0
      %v1282 = vmax.f32 %v1219, 0.0
      %v1283 = vmax.f32 %v1238, 0.0
      %v1284 = vmax.f32 %v1257, 0.0
      %v1285 = vmax.f32 %v1126, 0.0
      %v1286 = vmax.f32 %v1145, 0.0
      %v1287 = vmax.f32 %v1164, 0.0
      %v1288 = vmax.f32 %v1183, 0.0
      %v1289 = vmax.f32 %v1202, 0.0
      %v1290 = vmax.f32 %v1221, 0.0
      %v1291 = vmax.f32 %v1240, 0.0
      %v1292 = vmax.f32 %v1259, 0.0
      %s1293 = scalar_lea.vmem %s2, 32
      %v1294 = vld [vmem:[%s1293] sm:$0xf]
      %v1295 = vld [vmem:[%s1293 + $0x4] sm:$0xf]
      %v1296 = vld [vmem:[%s1293 + $0x8] sm:$0xf]
      %v1297 = vld [vmem:[%s1293 + $0xc] sm:$0xf]
      %v1298 = vpack.c.bf16 %v1269, %v1261
      %v1299 = vpack.c.bf16 %v1270, %v1262
      %v1300 = vpack.c.bf16 %v1271, %v1263
      %v1301 = vpack.c.bf16 %v1272, %v1264
      %v1302 = vpack.c.bf16 %v1273, %v1265
      %v1303 = vpack.c.bf16 %v1274, %v1266
      %v1304 = vpack.c.bf16 %v1275, %v1267
      %v1305 = vpack.c.bf16 %v1276, %v1268
      %v1306 = vpack.c.bf16 %v1285, %v1277
      %v1307 = vpack.c.bf16 %v1286, %v1278
      %v1308 = vpack.c.bf16 %v1287, %v1279
      %v1309 = vpack.c.bf16 %v1288, %v1280
      %v1310 = vpack.c.bf16 %v1289, %v1281
      %v1311 = vpack.c.bf16 %v1290, %v1282
      %v1312 = vpack.c.bf16 %v1291, %v1283
      %v1313 = vpack.c.bf16 %v1292, %v1284
      %s1314 = scalar_lea.vmem %s3, 96
      %v1315 = vld [vmem:[%s1314] sm:$0xff]
      %v1316 = vld [vmem:[%s1314 + $0x8] sm:$0xff]
      %v1317 = vld [vmem:[%s1314 + $0x10] sm:$0xff]
      %v1318 = vld [vmem:[%s1314 + $0x18] sm:$0xff]
      %1320 = vset.pattern.permute.xlu0 0
      %1321 = vperm.xlu0 %1320, %v1315
      %v1322 = vpop.permute.xlu0 %1321
      %1325 = vset.pattern.permute.xlu0 0
      %1326 = vperm.xlu0 %1325, %v1316
      %v1327 = vpop.permute.xlu0 %1326
      %1330 = vset.pattern.permute.xlu0 0
      %1331 = vperm.xlu0 %1330, %v1317
      %v1332 = vpop.permute.xlu0 %1331
      %1335 = vset.pattern.permute.xlu0 0
      %1336 = vperm.xlu0 %1335, %v1318
      %v1337 = vpop.permute.xlu0 %1336
      %v1343 = vunpack.c.l.b16 %v1294
      %v1344 = vunpack.c.l.b16 %v1295
      %v1345 = vunpack.c.l.b16 %v1296
      %v1346 = vunpack.c.l.b16 %v1297
      %v1347 = vpack.c.b16 %v1344, %v1343
      %v1348 = vpack.c.b16 %v1346, %v1345
      %v1350 = vsel %vm856, %v1347, 0
      %v1353 = vsel %vm856, %v1348, 0
      %1355 = vmatpush.bf16.msra.mxu0 0
      %1356 = vmatpush.bf16.msra.mxu0 0
      %1357 = vmatpush.bf16.msra.mxu0 0
      %1358 = vmatpush.bf16.msra.mxu0 0
      %1359 = vmatpush.bf16.msra.mxu0 0
      %1360 = vmatpush.bf16.msra.mxu0 0
      %1361 = vmatpush.bf16.msra.mxu0 %v1306
      %1362 = vmatpush.bf16.msra.mxu0 %v1298
      %1363 = vmatmul.bf16.gmra.mxu0 %v1350
      %v1364 = vpop.f32.mrf.mxu0
      %v1365 = vadd.f32 %v1322, %v1364
      %v1366 = vpop.f32.mrf.mxu0
      %v1367 = vadd.f32 %v1327, %v1366
      %1368 = vmatmul.bf16.gmra.mxu0 %v1353
      %v1369 = vpop.f32.mrf.mxu0
      %v1370 = vadd.f32 %v1332, %v1369
      %v1371 = vpop.f32.mrf.mxu0
      %v1372 = vadd.f32 %v1337, %v1371
      %1373 = vdwg.mxu0
      %1374 = vmatpush.bf16.msra.mxu0 0
      %1375 = vmatpush.bf16.msra.mxu0 0
      %1376 = vmatpush.bf16.msra.mxu0 0
      %1377 = vmatpush.bf16.msra.mxu0 0
      %1378 = vmatpush.bf16.msra.mxu0 0
      %1379 = vmatpush.bf16.msra.mxu0 0
      %1380 = vmatpush.bf16.msra.mxu0 %v1307
      %1381 = vmatpush.bf16.msra.mxu0 %v1299
      %1382 = vmatmul.bf16.gmra.mxu0 %v1350
      %v1383 = vpop.f32.mrf.mxu0
      %v1384 = vadd.f32 %v1322, %v1383
      %v1385 = vpop.f32.mrf.mxu0
      %v1386 = vadd.f32 %v1327, %v1385
      %1387 = vmatmul.bf16.gmra.mxu0 %v1353
      %v1388 = vpop.f32.mrf.mxu0
      %v1389 = vadd.f32 %v1332, %v1388
      %v1390 = vpop.f32.mrf.mxu0
      %v1391 = vadd.f32 %v1337, %v1390
      %1392 = vdwg.mxu0
      %1393 = vmatpush.bf16.msra.mxu0 0
      %1394 = vmatpush.bf16.msra.mxu0 0
      %1395 = vmatpush.bf16.msra.mxu0 0
      %1396 = vmatpush.bf16.msra.mxu0 0
      %1397 = vmatpush.bf16.msra.mxu0 0
      %1398 = vmatpush.bf16.msra.mxu0 0
      %1399 = vmatpush.bf16.msra.mxu0 %v1308
      %1400 = vmatpush.bf16.msra.mxu0 %v1300
      %1401 = vmatmul.bf16.gmra.mxu0 %v1350
      %v1402 = vpop.f32.mrf.mxu0
      %v1403 = vadd.f32 %v1322, %v1402
      %v1404 = vpop.f32.mrf.mxu0
      %v1405 = vadd.f32 %v1327, %v1404
      %1406 = vmatmul.bf16.gmra.mxu0 %v1353
      %v1407 = vpop.f32.mrf.mxu0
      %v1408 = vadd.f32 %v1332, %v1407
      %v1409 = vpop.f32.mrf.mxu0
      %v1410 = vadd.f32 %v1337, %v1409
      %1411 = vdwg.mxu0
      %1412 = vmatpush.bf16.msra.mxu0 0
      %1413 = vmatpush.bf16.msra.mxu0 0
      %1414 = vmatpush.bf16.msra.mxu0 0
      %1415 = vmatpush.bf16.msra.mxu0 0
      %1416 = vmatpush.bf16.msra.mxu0 0
      %1417 = vmatpush.bf16.msra.mxu0 0
      %1418 = vmatpush.bf16.msra.mxu0 %v1309
      %1419 = vmatpush.bf16.msra.mxu0 %v1301
      %1420 = vmatmul.bf16.gmra.mxu0 %v1350
      %v1421 = vpop.f32.mrf.mxu0
      %v1422 = vadd.f32 %v1322, %v1421
      %v1423 = vpop.f32.mrf.mxu0
      %v1424 = vadd.f32 %v1327, %v1423
      %1425 = vmatmul.bf16.gmra.mxu0 %v1353
      %v1426 = vpop.f32.mrf.mxu0
      %v1427 = vadd.f32 %v1332, %v1426
      %v1428 = vpop.f32.mrf.mxu0
      %v1429 = vadd.f32 %v1337, %v1428
      %1430 = vdwg.mxu0
      %1431 = vmatpush.bf16.msra.mxu0 0
      %1432 = vmatpush.bf16.msra.mxu0 0
      %1433 = vmatpush.bf16.msra.mxu0 0
      %1434 = vmatpush.bf16.msra.mxu0 0
      %1435 = vmatpush.bf16.msra.mxu0 0
      %1436 = vmatpush.bf16.msra.mxu0 0
      %1437 = vmatpush.bf16.msra.mxu0 %v1310
      %1438 = vmatpush.bf16.msra.mxu0 %v1302
      %1439 = vmatmul.bf16.gmra.mxu0 %v1350
      %v1440 = vpop.f32.mrf.mxu0
      %v1441 = vadd.f32 %v1322, %v1440
      %v1442 = vpop.f32.mrf.mxu0
      %v1443 = vadd.f32 %v1327, %v1442
      %1444 = vmatmul.bf16.gmra.mxu0 %v1353
      %v1445 = vpop.f32.mrf.mxu0
      %v1446 = vadd.f32 %v1332, %v1445
      %v1447 = vpop.f32.mrf.mxu0
      %v1448 = vadd.f32 %v1337, %v1447
      %1449 = vdwg.mxu0
      %1450 = vmatpush.bf16.msra.mxu0 0
      %1451 = vmatpush.bf16.msra.mxu0 0
      %1452 = vmatpush.bf16.msra.mxu0 0
      %1453 = vmatpush.bf16.msra.mxu0 0
      %1454 = vmatpush.bf16.msra.mxu0 0
      %1455 = vmatpush.bf16.msra.mxu0 0
      %1456 = vmatpush.bf16.msra.mxu0 %v1311
      %1457 = vmatpush.bf16.msra.mxu0 %v1303
      %1458 = vmatmul.bf16.gmra.mxu0 %v1350
      %v1459 = vpop.f32.mrf.mxu0
      %v1460 = vadd.f32 %v1322, %v1459
      %v1461 = vpop.f32.mrf.mxu0
      %v1462 = vadd.f32 %v1327, %v1461
      %1463 = vmatmul.bf16.gmra.mxu0 %v1353
      %v1464 = vpop.f32.mrf.mxu0
      %v1465 = vadd.f32 %v1332, %v1464
      %v1466 = vpop.f32.mrf.mxu0
      %v1467 = vadd.f32 %v1337, %v1466
      %1468 = vdwg.mxu0
      %1469 = vmatpush.bf16.msra.mxu0 0
      %1470 = vmatpush.bf16.msra.mxu0 0
      %1471 = vmatpush.bf16.msra.mxu0 0
      %1472 = vmatpush.bf16.msra.mxu0 0
      %1473 = vmatpush.bf16.msra.mxu0 0
      %1474 = vmatpush.bf16.msra.mxu0 0
      %1475 = vmatpush.bf16.msra.mxu0 %v1312
      %1476 = vmatpush.bf16.msra.mxu0 %v1304
      %1477 = vmatmul.bf16.gmra.mxu0 %v1350
      %v1478 = vpop.f32.mrf.mxu0
      %v1479 = vadd.f32 %v1322, %v1478
      %v1480 = vpop.f32.mrf.mxu0
      %v1481 = vadd.f32 %v1327, %v1480
      %1482 = vmatmul.bf16.gmra.mxu0 %v1353
      %v1483 = vpop.f32.mrf.mxu0
      %v1484 = vadd.f32 %v1332, %v1483
      %v1485 = vpop.f32.mrf.mxu0
      %v1486 = vadd.f32 %v1337, %v1485
      %1487 = vdwg.mxu0
      %1488 = vmatpush.bf16.msra.mxu0 0
      %1489 = vmatpush.bf16.msra.mxu0 0
      %1490 = vmatpush.bf16.msra.mxu0 0
      %1491 = vmatpush.bf16.msra.mxu0 0
      %1492 = vmatpush.bf16.msra.mxu0 0
      %1493 = vmatpush.bf16.msra.mxu0 0
      %1494 = vmatpush.bf16.msra.mxu0 %v1313
      %1495 = vmatpush.bf16.msra.mxu0 %v1305
      %1496 = vmatmul.bf16.gmra.mxu0 %v1350
      %v1497 = vpop.f32.mrf.mxu0
      %v1498 = vadd.f32 %v1322, %v1497
      %v1499 = vpop.f32.mrf.mxu0
      %v1500 = vadd.f32 %v1327, %v1499
      %1501 = vmatmul.bf16.gmra.mxu0 %v1353
      %v1502 = vpop.f32.mrf.mxu0
      %v1503 = vadd.f32 %v1332, %v1502
      %v1504 = vpop.f32.mrf.mxu0
      %v1505 = vadd.f32 %v1337, %v1504
      %1506 = vdwg.mxu0
      %v1507 = vmax.f32 %v1365, 0.0
      %v1508 = vmax.f32 %v1384, 0.0
      %v1509 = vmax.f32 %v1403, 0.0
      %v1510 = vmax.f32 %v1422, 0.0
      %v1511 = vmax.f32 %v1441, 0.0
      %v1512 = vmax.f32 %v1460, 0.0
      %v1513 = vmax.f32 %v1479, 0.0
      %v1514 = vmax.f32 %v1498, 0.0
      %v1515 = vmax.f32 %v1367, 0.0
      %v1516 = vmax.f32 %v1386, 0.0
      %v1517 = vmax.f32 %v1405, 0.0
      %v1518 = vmax.f32 %v1424, 0.0
      %v1519 = vmax.f32 %v1443, 0.0
      %v1520 = vmax.f32 %v1462, 0.0
      %v1521 = vmax.f32 %v1481, 0.0
      %v1522 = vmax.f32 %v1500, 0.0
      %v1523 = vmax.f32 %v1370, 0.0
      %v1524 = vmax.f32 %v1389, 0.0
      %v1525 = vmax.f32 %v1408, 0.0
      %v1526 = vmax.f32 %v1427, 0.0
      %v1527 = vmax.f32 %v1446, 0.0
      %v1528 = vmax.f32 %v1465, 0.0
      %v1529 = vmax.f32 %v1484, 0.0
      %v1530 = vmax.f32 %v1503, 0.0
      %v1531 = vmax.f32 %v1372, 0.0
      %v1532 = vmax.f32 %v1391, 0.0
      %v1533 = vmax.f32 %v1410, 0.0
      %v1534 = vmax.f32 %v1429, 0.0
      %v1535 = vmax.f32 %v1448, 0.0
      %v1536 = vmax.f32 %v1467, 0.0
      %v1537 = vmax.f32 %v1486, 0.0
      %v1538 = vmax.f32 %v1505, 0.0
      %s1539 = scalar_lea.vmem %s2, 48
      %v1540 = vld [vmem:[%s1539] sm:$0xf]
      %v1541 = vld [vmem:[%s1539 + $0x4] sm:$0xf]
      %v1542 = vld [vmem:[%s1539 + $0x8] sm:$0xf]
      %v1543 = vld [vmem:[%s1539 + $0xc] sm:$0xf]
      %v1544 = vpack.c.bf16 %v1515, %v1507
      %v1545 = vpack.c.bf16 %v1516, %v1508
      %v1546 = vpack.c.bf16 %v1517, %v1509
      %v1547 = vpack.c.bf16 %v1518, %v1510
      %v1548 = vpack.c.bf16 %v1519, %v1511
      %v1549 = vpack.c.bf16 %v1520, %v1512
      %v1550 = vpack.c.bf16 %v1521, %v1513
      %v1551 = vpack.c.bf16 %v1522, %v1514
      %v1552 = vpack.c.bf16 %v1531, %v1523
      %v1553 = vpack.c.bf16 %v1532, %v1524
      %v1554 = vpack.c.bf16 %v1533, %v1525
      %v1555 = vpack.c.bf16 %v1534, %v1526
      %v1556 = vpack.c.bf16 %v1535, %v1527
      %v1557 = vpack.c.bf16 %v1536, %v1528
      %v1558 = vpack.c.bf16 %v1537, %v1529
      %v1559 = vpack.c.bf16 %v1538, %v1530
      %s1560 = scalar_lea.vmem %s3, 128
      %v1561 = vld [vmem:[%s1560] sm:$0xff]
      %v1562 = vld [vmem:[%s1560 + $0x8] sm:$0xff]
      %v1563 = vld [vmem:[%s1560 + $0x10] sm:$0xff]
      %v1564 = vld [vmem:[%s1560 + $0x18] sm:$0xff]
      %1566 = vset.pattern.permute.xlu0 0
      %1567 = vperm.xlu0 %1566, %v1561
      %v1568 = vpop.permute.xlu0 %1567
      %1571 = vset.pattern.permute.xlu0 0
      %1572 = vperm.xlu0 %1571, %v1562
      %v1573 = vpop.permute.xlu0 %1572
      %1576 = vset.pattern.permute.xlu0 0
      %1577 = vperm.xlu0 %1576, %v1563
      %v1578 = vpop.permute.xlu0 %1577
      %1581 = vset.pattern.permute.xlu0 0
      %1582 = vperm.xlu0 %1581, %v1564
      %v1583 = vpop.permute.xlu0 %1582
      %v1589 = vunpack.c.l.b16 %v1540
      %v1590 = vunpack.c.l.b16 %v1541
      %v1591 = vunpack.c.l.b16 %v1542
      %v1592 = vunpack.c.l.b16 %v1543
      %v1593 = vpack.c.b16 %v1590, %v1589
      %v1594 = vpack.c.b16 %v1592, %v1591
      %v1596 = vsel %vm856, %v1593, 0
      %v1599 = vsel %vm856, %v1594, 0
      %1601 = vmatpush.bf16.msra.mxu0 0
      %1602 = vmatpush.bf16.msra.mxu0 0
      %1603 = vmatpush.bf16.msra.mxu0 0
      %1604 = vmatpush.bf16.msra.mxu0 0
      %1605 = vmatpush.bf16.msra.mxu0 0
      %1606 = vmatpush.bf16.msra.mxu0 0
      %1607 = vmatpush.bf16.msra.mxu0 %v1552
      %1608 = vmatpush.bf16.msra.mxu0 %v1544
      %1609 = vmatmul.bf16.gmra.mxu0 %v1596
      %v1610 = vpop.f32.mrf.mxu0
      %v1611 = vadd.f32 %v1568, %v1610
      %v1612 = vpop.f32.mrf.mxu0
      %v1613 = vadd.f32 %v1573, %v1612
      %1614 = vmatmul.bf16.gmra.mxu0 %v1599
      %v1615 = vpop.f32.mrf.mxu0
      %v1616 = vadd.f32 %v1578, %v1615
      %v1617 = vpop.f32.mrf.mxu0
      %v1618 = vadd.f32 %v1583, %v1617
      %1619 = vdwg.mxu0
      %1620 = vmatpush.bf16.msra.mxu0 0
      %1621 = vmatpush.bf16.msra.mxu0 0
      %1622 = vmatpush.bf16.msra.mxu0 0
      %1623 = vmatpush.bf16.msra.mxu0 0
      %1624 = vmatpush.bf16.msra.mxu0 0
      %1625 = vmatpush.bf16.msra.mxu0 0
      %1626 = vmatpush.bf16.msra.mxu0 %v1553
      %1627 = vmatpush.bf16.msra.mxu0 %v1545
      %1628 = vmatmul.bf16.gmra.mxu0 %v1596
      %v1629 = vpop.f32.mrf.mxu0
      %v1630 = vadd.f32 %v1568, %v1629
      %v1631 = vpop.f32.mrf.mxu0
      %v1632 = vadd.f32 %v1573, %v1631
      %1633 = vmatmul.bf16.gmra.mxu0 %v1599
      %v1634 = vpop.f32.mrf.mxu0
      %v1635 = vadd.f32 %v1578, %v1634
      %v1636 = vpop.f32.mrf.mxu0
      %v1637 = vadd.f32 %v1583, %v1636
      %1638 = vdwg.mxu0
      %1639 = vmatpush.bf16.msra.mxu0 0
      %1640 = vmatpush.bf16.msra.mxu0 0
      %1641 = vmatpush.bf16.msra.mxu0 0
      %1642 = vmatpush.bf16.msra.mxu0 0
      %1643 = vmatpush.bf16.msra.mxu0 0
      %1644 = vmatpush.bf16.msra.mxu0 0
      %1645 = vmatpush.bf16.msra.mxu0 %v1554
      %1646 = vmatpush.bf16.msra.mxu0 %v1546
      %1647 = vmatmul.bf16.gmra.mxu0 %v1596
      %v1648 = vpop.f32.mrf.mxu0
      %v1649 = vadd.f32 %v1568, %v1648
      %v1650 = vpop.f32.mrf.mxu0
      %v1651 = vadd.f32 %v1573, %v1650
      %1652 = vmatmul.bf16.gmra.mxu0 %v1599
      %v1653 = vpop.f32.mrf.mxu0
      %v1654 = vadd.f32 %v1578, %v1653
      %v1655 = vpop.f32.mrf.mxu0
      %v1656 = vadd.f32 %v1583, %v1655
      %1657 = vdwg.mxu0
      %1658 = vmatpush.bf16.msra.mxu0 0
      %1659 = vmatpush.bf16.msra.mxu0 0
      %1660 = vmatpush.bf16.msra.mxu0 0
      %1661 = vmatpush.bf16.msra.mxu0 0
      %1662 = vmatpush.bf16.msra.mxu0 0
      %1663 = vmatpush.bf16.msra.mxu0 0
      %1664 = vmatpush.bf16.msra.mxu0 %v1555
      %1665 = vmatpush.bf16.msra.mxu0 %v1547
      %1666 = vmatmul.bf16.gmra.mxu0 %v1596
      %v1667 = vpop.f32.mrf.mxu0
      %v1668 = vadd.f32 %v1568, %v1667
      %v1669 = vpop.f32.mrf.mxu0
      %v1670 = vadd.f32 %v1573, %v1669
      %1671 = vmatmul.bf16.gmra.mxu0 %v1599
      %v1672 = vpop.f32.mrf.mxu0
      %v1673 = vadd.f32 %v1578, %v1672
      %v1674 = vpop.f32.mrf.mxu0
      %v1675 = vadd.f32 %v1583, %v1674
      %1676 = vdwg.mxu0
      %1677 = vmatpush.bf16.msra.mxu0 0
      %1678 = vmatpush.bf16.msra.mxu0 0
      %1679 = vmatpush.bf16.msra.mxu0 0
      %1680 = vmatpush.bf16.msra.mxu0 0
      %1681 = vmatpush.bf16.msra.mxu0 0
      %1682 = vmatpush.bf16.msra.mxu0 0
      %1683 = vmatpush.bf16.msra.mxu0 %v1556
      %1684 = vmatpush.bf16.msra.mxu0 %v1548
      %1685 = vmatmul.bf16.gmra.mxu0 %v1596
      %v1686 = vpop.f32.mrf.mxu0
      %v1687 = vadd.f32 %v1568, %v1686
      %v1688 = vpop.f32.mrf.mxu0
      %v1689 = vadd.f32 %v1573, %v1688
      %1690 = vmatmul.bf16.gmra.mxu0 %v1599
      %v1691 = vpop.f32.mrf.mxu0
      %v1692 = vadd.f32 %v1578, %v1691
      %v1693 = vpop.f32.mrf.mxu0
      %v1694 = vadd.f32 %v1583, %v1693
      %1695 = vdwg.mxu0
      %1696 = vmatpush.bf16.msra.mxu0 0
      %1697 = vmatpush.bf16.msra.mxu0 0
      %1698 = vmatpush.bf16.msra.mxu0 0
      %1699 = vmatpush.bf16.msra.mxu0 0
      %1700 = vmatpush.bf16.msra.mxu0 0
      %1701 = vmatpush.bf16.msra.mxu0 0
      %1702 = vmatpush.bf16.msra.mxu0 %v1557
      %1703 = vmatpush.bf16.msra.mxu0 %v1549
      %1704 = vmatmul.bf16.gmra.mxu0 %v1596
      %v1705 = vpop.f32.mrf.mxu0
      %v1706 = vadd.f32 %v1568, %v1705
      %v1707 = vpop.f32.mrf.mxu0
      %v1708 = vadd.f32 %v1573, %v1707
      %1709 = vmatmul.bf16.gmra.mxu0 %v1599
      %v1710 = vpop.f32.mrf.mxu0
      %v1711 = vadd.f32 %v1578, %v1710
      %v1712 = vpop.f32.mrf.mxu0
      %v1713 = vadd.f32 %v1583, %v1712
      %1714 = vdwg.mxu0
      %1715 = vmatpush.bf16.msra.mxu0 0
      %1716 = vmatpush.bf16.msra.mxu0 0
      %1717 = vmatpush.bf16.msra.mxu0 0
      %1718 = vmatpush.bf16.msra.mxu0 0
      %1719 = vmatpush.bf16.msra.mxu0 0
      %1720 = vmatpush.bf16.msra.mxu0 0
      %1721 = vmatpush.bf16.msra.mxu0 %v1558
      %1722 = vmatpush.bf16.msra.mxu0 %v1550
      %1723 = vmatmul.bf16.gmra.mxu0 %v1596
      %v1724 = vpop.f32.mrf.mxu0
      %v1725 = vadd.f32 %v1568, %v1724
      %v1726 = vpop.f32.mrf.mxu0
      %v1727 = vadd.f32 %v1573, %v1726
      %1728 = vmatmul.bf16.gmra.mxu0 %v1599
      %v1729 = vpop.f32.mrf.mxu0
      %v1730 = vadd.f32 %v1578, %v1729
      %v1731 = vpop.f32.mrf.mxu0
      %v1732 = vadd.f32 %v1583, %v1731
      %1733 = vdwg.mxu0
      %1734 = vmatpush.bf16.msra.mxu0 0
      %1735 = vmatpush.bf16.msra.mxu0 0
      %1736 = vmatpush.bf16.msra.mxu0 0
      %1737 = vmatpush.bf16.msra.mxu0 0
      %1738 = vmatpush.bf16.msra.mxu0 0
      %1739 = vmatpush.bf16.msra.mxu0 0
      %1740 = vmatpush.bf16.msra.mxu0 %v1559
      %1741 = vmatpush.bf16.msra.mxu0 %v1551
      %1742 = vmatmul.bf16.gmra.mxu0 %v1596
      %v1743 = vpop.f32.mrf.mxu0
      %v1744 = vadd.f32 %v1568, %v1743
      %v1745 = vpop.f32.mrf.mxu0
      %v1746 = vadd.f32 %v1573, %v1745
      %1747 = vmatmul.bf16.gmra.mxu0 %v1599
      %v1748 = vpop.f32.mrf.mxu0
      %v1749 = vadd.f32 %v1578, %v1748
      %v1750 = vpop.f32.mrf.mxu0
      %v1751 = vadd.f32 %v1583, %v1750
      %1752 = vdwg.mxu0
      %v1753 = vmax.f32 %v1611, 0.0
      %v1754 = vmax.f32 %v1630, 0.0
      %v1755 = vmax.f32 %v1649, 0.0
      %v1756 = vmax.f32 %v1668, 0.0
      %v1757 = vmax.f32 %v1687, 0.0
      %v1758 = vmax.f32 %v1706, 0.0
      %v1759 = vmax.f32 %v1725, 0.0
      %v1760 = vmax.f32 %v1744, 0.0
      %v1761 = vmax.f32 %v1613, 0.0
      %v1762 = vmax.f32 %v1632, 0.0
      %v1763 = vmax.f32 %v1651, 0.0
      %v1764 = vmax.f32 %v1670, 0.0
      %v1765 = vmax.f32 %v1689, 0.0
      %v1766 = vmax.f32 %v1708, 0.0
      %v1767 = vmax.f32 %v1727, 0.0
      %v1768 = vmax.f32 %v1746, 0.0
      %v1769 = vmax.f32 %v1616, 0.0
      %v1770 = vmax.f32 %v1635, 0.0
      %v1771 = vmax.f32 %v1654, 0.0
      %v1772 = vmax.f32 %v1673, 0.0
      %v1773 = vmax.f32 %v1692, 0.0
      %v1774 = vmax.f32 %v1711, 0.0
      %v1775 = vmax.f32 %v1730, 0.0
      %v1776 = vmax.f32 %v1749, 0.0
      %v1777 = vmax.f32 %v1618, 0.0
      %v1778 = vmax.f32 %v1637, 0.0
      %v1779 = vmax.f32 %v1656, 0.0
      %v1780 = vmax.f32 %v1675, 0.0
      %v1781 = vmax.f32 %v1694, 0.0
      %v1782 = vmax.f32 %v1713, 0.0
      %v1783 = vmax.f32 %v1732, 0.0
      %v1784 = vmax.f32 %v1751, 0.0
      %s1785 = scalar_lea.vmem %s2, 64
      %v1786 = vld [vmem:[%s1785] sm:$0xf]
      %v1787 = vld [vmem:[%s1785 + $0x4] sm:$0xf]
      %v1788 = vld [vmem:[%s1785 + $0x8] sm:$0xf]
      %v1789 = vld [vmem:[%s1785 + $0xc] sm:$0xf]
      %v1790 = vpack.c.bf16 %v1761, %v1753
      %v1791 = vpack.c.bf16 %v1762, %v1754
      %v1792 = vpack.c.bf16 %v1763, %v1755
      %v1793 = vpack.c.bf16 %v1764, %v1756
      %v1794 = vpack.c.bf16 %v1765, %v1757
      %v1795 = vpack.c.bf16 %v1766, %v1758
      %v1796 = vpack.c.bf16 %v1767, %v1759
      %v1797 = vpack.c.bf16 %v1768, %v1760
      %v1798 = vpack.c.bf16 %v1777, %v1769
      %v1799 = vpack.c.bf16 %v1778, %v1770
      %v1800 = vpack.c.bf16 %v1779, %v1771
      %v1801 = vpack.c.bf16 %v1780, %v1772
      %v1802 = vpack.c.bf16 %v1781, %v1773
      %v1803 = vpack.c.bf16 %v1782, %v1774
      %v1804 = vpack.c.bf16 %v1783, %v1775
      %v1805 = vpack.c.bf16 %v1784, %v1776
      %s1806 = scalar_lea.vmem %s3, 160
      %v1807 = vld [vmem:[%s1806] sm:$0xff]
      %v1808 = vld [vmem:[%s1806 + $0x8] sm:$0xff]
      %v1809 = vld [vmem:[%s1806 + $0x10] sm:$0xff]
      %v1810 = vld [vmem:[%s1806 + $0x18] sm:$0xff]
      %1812 = vset.pattern.permute.xlu0 0
      %1813 = vperm.xlu0 %1812, %v1807
      %v1814 = vpop.permute.xlu0 %1813
      %1817 = vset.pattern.permute.xlu0 0
      %1818 = vperm.xlu0 %1817, %v1808
      %v1819 = vpop.permute.xlu0 %1818
      %1822 = vset.pattern.permute.xlu0 0
      %1823 = vperm.xlu0 %1822, %v1809
      %v1824 = vpop.permute.xlu0 %1823
      %1827 = vset.pattern.permute.xlu0 0
      %1828 = vperm.xlu0 %1827, %v1810
      %v1829 = vpop.permute.xlu0 %1828
      %v1835 = vunpack.c.l.b16 %v1786
      %v1836 = vunpack.c.l.b16 %v1787
      %v1837 = vunpack.c.l.b16 %v1788
      %v1838 = vunpack.c.l.b16 %v1789
      %v1839 = vpack.c.b16 %v1836, %v1835
      %v1840 = vpack.c.b16 %v1838, %v1837
      %v1842 = vsel %vm856, %v1839, 0
      %v1845 = vsel %vm856, %v1840, 0
      %1847 = vmatpush.bf16.msra.mxu0 0
      %1848 = vmatpush.bf16.msra.mxu0 0
      %1849 = vmatpush.bf16.msra.mxu0 0
      %1850 = vmatpush.bf16.msra.mxu0 0
      %1851 = vmatpush.bf16.msra.mxu0 0
      %1852 = vmatpush.bf16.msra.mxu0 0
      %1853 = vmatpush.bf16.msra.mxu0 %v1798
      %1854 = vmatpush.bf16.msra.mxu0 %v1790
      %1855 = vmatmul.bf16.gmra.mxu0 %v1842
      %v1856 = vpop.f32.mrf.mxu0
      %v1857 = vadd.f32 %v1814, %v1856
      %v1858 = vpop.f32.mrf.mxu0
      %v1859 = vadd.f32 %v1819, %v1858
      %1860 = vmatmul.bf16.gmra.mxu0 %v1845
      %v1861 = vpop.f32.mrf.mxu0
      %v1862 = vadd.f32 %v1824, %v1861
      %v1863 = vpop.f32.mrf.mxu0
      %v1864 = vadd.f32 %v1829, %v1863
      %1865 = vdwg.mxu0
      %1866 = vmatpush.bf16.msra.mxu0 0
      %1867 = vmatpush.bf16.msra.mxu0 0
      %1868 = vmatpush.bf16.msra.mxu0 0
      %1869 = vmatpush.bf16.msra.mxu0 0
      %1870 = vmatpush.bf16.msra.mxu0 0
      %1871 = vmatpush.bf16.msra.mxu0 0
      %1872 = vmatpush.bf16.msra.mxu0 %v1799
      %1873 = vmatpush.bf16.msra.mxu0 %v1791
      %1874 = vmatmul.bf16.gmra.mxu0 %v1842
      %v1875 = vpop.f32.mrf.mxu0
      %v1876 = vadd.f32 %v1814, %v1875
      %v1877 = vpop.f32.mrf.mxu0
      %v1878 = vadd.f32 %v1819, %v1877
      %1879 = vmatmul.bf16.gmra.mxu0 %v1845
      %v1880 = vpop.f32.mrf.mxu0
      %v1881 = vadd.f32 %v1824, %v1880
      %v1882 = vpop.f32.mrf.mxu0
      %v1883 = vadd.f32 %v1829, %v1882
      %1884 = vdwg.mxu0
      %1885 = vmatpush.bf16.msra.mxu0 0
      %1886 = vmatpush.bf16.msra.mxu0 0
      %1887 = vmatpush.bf16.msra.mxu0 0
      %1888 = vmatpush.bf16.msra.mxu0 0
      %1889 = vmatpush.bf16.msra.mxu0 0
      %1890 = vmatpush.bf16.msra.mxu0 0
      %1891 = vmatpush.bf16.msra.mxu0 %v1800
      %1892 = vmatpush.bf16.msra.mxu0 %v1792
      %1893 = vmatmul.bf16.gmra.mxu0 %v1842
      %v1894 = vpop.f32.mrf.mxu0
      %v1895 = vadd.f32 %v1814, %v1894
      %v1896 = vpop.f32.mrf.mxu0
      %v1897 = vadd.f32 %v1819, %v1896
      %1898 = vmatmul.bf16.gmra.mxu0 %v1845
      %v1899 = vpop.f32.mrf.mxu0
      %v1900 = vadd.f32 %v1824, %v1899
      %v1901 = vpop.f32.mrf.mxu0
      %v1902 = vadd.f32 %v1829, %v1901
      %1903 = vdwg.mxu0
      %1904 = vmatpush.bf16.msra.mxu0 0
      %1905 = vmatpush.bf16.msra.mxu0 0
      %1906 = vmatpush.bf16.msra.mxu0 0
      %1907 = vmatpush.bf16.msra.mxu0 0
      %1908 = vmatpush.bf16.msra.mxu0 0
      %1909 = vmatpush.bf16.msra.mxu0 0
      %1910 = vmatpush.bf16.msra.mxu0 %v1801
      %1911 = vmatpush.bf16.msra.mxu0 %v1793
      %1912 = vmatmul.bf16.gmra.mxu0 %v1842
      %v1913 = vpop.f32.mrf.mxu0
      %v1914 = vadd.f32 %v1814, %v1913
      %v1915 = vpop.f32.mrf.mxu0
      %v1916 = vadd.f32 %v1819, %v1915
      %1917 = vmatmul.bf16.gmra.mxu0 %v1845
      %v1918 = vpop.f32.mrf.mxu0
      %v1919 = vadd.f32 %v1824, %v1918
      %v1920 = vpop.f32.mrf.mxu0
      %v1921 = vadd.f32 %v1829, %v1920
      %1922 = vdwg.mxu0
      %1923 = vmatpush.bf16.msra.mxu0 0
      %1924 = vmatpush.bf16.msra.mxu0 0
      %1925 = vmatpush.bf16.msra.mxu0 0
      %1926 = vmatpush.bf16.msra.mxu0 0
      %1927 = vmatpush.bf16.msra.mxu0 0
      %1928 = vmatpush.bf16.msra.mxu0 0
      %1929 = vmatpush.bf16.msra.mxu0 %v1802
      %1930 = vmatpush.bf16.msra.mxu0 %v1794
      %1931 = vmatmul.bf16.gmra.mxu0 %v1842
      %v1932 = vpop.f32.mrf.mxu0
      %v1933 = vadd.f32 %v1814, %v1932
      %v1934 = vpop.f32.mrf.mxu0
      %v1935 = vadd.f32 %v1819, %v1934
      %1936 = vmatmul.bf16.gmra.mxu0 %v1845
      %v1937 = vpop.f32.mrf.mxu0
      %v1938 = vadd.f32 %v1824, %v1937
      %v1939 = vpop.f32.mrf.mxu0
      %v1940 = vadd.f32 %v1829, %v1939
      %1941 = vdwg.mxu0
      %1942 = vmatpush.bf16.msra.mxu0 0
      %1943 = vmatpush.bf16.msra.mxu0 0
      %1944 = vmatpush.bf16.msra.mxu0 0
      %1945 = vmatpush.bf16.msra.mxu0 0
      %1946 = vmatpush.bf16.msra.mxu0 0
      %1947 = vmatpush.bf16.msra.mxu0 0
      %1948 = vmatpush.bf16.msra.mxu0 %v1803
      %1949 = vmatpush.bf16.msra.mxu0 %v1795
      %1950 = vmatmul.bf16.gmra.mxu0 %v1842
      %v1951 = vpop.f32.mrf.mxu0
      %v1952 = vadd.f32 %v1814, %v1951
      %v1953 = vpop.f32.mrf.mxu0
      %v1954 = vadd.f32 %v1819, %v1953
      %1955 = vmatmul.bf16.gmra.mxu0 %v1845
      %v1956 = vpop.f32.mrf.mxu0
      %v1957 = vadd.f32 %v1824, %v1956
      %v1958 = vpop.f32.mrf.mxu0
      %v1959 = vadd.f32 %v1829, %v1958
      %1960 = vdwg.mxu0
      %1961 = vmatpush.bf16.msra.mxu0 0
      %1962 = vmatpush.bf16.msra.mxu0 0
      %1963 = vmatpush.bf16.msra.mxu0 0
      %1964 = vmatpush.bf16.msra.mxu0 0
      %1965 = vmatpush.bf16.msra.mxu0 0
      %1966 = vmatpush.bf16.msra.mxu0 0
      %1967 = vmatpush.bf16.msra.mxu0 %v1804
      %1968 = vmatpush.bf16.msra.mxu0 %v1796
      %1969 = vmatmul.bf16.gmra.mxu0 %v1842
      %v1970 = vpop.f32.mrf.mxu0
      %v1971 = vadd.f32 %v1814, %v1970
      %v1972 = vpop.f32.mrf.mxu0
      %v1973 = vadd.f32 %v1819, %v1972
      %1974 = vmatmul.bf16.gmra.mxu0 %v1845
      %v1975 = vpop.f32.mrf.mxu0
      %v1976 = vadd.f32 %v1824, %v1975
      %v1977 = vpop.f32.mrf.mxu0
      %v1978 = vadd.f32 %v1829, %v1977
      %1979 = vdwg.mxu0
      %1980 = vmatpush.bf16.msra.mxu0 0
      %1981 = vmatpush.bf16.msra.mxu0 0
      %1982 = vmatpush.bf16.msra.mxu0 0
      %1983 = vmatpush.bf16.msra.mxu0 0
      %1984 = vmatpush.bf16.msra.mxu0 0
      %1985 = vmatpush.bf16.msra.mxu0 0
      %1986 = vmatpush.bf16.msra.mxu0 %v1805
      %1987 = vmatpush.bf16.msra.mxu0 %v1797
      %1988 = vmatmul.bf16.gmra.mxu0 %v1842
      %v1989 = vpop.f32.mrf.mxu0
      %v1990 = vadd.f32 %v1814, %v1989
      %v1991 = vpop.f32.mrf.mxu0
      %v1992 = vadd.f32 %v1819, %v1991
      %1993 = vmatmul.bf16.gmra.mxu0 %v1845
      %v1994 = vpop.f32.mrf.mxu0
      %v1995 = vadd.f32 %v1824, %v1994
      %v1996 = vpop.f32.mrf.mxu0
      %v1997 = vadd.f32 %v1829, %v1996
      %1998 = vdwg.mxu0
      %v1999 = vadd.f32 %v1857, %v501
      %v2000 = vadd.f32 %v1876, %v530
      %v2001 = vadd.f32 %v1895, %v559
      %v2002 = vadd.f32 %v1914, %v588
      %v2003 = vadd.f32 %v1933, %v617
      %v2004 = vadd.f32 %v1952, %v646
      %v2005 = vadd.f32 %v1971, %v675
      %v2006 = vadd.f32 %v1990, %v704
      %v2007 = vadd.f32 %v1859, %v503
      %v2008 = vadd.f32 %v1878, %v532
      %v2009 = vadd.f32 %v1897, %v561
      %v2010 = vadd.f32 %v1916, %v590
      %v2011 = vadd.f32 %v1935, %v619
      %v2012 = vadd.f32 %v1954, %v648
      %v2013 = vadd.f32 %v1973, %v677
      %v2014 = vadd.f32 %v1992, %v706
      %v2015 = vadd.f32 %v1862, %v506
      %v2016 = vadd.f32 %v1881, %v535
      %v2017 = vadd.f32 %v1900, %v564
      %v2018 = vadd.f32 %v1919, %v593
      %v2019 = vadd.f32 %v1938, %v622
      %v2020 = vadd.f32 %v1957, %v651
      %v2021 = vadd.f32 %v1976, %v680
      %v2022 = vadd.f32 %v1995, %v709
      %v2023 = vadd.f32 %v1864, %v508
      %v2024 = vadd.f32 %v1883, %v537
      %v2025 = vadd.f32 %v1902, %v566
      %v2026 = vadd.f32 %v1921, %v595
      %v2027 = vadd.f32 %v1940, %v624
      %v2028 = vadd.f32 %v1959, %v653
      %v2029 = vadd.f32 %v1978, %v682
      %v2030 = vadd.f32 %v1997, %v711
      %v2031 = vmax.f32 %v1999, 0.0
      %v2032 = vmax.f32 %v2000, 0.0
      %v2033 = vmax.f32 %v2001, 0.0
      %v2034 = vmax.f32 %v2002, 0.0
      %v2035 = vmax.f32 %v2003, 0.0
      %v2036 = vmax.f32 %v2004, 0.0
      %v2037 = vmax.f32 %v2005, 0.0
      %v2038 = vmax.f32 %v2006, 0.0
      %v2039 = vmax.f32 %v2007, 0.0
      %v2040 = vmax.f32 %v2008, 0.0
      %v2041 = vmax.f32 %v2009, 0.0
      %v2042 = vmax.f32 %v2010, 0.0
      %v2043 = vmax.f32 %v2011, 0.0
      %v2044 = vmax.f32 %v2012, 0.0
      %v2045 = vmax.f32 %v2013, 0.0
      %v2046 = vmax.f32 %v2014, 0.0
      %v2047 = vmax.f32 %v2015, 0.0
      %v2048 = vmax.f32 %v2016, 0.0
      %v2049 = vmax.f32 %v2017, 0.0
      %v2050 = vmax.f32 %v2018, 0.0
      %v2051 = vmax.f32 %v2019, 0.0
      %v2052 = vmax.f32 %v2020, 0.0
      %v2053 = vmax.f32 %v2021, 0.0
      %v2054 = vmax.f32 %v2022, 0.0
      %v2055 = vmax.f32 %v2023, 0.0
      %v2056 = vmax.f32 %v2024, 0.0
      %v2057 = vmax.f32 %v2025, 0.0
      %v2058 = vmax.f32 %v2026, 0.0
      %v2059 = vmax.f32 %v2027, 0.0
      %v2060 = vmax.f32 %v2028, 0.0
      %v2061 = vmax.f32 %v2029, 0.0
      %v2062 = vmax.f32 %v2030, 0.0
      %s2063 = scalar_lea.vmem %s2, 80
      %v2064 = vld [vmem:[%s2063] sm:$0xf]
      %v2065 = vld [vmem:[%s2063 + $0x4] sm:$0xf]
      %v2066 = vld [vmem:[%s2063 + $0x8] sm:$0xf]
      %v2067 = vld [vmem:[%s2063 + $0xc] sm:$0xf]
      %v2068 = vpack.c.bf16 %v2039, %v2031
      %v2069 = vpack.c.bf16 %v2040, %v2032
      %v2070 = vpack.c.bf16 %v2041, %v2033
      %v2071 = vpack.c.bf16 %v2042, %v2034
      %v2072 = vpack.c.bf16 %v2043, %v2035
      %v2073 = vpack.c.bf16 %v2044, %v2036
      %v2074 = vpack.c.bf16 %v2045, %v2037
      %v2075 = vpack.c.bf16 %v2046, %v2038
      %v2076 = vpack.c.bf16 %v2055, %v2047
      %v2077 = vpack.c.bf16 %v2056, %v2048
      %v2078 = vpack.c.bf16 %v2057, %v2049
      %v2079 = vpack.c.bf16 %v2058, %v2050
      %v2080 = vpack.c.bf16 %v2059, %v2051
      %v2081 = vpack.c.bf16 %v2060, %v2052
      %v2082 = vpack.c.bf16 %v2061, %v2053
      %v2083 = vpack.c.bf16 %v2062, %v2054
      %s2084 = scalar_lea.vmem %s3, 192
      %v2085 = vld [vmem:[%s2084] sm:$0xff]
      %v2086 = vld [vmem:[%s2084 + $0x8] sm:$0xff]
      %v2087 = vld [vmem:[%s2084 + $0x10] sm:$0xff]
      %v2088 = vld [vmem:[%s2084 + $0x18] sm:$0xff]
      %2090 = vset.pattern.permute.xlu0 0
      %2091 = vperm.xlu0 %2090, %v2085
      %v2092 = vpop.permute.xlu0 %2091
      %2095 = vset.pattern.permute.xlu0 0
      %2096 = vperm.xlu0 %2095, %v2086
      %v2097 = vpop.permute.xlu0 %2096
      %2100 = vset.pattern.permute.xlu0 0
      %2101 = vperm.xlu0 %2100, %v2087
      %v2102 = vpop.permute.xlu0 %2101
      %2105 = vset.pattern.permute.xlu0 0
      %2106 = vperm.xlu0 %2105, %v2088
      %v2107 = vpop.permute.xlu0 %2106
      %v2113 = vunpack.c.l.b16 %v2064
      %v2114 = vunpack.c.l.b16 %v2065
      %v2115 = vunpack.c.l.b16 %v2066
      %v2116 = vunpack.c.l.b16 %v2067
      %v2117 = vpack.c.b16 %v2114, %v2113
      %v2118 = vpack.c.b16 %v2116, %v2115
      %v2120 = vsel %vm856, %v2117, 0
      %v2123 = vsel %vm856, %v2118, 0
      %2125 = vmatpush.bf16.msra.mxu0 0
      %2126 = vmatpush.bf16.msra.mxu0 0
      %2127 = vmatpush.bf16.msra.mxu0 0
      %2128 = vmatpush.bf16.msra.mxu0 0
      %2129 = vmatpush.bf16.msra.mxu0 0
      %2130 = vmatpush.bf16.msra.mxu0 0
      %2131 = vmatpush.bf16.msra.mxu0 %v2076
      %2132 = vmatpush.bf16.msra.mxu0 %v2068
      %2133 = vmatmul.bf16.gmra.mxu0 %v2120
      %v2134 = vpop.f32.mrf.mxu0
      %v2135 = vadd.f32 %v2092, %v2134
      %v2136 = vpop.f32.mrf.mxu0
      %v2137 = vadd.f32 %v2097, %v2136
      %2138 = vmatmul.bf16.gmra.mxu0 %v2123
      %v2139 = vpop.f32.mrf.mxu0
      %v2140 = vadd.f32 %v2102, %v2139
      %v2141 = vpop.f32.mrf.mxu0
      %v2142 = vadd.f32 %v2107, %v2141
      %2143 = vdwg.mxu0
      %2144 = vmatpush.bf16.msra.mxu0 0
      %2145 = vmatpush.bf16.msra.mxu0 0
      %2146 = vmatpush.bf16.msra.mxu0 0
      %2147 = vmatpush.bf16.msra.mxu0 0
      %2148 = vmatpush.bf16.msra.mxu0 0
      %2149 = vmatpush.bf16.msra.mxu0 0
      %2150 = vmatpush.bf16.msra.mxu0 %v2077
      %2151 = vmatpush.bf16.msra.mxu0 %v2069
      %2152 = vmatmul.bf16.gmra.mxu0 %v2120
      %v2153 = vpop.f32.mrf.mxu0
      %v2154 = vadd.f32 %v2092, %v2153
      %v2155 = vpop.f32.mrf.mxu0
      %v2156 = vadd.f32 %v2097, %v2155
      %2157 = vmatmul.bf16.gmra.mxu0 %v2123
      %v2158 = vpop.f32.mrf.mxu0
      %v2159 = vadd.f32 %v2102, %v2158
      %v2160 = vpop.f32.mrf.mxu0
      %v2161 = vadd.f32 %v2107, %v2160
      %2162 = vdwg.mxu0
      %2163 = vmatpush.bf16.msra.mxu0 0
      %2164 = vmatpush.bf16.msra.mxu0 0
      %2165 = vmatpush.bf16.msra.mxu0 0
      %2166 = vmatpush.bf16.msra.mxu0 0
      %2167 = vmatpush.bf16.msra.mxu0 0
      %2168 = vmatpush.bf16.msra.mxu0 0
      %2169 = vmatpush.bf16.msra.mxu0 %v2078
      %2170 = vmatpush.bf16.msra.mxu0 %v2070
      %2171 = vmatmul.bf16.gmra.mxu0 %v2120
      %v2172 = vpop.f32.mrf.mxu0
      %v2173 = vadd.f32 %v2092, %v2172
      %v2174 = vpop.f32.mrf.mxu0
      %v2175 = vadd.f32 %v2097, %v2174
      %2176 = vmatmul.bf16.gmra.mxu0 %v2123
      %v2177 = vpop.f32.mrf.mxu0
      %v2178 = vadd.f32 %v2102, %v2177
      %v2179 = vpop.f32.mrf.mxu0
      %v2180 = vadd.f32 %v2107, %v2179
      %2181 = vdwg.mxu0
      %2182 = vmatpush.bf16.msra.mxu0 0
      %2183 = vmatpush.bf16.msra.mxu0 0
      %2184 = vmatpush.bf16.msra.mxu0 0
      %2185 = vmatpush.bf16.msra.mxu0 0
      %2186 = vmatpush.bf16.msra.mxu0 0
      %2187 = vmatpush.bf16.msra.mxu0 0
      %2188 = vmatpush.bf16.msra.mxu0 %v2079
      %2189 = vmatpush.bf16.msra.mxu0 %v2071
      %2190 = vmatmul.bf16.gmra.mxu0 %v2120
      %v2191 = vpop.f32.mrf.mxu0
      %v2192 = vadd.f32 %v2092, %v2191
      %v2193 = vpop.f32.mrf.mxu0
      %v2194 = vadd.f32 %v2097, %v2193
      %2195 = vmatmul.bf16.gmra.mxu0 %v2123
      %v2196 = vpop.f32.mrf.mxu0
      %v2197 = vadd.f32 %v2102, %v2196
      %v2198 = vpop.f32.mrf.mxu0
      %v2199 = vadd.f32 %v2107, %v2198
      %2200 = vdwg.mxu0
      %2201 = vmatpush.bf16.msra.mxu0 0
      %2202 = vmatpush.bf16.msra.mxu0 0
      %2203 = vmatpush.bf16.msra.mxu0 0
      %2204 = vmatpush.bf16.msra.mxu0 0
      %2205 = vmatpush.bf16.msra.mxu0 0
      %2206 = vmatpush.bf16.msra.mxu0 0
      %2207 = vmatpush.bf16.msra.mxu0 %v2080
      %2208 = vmatpush.bf16.msra.mxu0 %v2072
      %2209 = vmatmul.bf16.gmra.mxu0 %v2120
      %v2210 = vpop.f32.mrf.mxu0
      %v2211 = vadd.f32 %v2092, %v2210
      %v2212 = vpop.f32.mrf.mxu0
      %v2213 = vadd.f32 %v2097, %v2212
      %2214 = vmatmul.bf16.gmra.mxu0 %v2123
      %v2215 = vpop.f32.mrf.mxu0
      %v2216 = vadd.f32 %v2102, %v2215
      %v2217 = vpop.f32.mrf.mxu0
      %v2218 = vadd.f32 %v2107, %v2217
      %2219 = vdwg.mxu0
      %2220 = vmatpush.bf16.msra.mxu0 0
      %2221 = vmatpush.bf16.msra.mxu0 0
      %2222 = vmatpush.bf16.msra.mxu0 0
      %2223 = vmatpush.bf16.msra.mxu0 0
      %2224 = vmatpush.bf16.msra.mxu0 0
      %2225 = vmatpush.bf16.msra.mxu0 0
      %2226 = vmatpush.bf16.msra.mxu0 %v2081
      %2227 = vmatpush.bf16.msra.mxu0 %v2073
      %2228 = vmatmul.bf16.gmra.mxu0 %v2120
      %v2229 = vpop.f32.mrf.mxu0
      %v2230 = vadd.f32 %v2092, %v2229
      %v2231 = vpop.f32.mrf.mxu0
      %v2232 = vadd.f32 %v2097, %v2231
      %2233 = vmatmul.bf16.gmra.mxu0 %v2123
      %v2234 = vpop.f32.mrf.mxu0
      %v2235 = vadd.f32 %v2102, %v2234
      %v2236 = vpop.f32.mrf.mxu0
      %v2237 = vadd.f32 %v2107, %v2236
      %2238 = vdwg.mxu0
      %2239 = vmatpush.bf16.msra.mxu0 0
      %2240 = vmatpush.bf16.msra.mxu0 0
      %2241 = vmatpush.bf16.msra.mxu0 0
      %2242 = vmatpush.bf16.msra.mxu0 0
      %2243 = vmatpush.bf16.msra.mxu0 0
      %2244 = vmatpush.bf16.msra.mxu0 0
      %2245 = vmatpush.bf16.msra.mxu0 %v2082
      %2246 = vmatpush.bf16.msra.mxu0 %v2074
      %2247 = vmatmul.bf16.gmra.mxu0 %v2120
      %v2248 = vpop.f32.mrf.mxu0
      %v2249 = vadd.f32 %v2092, %v2248
      %v2250 = vpop.f32.mrf.mxu0
      %v2251 = vadd.f32 %v2097, %v2250
      %2252 = vmatmul.bf16.gmra.mxu0 %v2123
      %v2253 = vpop.f32.mrf.mxu0
      %v2254 = vadd.f32 %v2102, %v2253
      %v2255 = vpop.f32.mrf.mxu0
      %v2256 = vadd.f32 %v2107, %v2255
      %2257 = vdwg.mxu0
      %2258 = vmatpush.bf16.msra.mxu0 0
      %2259 = vmatpush.bf16.msra.mxu0 0
      %2260 = vmatpush.bf16.msra.mxu0 0
      %2261 = vmatpush.bf16.msra.mxu0 0
      %2262 = vmatpush.bf16.msra.mxu0 0
      %2263 = vmatpush.bf16.msra.mxu0 0
      %2264 = vmatpush.bf16.msra.mxu0 %v2083
      %2265 = vmatpush.bf16.msra.mxu0 %v2075
      %2266 = vmatmul.bf16.gmra.mxu0 %v2120
      %v2267 = vpop.f32.mrf.mxu0
      %v2268 = vadd.f32 %v2092, %v2267
      %v2269 = vpop.f32.mrf.mxu0
      %v2270 = vadd.f32 %v2097, %v2269
      %2271 = vmatmul.bf16.gmra.mxu0 %v2123
      %v2272 = vpop.f32.mrf.mxu0
      %v2273 = vadd.f32 %v2102, %v2272
      %v2274 = vpop.f32.mrf.mxu0
      %v2275 = vadd.f32 %v2107, %v2274
      %2276 = vdwg.mxu0
      %v2277 = vmax.f32 %v2135, 0.0
      %v2278 = vmax.f32 %v2154, 0.0
      %v2279 = vmax.f32 %v2173, 0.0
      %v2280 = vmax.f32 %v2192, 0.0
      %v2281 = vmax.f32 %v2211, 0.0
      %v2282 = vmax.f32 %v2230, 0.0
      %v2283 = vmax.f32 %v2249, 0.0
      %v2284 = vmax.f32 %v2268, 0.0
      %v2285 = vmax.f32 %v2137, 0.0
      %v2286 = vmax.f32 %v2156, 0.0
      %v2287 = vmax.f32 %v2175, 0.0
      %v2288 = vmax.f32 %v2194, 0.0
      %v2289 = vmax.f32 %v2213, 0.0
      %v2290 = vmax.f32 %v2232, 0.0
      %v2291 = vmax.f32 %v2251, 0.0
      %v2292 = vmax.f32 %v2270, 0.0
      %v2293 = vmax.f32 %v2140, 0.0
      %v2294 = vmax.f32 %v2159, 0.0
      %v2295 = vmax.f32 %v2178, 0.0
      %v2296 = vmax.f32 %v2197, 0.0
      %v2297 = vmax.f32 %v2216, 0.0
      %v2298 = vmax.f32 %v2235, 0.0
      %v2299 = vmax.f32 %v2254, 0.0
      %v2300 = vmax.f32 %v2273, 0.0
      %v2301 = vmax.f32 %v2142, 0.0
      %v2302 = vmax.f32 %v2161, 0.0
      %v2303 = vmax.f32 %v2180, 0.0
      %v2304 = vmax.f32 %v2199, 0.0
      %v2305 = vmax.f32 %v2218, 0.0
      %v2306 = vmax.f32 %v2237, 0.0
      %v2307 = vmax.f32 %v2256, 0.0
      %v2308 = vmax.f32 %v2275, 0.0
      %s2309 = scalar_lea.vmem %s2, 96
      %v2310 = vld [vmem:[%s2309] sm:$0xf]
      %v2311 = vld [vmem:[%s2309 + $0x4] sm:$0xf]
      %v2312 = vld [vmem:[%s2309 + $0x8] sm:$0xf]
      %v2313 = vld [vmem:[%s2309 + $0xc] sm:$0xf]
      %v2314 = vpack.c.bf16 %v2285, %v2277
      %v2315 = vpack.c.bf16 %v2286, %v2278
      %v2316 = vpack.c.bf16 %v2287, %v2279
      %v2317 = vpack.c.bf16 %v2288, %v2280
      %v2318 = vpack.c.bf16 %v2289, %v2281
      %v2319 = vpack.c.bf16 %v2290, %v2282
      %v2320 = vpack.c.bf16 %v2291, %v2283
      %v2321 = vpack.c.bf16 %v2292, %v2284
      %v2322 = vpack.c.bf16 %v2301, %v2293
      %v2323 = vpack.c.bf16 %v2302, %v2294
      %v2324 = vpack.c.bf16 %v2303, %v2295
      %v2325 = vpack.c.bf16 %v2304, %v2296
      %v2326 = vpack.c.bf16 %v2305, %v2297
      %v2327 = vpack.c.bf16 %v2306, %v2298
      %v2328 = vpack.c.bf16 %v2307, %v2299
      %v2329 = vpack.c.bf16 %v2308, %v2300
      %s2330 = scalar_lea.vmem %s3, 224
      %v2331 = vld [vmem:[%s2330] sm:$0xff]
      %v2332 = vld [vmem:[%s2330 + $0x8] sm:$0xff]
      %v2333 = vld [vmem:[%s2330 + $0x10] sm:$0xff]
      %v2334 = vld [vmem:[%s2330 + $0x18] sm:$0xff]
      %2336 = vset.pattern.permute.xlu0 0
      %2337 = vperm.xlu0 %2336, %v2331
      %v2338 = vpop.permute.xlu0 %2337
      %2341 = vset.pattern.permute.xlu0 0
      %2342 = vperm.xlu0 %2341, %v2332
      %v2343 = vpop.permute.xlu0 %2342
      %2346 = vset.pattern.permute.xlu0 0
      %2347 = vperm.xlu0 %2346, %v2333
      %v2348 = vpop.permute.xlu0 %2347
      %2351 = vset.pattern.permute.xlu0 0
      %2352 = vperm.xlu0 %2351, %v2334
      %v2353 = vpop.permute.xlu0 %2352
      %v2359 = vunpack.c.l.b16 %v2310
      %v2360 = vunpack.c.l.b16 %v2311
      %v2361 = vunpack.c.l.b16 %v2312
      %v2362 = vunpack.c.l.b16 %v2313
      %v2363 = vpack.c.b16 %v2360, %v2359
      %v2364 = vpack.c.b16 %v2362, %v2361
      %v2366 = vsel %vm856, %v2363, 0
      %v2369 = vsel %vm856, %v2364, 0
      %2371 = vmatpush.bf16.msra.mxu0 0
      %2372 = vmatpush.bf16.msra.mxu0 0
      %2373 = vmatpush.bf16.msra.mxu0 0
      %2374 = vmatpush.bf16.msra.mxu0 0
      %2375 = vmatpush.bf16.msra.mxu0 0
      %2376 = vmatpush.bf16.msra.mxu0 0
      %2377 = vmatpush.bf16.msra.mxu0 %v2322
      %2378 = vmatpush.bf16.msra.mxu0 %v2314
      %2379 = vmatmul.bf16.gmra.mxu0 %v2366
      %v2380 = vpop.f32.mrf.mxu0
      %v2381 = vadd.f32 %v2338, %v2380
      %v2382 = vpop.f32.mrf.mxu0
      %v2383 = vadd.f32 %v2343, %v2382
      %2384 = vmatmul.bf16.gmra.mxu0 %v2369
      %v2385 = vpop.f32.mrf.mxu0
      %v2386 = vadd.f32 %v2348, %v2385
      %v2387 = vpop.f32.mrf.mxu0
      %v2388 = vadd.f32 %v2353, %v2387
      %2389 = vdwg.mxu0
      %2390 = vmatpush.bf16.msra.mxu0 0
      %2391 = vmatpush.bf16.msra.mxu0 0
      %2392 = vmatpush.bf16.msra.mxu0 0
      %2393 = vmatpush.bf16.msra.mxu0 0
      %2394 = vmatpush.bf16.msra.mxu0 0
      %2395 = vmatpush.bf16.msra.mxu0 0
      %2396 = vmatpush.bf16.msra.mxu0 %v2323
      %2397 = vmatpush.bf16.msra.mxu0 %v2315
      %2398 = vmatmul.bf16.gmra.mxu0 %v2366
      %v2399 = vpop.f32.mrf.mxu0
      %v2400 = vadd.f32 %v2338, %v2399
      %v2401 = vpop.f32.mrf.mxu0
      %v2402 = vadd.f32 %v2343, %v2401
      %2403 = vmatmul.bf16.gmra.mxu0 %v2369
      %v2404 = vpop.f32.mrf.mxu0
      %v2405 = vadd.f32 %v2348, %v2404
      %v2406 = vpop.f32.mrf.mxu0
      %v2407 = vadd.f32 %v2353, %v2406
      %2408 = vdwg.mxu0
      %2409 = vmatpush.bf16.msra.mxu0 0
      %2410 = vmatpush.bf16.msra.mxu0 0
      %2411 = vmatpush.bf16.msra.mxu0 0
      %2412 = vmatpush.bf16.msra.mxu0 0
      %2413 = vmatpush.bf16.msra.mxu0 0
      %2414 = vmatpush.bf16.msra.mxu0 0
      %2415 = vmatpush.bf16.msra.mxu0 %v2324
      %2416 = vmatpush.bf16.msra.mxu0 %v2316
      %2417 = vmatmul.bf16.gmra.mxu0 %v2366
      %v2418 = vpop.f32.mrf.mxu0
      %v2419 = vadd.f32 %v2338, %v2418
      %v2420 = vpop.f32.mrf.mxu0
      %v2421 = vadd.f32 %v2343, %v2420
      %2422 = vmatmul.bf16.gmra.mxu0 %v2369
      %v2423 = vpop.f32.mrf.mxu0
      %v2424 = vadd.f32 %v2348, %v2423
      %v2425 = vpop.f32.mrf.mxu0
      %v2426 = vadd.f32 %v2353, %v2425
      %2427 = vdwg.mxu0
      %2428 = vmatpush.bf16.msra.mxu0 0
      %2429 = vmatpush.bf16.msra.mxu0 0
      %2430 = vmatpush.bf16.msra.mxu0 0
      %2431 = vmatpush.bf16.msra.mxu0 0
      %2432 = vmatpush.bf16.msra.mxu0 0
      %2433 = vmatpush.bf16.msra.mxu0 0
      %2434 = vmatpush.bf16.msra.mxu0 %v2325
      %2435 = vmatpush.bf16.msra.mxu0 %v2317
      %2436 = vmatmul.bf16.gmra.mxu0 %v2366
      %v2437 = vpop.f32.mrf.mxu0
      %v2438 = vadd.f32 %v2338, %v2437
      %v2439 = vpop.f32.mrf.mxu0
      %v2440 = vadd.f32 %v2343, %v2439
      %2441 = vmatmul.bf16.gmra.mxu0 %v2369
      %v2442 = vpop.f32.mrf.mxu0
      %v2443 = vadd.f32 %v2348, %v2442
      %v2444 = vpop.f32.mrf.mxu0
      %v2445 = vadd.f32 %v2353, %v2444
      %2446 = vdwg.mxu0
      %2447 = vmatpush.bf16.msra.mxu0 0
      %2448 = vmatpush.bf16.msra.mxu0 0
      %2449 = vmatpush.bf16.msra.mxu0 0
      %2450 = vmatpush.bf16.msra.mxu0 0
      %2451 = vmatpush.bf16.msra.mxu0 0
      %2452 = vmatpush.bf16.msra.mxu0 0
      %2453 = vmatpush.bf16.msra.mxu0 %v2326
      %2454 = vmatpush.bf16.msra.mxu0 %v2318
      %2455 = vmatmul.bf16.gmra.mxu0 %v2366
      %v2456 = vpop.f32.mrf.mxu0
      %v2457 = vadd.f32 %v2338, %v2456
      %v2458 = vpop.f32.mrf.mxu0
      %v2459 = vadd.f32 %v2343, %v2458
      %2460 = vmatmul.bf16.gmra.mxu0 %v2369
      %v2461 = vpop.f32.mrf.mxu0
      %v2462 = vadd.f32 %v2348, %v2461
      %v2463 = vpop.f32.mrf.mxu0
      %v2464 = vadd.f32 %v2353, %v2463
      %2465 = vdwg.mxu0
      %2466 = vmatpush.bf16.msra.mxu0 0
      %2467 = vmatpush.bf16.msra.mxu0 0
      %2468 = vmatpush.bf16.msra.mxu0 0
      %2469 = vmatpush.bf16.msra.mxu0 0
      %2470 = vmatpush.bf16.msra.mxu0 0
      %2471 = vmatpush.bf16.msra.mxu0 0
      %2472 = vmatpush.bf16.msra.mxu0 %v2327
      %2473 = vmatpush.bf16.msra.mxu0 %v2319
      %2474 = vmatmul.bf16.gmra.mxu0 %v2366
      %v2475 = vpop.f32.mrf.mxu0
      %v2476 = vadd.f32 %v2338, %v2475
      %v2477 = vpop.f32.mrf.mxu0
      %v2478 = vadd.f32 %v2343, %v2477
      %2479 = vmatmul.bf16.gmra.mxu0 %v2369
      %v2480 = vpop.f32.mrf.mxu0
      %v2481 = vadd.f32 %v2348, %v2480
      %v2482 = vpop.f32.mrf.mxu0
      %v2483 = vadd.f32 %v2353, %v2482
      %2484 = vdwg.mxu0
      %2485 = vmatpush.bf16.msra.mxu0 0
      %2486 = vmatpush.bf16.msra.mxu0 0
      %2487 = vmatpush.bf16.msra.mxu0 0
      %2488 = vmatpush.bf16.msra.mxu0 0
      %2489 = vmatpush.bf16.msra.mxu0 0
      %2490 = vmatpush.bf16.msra.mxu0 0
      %2491 = vmatpush.bf16.msra.mxu0 %v2328
      %2492 = vmatpush.bf16.msra.mxu0 %v2320
      %2493 = vmatmul.bf16.gmra.mxu0 %v2366
      %v2494 = vpop.f32.mrf.mxu0
      %v2495 = vadd.f32 %v2338, %v2494
      %v2496 = vpop.f32.mrf.mxu0
      %v2497 = vadd.f32 %v2343, %v2496
      %2498 = vmatmul.bf16.gmra.mxu0 %v2369
      %v2499 = vpop.f32.mrf.mxu0
      %v2500 = vadd.f32 %v2348, %v2499
      %v2501 = vpop.f32.mrf.mxu0
      %v2502 = vadd.f32 %v2353, %v2501
      %2503 = vdwg.mxu0
      %2504 = vmatpush.bf16.msra.mxu0 0
      %2505 = vmatpush.bf16.msra.mxu0 0
      %2506 = vmatpush.bf16.msra.mxu0 0
      %2507 = vmatpush.bf16.msra.mxu0 0
      %2508 = vmatpush.bf16.msra.mxu0 0
      %2509 = vmatpush.bf16.msra.mxu0 0
      %2510 = vmatpush.bf16.msra.mxu0 %v2329
      %2511 = vmatpush.bf16.msra.mxu0 %v2321
      %2512 = vmatmul.bf16.gmra.mxu0 %v2366
      %v2513 = vpop.f32.mrf.mxu0
      %v2514 = vadd.f32 %v2338, %v2513
      %v2515 = vpop.f32.mrf.mxu0
      %v2516 = vadd.f32 %v2343, %v2515
      %2517 = vmatmul.bf16.gmra.mxu0 %v2369
      %v2518 = vpop.f32.mrf.mxu0
      %v2519 = vadd.f32 %v2348, %v2518
      %v2520 = vpop.f32.mrf.mxu0
      %v2521 = vadd.f32 %v2353, %v2520
      %2522 = vdwg.mxu0
      %v2523 = vmax.f32 %v2381, 0.0
      %v2524 = vmax.f32 %v2400, 0.0
      %v2525 = vmax.f32 %v2419, 0.0
      %v2526 = vmax.f32 %v2438, 0.0
      %v2527 = vmax.f32 %v2457, 0.0
      %v2528 = vmax.f32 %v2476, 0.0
      %v2529 = vmax.f32 %v2495, 0.0
      %v2530 = vmax.f32 %v2514, 0.0
      %v2531 = vmax.f32 %v2383, 0.0
      %v2532 = vmax.f32 %v2402, 0.0
      %v2533 = vmax.f32 %v2421, 0.0
      %v2534 = vmax.f32 %v2440, 0.0
      %v2535 = vmax.f32 %v2459, 0.0
      %v2536 = vmax.f32 %v2478, 0.0
      %v2537 = vmax.f32 %v2497, 0.0
      %v2538 = vmax.f32 %v2516, 0.0
      %v2539 = vmax.f32 %v2386, 0.0
      %v2540 = vmax.f32 %v2405, 0.0
      %v2541 = vmax.f32 %v2424, 0.0
      %v2542 = vmax.f32 %v2443, 0.0
      %v2543 = vmax.f32 %v2462, 0.0
      %v2544 = vmax.f32 %v2481, 0.0
      %v2545 = vmax.f32 %v2500, 0.0
      %v2546 = vmax.f32 %v2519, 0.0
      %v2547 = vmax.f32 %v2388, 0.0
      %v2548 = vmax.f32 %v2407, 0.0
      %v2549 = vmax.f32 %v2426, 0.0
      %v2550 = vmax.f32 %v2445, 0.0
      %v2551 = vmax.f32 %v2464, 0.0
      %v2552 = vmax.f32 %v2483, 0.0
      %v2553 = vmax.f32 %v2502, 0.0
      %v2554 = vmax.f32 %v2521, 0.0
      %v2555 = vld [vmem:[%s4] sm:$0xf]
      %v2556 = vld [vmem:[%s4 + $0x4] sm:$0xf]
      %v2557 = vld [vmem:[%s4 + $0x8] sm:$0xf]
      %v2558 = vld [vmem:[%s4 + $0xc] sm:$0xf]
      %v2559 = vld [vmem:[%s4 + $0x10] sm:$0x1]
      %v2560 = vpack.c.bf16 %v2531, %v2523
      %v2561 = vpack.c.bf16 %v2532, %v2524
      %v2562 = vpack.c.bf16 %v2533, %v2525
      %v2563 = vpack.c.bf16 %v2534, %v2526
      %v2564 = vpack.c.bf16 %v2535, %v2527
      %v2565 = vpack.c.bf16 %v2536, %v2528
      %v2566 = vpack.c.bf16 %v2537, %v2529
      %v2567 = vpack.c.bf16 %v2538, %v2530
      %v2568 = vpack.c.bf16 %v2547, %v2539
      %v2569 = vpack.c.bf16 %v2548, %v2540
      %v2570 = vpack.c.bf16 %v2549, %v2541
      %v2571 = vpack.c.bf16 %v2550, %v2542
      %v2572 = vpack.c.bf16 %v2551, %v2543
      %v2573 = vpack.c.bf16 %v2552, %v2544
      %v2574 = vpack.c.bf16 %v2553, %v2545
      %v2575 = vpack.c.bf16 %v2554, %v2546
      %v2576 = vld [vmem:[%s5] sm:$0xff]
      %v2577 = vld [vmem:[%s5 + $0x8] sm:$0xff]
      %v2578 = vld [vmem:[%s5 + $0x10] sm:$0xff]
      %v2579 = vld [vmem:[%s5 + $0x18] sm:$0xff]
      %v2580 = vld [vmem:[%s5 + $0x20] sm:$0x1]
      %2582 = vset.pattern.permute.xlu0 0
      %2583 = vperm.xlu0 %2582, %v2576
      %v2584 = vpop.permute.xlu0 %2583
      %2587 = vset.pattern.permute.xlu0 0
      %2588 = vperm.xlu0 %2587, %v2577
      %v2589 = vpop.permute.xlu0 %2588
      %2592 = vset.pattern.permute.xlu0 0
      %2593 = vperm.xlu0 %2592, %v2578
      %v2594 = vpop.permute.xlu0 %2593
      %2597 = vset.pattern.permute.xlu0 0
      %2598 = vperm.xlu0 %2597, %v2579
      %v2599 = vpop.permute.xlu0 %2598
      %2602 = vset.pattern.permute.xlu0 0
      %2603 = vperm.xlu0 %2602, %v2580
      %v2604 = vpop.permute.xlu0 %2603
      %v2611 = vunpack.c.l.b16 %v2555
      %v2612 = vunpack.c.l.b16 %v2556
      %v2613 = vunpack.c.l.b16 %v2557
      %v2614 = vunpack.c.l.b16 %v2558
      %v2615 = vunpack.c.l.b16 %v2559
      %v2616 = vpack.c.b16 %v2612, %v2611
      %v2617 = vpack.c.b16 %v2614, %v2613
      %v2618 = vpack.c.b16 %v2615, %v2615
      %v2620 = vsel %vm856, %v2616, 0
      %v2623 = vsel %vm856, %v2617, 0
      %v2626 = vsel %vm856, %v2618, 0
      %2628 = vmatpush.bf16.msra.mxu0 0
      %2629 = vmatpush.bf16.msra.mxu0 0
      %2630 = vmatpush.bf16.msra.mxu0 0
      %2631 = vmatpush.bf16.msra.mxu0 0
      %2632 = vmatpush.bf16.msra.mxu0 0
      %2633 = vmatpush.bf16.msra.mxu0 0
      %2634 = vmatpush.bf16.msra.mxu0 %v2568
      %2635 = vmatpush.bf16.msra.mxu0 %v2560
      %2636 = vmatmul.bf16.gmra.mxu0 %v2620
      %v2637 = vpop.f32.mrf.mxu0
      %v2638 = vadd.f32 %v2584, %v2637
      %v2639 = vpop.f32.mrf.mxu0
      %v2640 = vadd.f32 %v2589, %v2639
      %2641 = vmatmul.bf16.gmra.mxu0 %v2623
      %v2642 = vpop.f32.mrf.mxu0
      %v2643 = vadd.f32 %v2594, %v2642
      %v2644 = vpop.f32.mrf.mxu0
      %v2645 = vadd.f32 %v2599, %v2644
      %2646 = vmatmul.bf16.gmra.mxu0 %v2626
      %v2647 = vpop.f32.mrf.mxu0
      %v2648 = vadd.f32 %v2604, %v2647
      %v2649 = vpop.f32.mrf.mxu0
      %2650 = vdwg.mxu0
      %2651 = vmatpush.bf16.msra.mxu0 0
      %2652 = vmatpush.bf16.msra.mxu0 0
      %2653 = vmatpush.bf16.msra.mxu0 0
      %2654 = vmatpush.bf16.msra.mxu0 0
      %2655 = vmatpush.bf16.msra.mxu0 0
      %2656 = vmatpush.bf16.msra.mxu0 0
      %2657 = vmatpush.bf16.msra.mxu0 %v2569
      %2658 = vmatpush.bf16.msra.mxu0 %v2561
      %2659 = vmatmul.bf16.gmra.mxu0 %v2620
      %v2660 = vpop.f32.mrf.mxu0
      %v2661 = vadd.f32 %v2584, %v2660
      %v2662 = vpop.f32.mrf.mxu0
      %v2663 = vadd.f32 %v2589, %v2662
      %2664 = vmatmul.bf16.gmra.mxu0 %v2623
      %v2665 = vpop.f32.mrf.mxu0
      %v2666 = vadd.f32 %v2594, %v2665
      %v2667 = vpop.f32.mrf.mxu0
      %v2668 = vadd.f32 %v2599, %v2667
      %2669 = vmatmul.bf16.gmra.mxu0 %v2626
      %v2670 = vpop.f32.mrf.mxu0
      %v2671 = vadd.f32 %v2604, %v2670
      %v2672 = vpop.f32.mrf.mxu0
      %2673 = vdwg.mxu0
      %2674 = vmatpush.bf16.msra.mxu0 0
      %2675 = vmatpush.bf16.msra.mxu0 0
      %2676 = vmatpush.bf16.msra.mxu0 0
      %2677 = vmatpush.bf16.msra.mxu0 0
      %2678 = vmatpush.bf16.msra.mxu0 0
      %2679 = vmatpush.bf16.msra.mxu0 0
      %2680 = vmatpush.bf16.msra.mxu0 %v2570
      %2681 = vmatpush.bf16.msra.mxu0 %v2562
      %2682 = vmatmul.bf16.gmra.mxu0 %v2620
      %v2683 = vpop.f32.mrf.mxu0
      %v2684 = vadd.f32 %v2584, %v2683
      %v2685 = vpop.f32.mrf.mxu0
      %v2686 = vadd.f32 %v2589, %v2685
      %2687 = vmatmul.bf16.gmra.mxu0 %v2623
      %v2688 = vpop.f32.mrf.mxu0
      %v2689 = vadd.f32 %v2594, %v2688
      %v2690 = vpop.f32.mrf.mxu0
      %v2691 = vadd.f32 %v2599, %v2690
      %2692 = vmatmul.bf16.gmra.mxu0 %v2626
      %v2693 = vpop.f32.mrf.mxu0
      %v2694 = vadd.f32 %v2604, %v2693
      %v2695 = vpop.f32.mrf.mxu0
      %2696 = vdwg.mxu0
      %2697 = vmatpush.bf16.msra.mxu0 0
      %2698 = vmatpush.bf16.msra.mxu0 0
      %2699 = vmatpush.bf16.msra.mxu0 0
      %2700 = vmatpush.bf16.msra.mxu0 0
      %2701 = vmatpush.bf16.msra.mxu0 0
      %2702 = vmatpush.bf16.msra.mxu0 0
      %2703 = vmatpush.bf16.msra.mxu0 %v2571
      %2704 = vmatpush.bf16.msra.mxu0 %v2563
      %2705 = vmatmul.bf16.gmra.mxu0 %v2620
      %v2706 = vpop.f32.mrf.mxu0
      %v2707 = vadd.f32 %v2584, %v2706
      %v2708 = vpop.f32.mrf.mxu0
      %v2709 = vadd.f32 %v2589, %v2708
      %2710 = vmatmul.bf16.gmra.mxu0 %v2623
      %v2711 = vpop.f32.mrf.mxu0
      %v2712 = vadd.f32 %v2594, %v2711
      %v2713 = vpop.f32.mrf.mxu0
      %v2714 = vadd.f32 %v2599, %v2713
      %2715 = vmatmul.bf16.gmra.mxu0 %v2626
      %v2716 = vpop.f32.mrf.mxu0
      %v2717 = vadd.f32 %v2604, %v2716
      %v2718 = vpop.f32.mrf.mxu0
      %2719 = vdwg.mxu0
      %2720 = vmatpush.bf16.msra.mxu0 0
      %2721 = vmatpush.bf16.msra.mxu0 0
      %2722 = vmatpush.bf16.msra.mxu0 0
      %2723 = vmatpush.bf16.msra.mxu0 0
      %2724 = vmatpush.bf16.msra.mxu0 0
      %2725 = vmatpush.bf16.msra.mxu0 0
      %2726 = vmatpush.bf16.msra.mxu0 %v2572
      %2727 = vmatpush.bf16.msra.mxu0 %v2564
      %2728 = vmatmul.bf16.gmra.mxu0 %v2620
      %v2729 = vpop.f32.mrf.mxu0
      %v2730 = vadd.f32 %v2584, %v2729
      %v2731 = vpop.f32.mrf.mxu0
      %v2732 = vadd.f32 %v2589, %v2731
      %2733 = vmatmul.bf16.gmra.mxu0 %v2623
      %v2734 = vpop.f32.mrf.mxu0
      %v2735 = vadd.f32 %v2594, %v2734
      %v2736 = vpop.f32.mrf.mxu0
      %v2737 = vadd.f32 %v2599, %v2736
      %2738 = vmatmul.bf16.gmra.mxu0 %v2626
      %v2739 = vpop.f32.mrf.mxu0
      %v2740 = vadd.f32 %v2604, %v2739
      %v2741 = vpop.f32.mrf.mxu0
      %2742 = vdwg.mxu0
      %2743 = vmatpush.bf16.msra.mxu0 0
      %2744 = vmatpush.bf16.msra.mxu0 0
      %2745 = vmatpush.bf16.msra.mxu0 0
      %2746 = vmatpush.bf16.msra.mxu0 0
      %2747 = vmatpush.bf16.msra.mxu0 0
      %2748 = vmatpush.bf16.msra.mxu0 0
      %2749 = vmatpush.bf16.msra.mxu0 %v2573
      %2750 = vmatpush.bf16.msra.mxu0 %v2565
      %2751 = vmatmul.bf16.gmra.mxu0 %v2620
      %v2752 = vpop.f32.mrf.mxu0
      %v2753 = vadd.f32 %v2584, %v2752
      %v2754 = vpop.f32.mrf.mxu0
      %v2755 = vadd.f32 %v2589, %v2754
      %2756 = vmatmul.bf16.gmra.mxu0 %v2623
      %v2757 = vpop.f32.mrf.mxu0
      %v2758 = vadd.f32 %v2594, %v2757
      %v2759 = vpop.f32.mrf.mxu0
      %v2760 = vadd.f32 %v2599, %v2759
      %2761 = vmatmul.bf16.gmra.mxu0 %v2626
      %v2762 = vpop.f32.mrf.mxu0
      %v2763 = vadd.f32 %v2604, %v2762
      %v2764 = vpop.f32.mrf.mxu0
      %2765 = vdwg.mxu0
      %2766 = vmatpush.bf16.msra.mxu0 0
      %2767 = vmatpush.bf16.msra.mxu0 0
      %2768 = vmatpush.bf16.msra.mxu0 0
      %2769 = vmatpush.bf16.msra.mxu0 0
      %2770 = vmatpush.bf16.msra.mxu0 0
      %2771 = vmatpush.bf16.msra.mxu0 0
      %2772 = vmatpush.bf16.msra.mxu0 %v2574
      %2773 = vmatpush.bf16.msra.mxu0 %v2566
      %2774 = vmatmul.bf16.gmra.mxu0 %v2620
      %v2775 = vpop.f32.mrf.mxu0
      %v2776 = vadd.f32 %v2584, %v2775
      %v2777 = vpop.f32.mrf.mxu0
      %v2778 = vadd.f32 %v2589, %v2777
      %2779 = vmatmul.bf16.gmra.mxu0 %v2623
      %v2780 = vpop.f32.mrf.mxu0
      %v2781 = vadd.f32 %v2594, %v2780
      %v2782 = vpop.f32.mrf.mxu0
      %v2783 = vadd.f32 %v2599, %v2782
      %2784 = vmatmul.bf16.gmra.mxu0 %v2626
      %v2785 = vpop.f32.mrf.mxu0
      %v2786 = vadd.f32 %v2604, %v2785
      %v2787 = vpop.f32.mrf.mxu0
      %2788 = vdwg.mxu0
      %2789 = vmatpush.bf16.msra.mxu0 0
      %2790 = vmatpush.bf16.msra.mxu0 0
      %2791 = vmatpush.bf16.msra.mxu0 0
      %2792 = vmatpush.bf16.msra.mxu0 0
      %2793 = vmatpush.bf16.msra.mxu0 0
      %2794 = vmatpush.bf16.msra.mxu0 0
      %2795 = vmatpush.bf16.msra.mxu0 %v2575
      %2796 = vmatpush.bf16.msra.mxu0 %v2567
      %2797 = vmatmul.bf16.gmra.mxu0 %v2620
      %v2798 = vpop.f32.mrf.mxu0
      %v2799 = vadd.f32 %v2584, %v2798
      %v2800 = vpop.f32.mrf.mxu0
      %v2801 = vadd.f32 %v2589, %v2800
      %2802 = vmatmul.bf16.gmra.mxu0 %v2623
      %v2803 = vpop.f32.mrf.mxu0
      %v2804 = vadd.f32 %v2594, %v2803
      %v2805 = vpop.f32.mrf.mxu0
      %v2806 = vadd.f32 %v2599, %v2805
      %2807 = vmatmul.bf16.gmra.mxu0 %v2626
      %v2808 = vpop.f32.mrf.mxu0
      %v2809 = vadd.f32 %v2604, %v2808
      %v2810 = vpop.f32.mrf.mxu0
      %2811 = vdwg.mxu0
      %v2812 = vld [vmem:[%s6] sm:$0xf]
      %v2813 = vld [vmem:[%s6 + $0x4] sm:$0xf]
      %v2814 = vpack.c.bf16 %v2640, %v2638
      %v2815 = vpack.c.bf16 %v2663, %v2661
      %v2816 = vpack.c.bf16 %v2686, %v2684
      %v2817 = vpack.c.bf16 %v2709, %v2707
      %v2818 = vpack.c.bf16 %v2732, %v2730
      %v2819 = vpack.c.bf16 %v2755, %v2753
      %v2820 = vpack.c.bf16 %v2778, %v2776
      %v2821 = vpack.c.bf16 %v2801, %v2799
      %v2822 = vpack.c.bf16 %v2645, %v2643
      %v2823 = vpack.c.bf16 %v2668, %v2666
      %v2824 = vpack.c.bf16 %v2691, %v2689
      %v2825 = vpack.c.bf16 %v2714, %v2712
      %v2826 = vpack.c.bf16 %v2737, %v2735
      %v2827 = vpack.c.bf16 %v2760, %v2758
      %v2828 = vpack.c.bf16 %v2783, %v2781
      %v2829 = vpack.c.bf16 %v2806, %v2804
      %v2830 = vld [vmem:[%s7] sm:$0xf]
      %v2831 = vld [vmem:[%s7 + $0x4] sm:$0xf]
      %v2834 = vunpack.c.l.b16 %v2830
      %v2835 = vunpack.c.l.b16 %v2831
      %v2836 = vpack.c.b16 %v2835, %v2834
      %v2838 = vsel %vm443, %v2836, 0
      %2840 = vmatpush.bf16.msra.mxu0 0
      %2841 = vmatpush.bf16.msra.mxu0 0
      %2842 = vmatpush.bf16.msra.mxu0 0
      %2843 = vmatpush.bf16.msra.mxu0 0
      %2844 = vmatpush.bf16.msra.mxu0 0
      %2845 = vmatpush.bf16.msra.mxu0 0
      %2846 = vmatpush.bf16.msra.mxu0 0
      %2847 = vmatpush.bf16.msra.mxu0 %v458
      %2848 = vmatmul.bf16.gmra.mxu0 %v2838
      %v2849 = vpop.f32.mrf.mxu0
      %v2850 = vadd.f32 0.0, %v2849
      %v2851 = vpop.f32.mrf.mxu0
      %v2852 = vadd.f32 0.0, %v2851
      %2853 = vdwg.mxu0
      %2854 = vmatpush.bf16.msra.mxu0 0
      %2855 = vmatpush.bf16.msra.mxu0 0
      %2856 = vmatpush.bf16.msra.mxu0 0
      %2857 = vmatpush.bf16.msra.mxu0 0
      %2858 = vmatpush.bf16.msra.mxu0 0
      %2859 = vmatpush.bf16.msra.mxu0 0
      %2860 = vmatpush.bf16.msra.mxu0 0
      %2861 = vmatpush.bf16.msra.mxu0 %v461
      %2862 = vmatmul.bf16.gmra.mxu0 %v2838
      %v2863 = vpop.f32.mrf.mxu0
      %v2864 = vadd.f32 0.0, %v2863
      %v2865 = vpop.f32.mrf.mxu0
      %v2866 = vadd.f32 0.0, %v2865
      %2867 = vdwg.mxu0
      %2868 = vmatpush.bf16.msra.mxu0 0
      %2869 = vmatpush.bf16.msra.mxu0 0
      %2870 = vmatpush.bf16.msra.mxu0 0
      %2871 = vmatpush.bf16.msra.mxu0 0
      %2872 = vmatpush.bf16.msra.mxu0 0
      %2873 = vmatpush.bf16.msra.mxu0 0
      %2874 = vmatpush.bf16.msra.mxu0 0
      %2875 = vmatpush.bf16.msra.mxu0 %v464
      %2876 = vmatmul.bf16.gmra.mxu0 %v2838
      %v2877 = vpop.f32.mrf.mxu0
      %v2878 = vadd.f32 0.0, %v2877
      %v2879 = vpop.f32.mrf.mxu0
      %v2880 = vadd.f32 0.0, %v2879
      %2881 = vdwg.mxu0
      %2882 = vmatpush.bf16.msra.mxu0 0
      %2883 = vmatpush.bf16.msra.mxu0 0
      %2884 = vmatpush.bf16.msra.mxu0 0
      %2885 = vmatpush.bf16.msra.mxu0 0
      %2886 = vmatpush.bf16.msra.mxu0 0
      %2887 = vmatpush.bf16.msra.mxu0 0
      %2888 = vmatpush.bf16.msra.mxu0 0
      %2889 = vmatpush.bf16.msra.mxu0 %v467
      %2890 = vmatmul.bf16.gmra.mxu0 %v2838
      %v2891 = vpop.f32.mrf.mxu0
      %v2892 = vadd.f32 0.0, %v2891
      %v2893 = vpop.f32.mrf.mxu0
      %v2894 = vadd.f32 0.0, %v2893
      %2895 = vdwg.mxu0
      %2896 = vmatpush.bf16.msra.mxu0 0
      %2897 = vmatpush.bf16.msra.mxu0 0
      %2898 = vmatpush.bf16.msra.mxu0 0
      %2899 = vmatpush.bf16.msra.mxu0 0
      %2900 = vmatpush.bf16.msra.mxu0 0
      %2901 = vmatpush.bf16.msra.mxu0 0
      %2902 = vmatpush.bf16.msra.mxu0 0
      %2903 = vmatpush.bf16.msra.mxu0 %v470
      %2904 = vmatmul.bf16.gmra.mxu0 %v2838
      %v2905 = vpop.f32.mrf.mxu0
      %v2906 = vadd.f32 0.0, %v2905
      %v2907 = vpop.f32.mrf.mxu0
      %v2908 = vadd.f32 0.0, %v2907
      %2909 = vdwg.mxu0
      %2910 = vmatpush.bf16.msra.mxu0 0
      %2911 = vmatpush.bf16.msra.mxu0 0
      %2912 = vmatpush.bf16.msra.mxu0 0
      %2913 = vmatpush.bf16.msra.mxu0 0
      %2914 = vmatpush.bf16.msra.mxu0 0
      %2915 = vmatpush.bf16.msra.mxu0 0
      %2916 = vmatpush.bf16.msra.mxu0 0
      %2917 = vmatpush.bf16.msra.mxu0 %v473
      %2918 = vmatmul.bf16.gmra.mxu0 %v2838
      %v2919 = vpop.f32.mrf.mxu0
      %v2920 = vadd.f32 0.0, %v2919
      %v2921 = vpop.f32.mrf.mxu0
      %v2922 = vadd.f32 0.0, %v2921
      %2923 = vdwg.mxu0
      %2924 = vmatpush.bf16.msra.mxu0 0
      %2925 = vmatpush.bf16.msra.mxu0 0
      %2926 = vmatpush.bf16.msra.mxu0 0
      %2927 = vmatpush.bf16.msra.mxu0 0
      %2928 = vmatpush.bf16.msra.mxu0 0
      %2929 = vmatpush.bf16.msra.mxu0 0
      %2930 = vmatpush.bf16.msra.mxu0 0
      %2931 = vmatpush.bf16.msra.mxu0 %v476
      %2932 = vmatmul.bf16.gmra.mxu0 %v2838
      %v2933 = vpop.f32.mrf.mxu0
      %v2934 = vadd.f32 0.0, %v2933
      %v2935 = vpop.f32.mrf.mxu0
      %v2936 = vadd.f32 0.0, %v2935
      %2937 = vdwg.mxu0
      %2938 = vmatpush.bf16.msra.mxu0 0
      %2939 = vmatpush.bf16.msra.mxu0 0
      %2940 = vmatpush.bf16.msra.mxu0 0
      %2941 = vmatpush.bf16.msra.mxu0 0
      %2942 = vmatpush.bf16.msra.mxu0 0
      %2943 = vmatpush.bf16.msra.mxu0 0
      %2944 = vmatpush.bf16.msra.mxu0 0
      %2945 = vmatpush.bf16.msra.mxu0 %v479
      %2946 = vmatmul.bf16.gmra.mxu0 %v2838
      %v2947 = vpop.f32.mrf.mxu0
      %v2948 = vadd.f32 0.0, %v2947
      %v2949 = vpop.f32.mrf.mxu0
      %v2950 = vadd.f32 0.0, %v2949
      %2951 = vdwg.mxu0
      %v2954 = vunpack.c.l.b16 %v2812
      %v2955 = vunpack.c.l.b16 %v2813
      %v2956 = vpack.c.b16 %v2955, %v2954
      %v2958 = vsel %vm856, %v2956, 0
      %2960 = vmatpush.bf16.msra.mxu0 0
      %2961 = vmatpush.bf16.msra.mxu0 0
      %2962 = vmatpush.bf16.msra.mxu0 0
      %2963 = vmatpush.bf16.msra.mxu0 0
      %2964 = vmatpush.bf16.msra.mxu0 0
      %2965 = vmatpush.bf16.msra.mxu0 0
      %2966 = vmatpush.bf16.msra.mxu0 %v2822
      %2967 = vmatpush.bf16.msra.mxu0 %v2814
      %2968 = vmatmul.bf16.gmra.mxu0 %v2958
      %v2969 = vpop.f32.mrf.mxu0
      %v2970 = vadd.f32 %v2850, %v2969
      %v2971 = vpop.f32.mrf.mxu0
      %v2972 = vadd.f32 %v2852, %v2971
      %2973 = vdwg.mxu0
      %2974 = vmatpush.bf16.msra.mxu0 0
      %2975 = vmatpush.bf16.msra.mxu0 0
      %2976 = vmatpush.bf16.msra.mxu0 0
      %2977 = vmatpush.bf16.msra.mxu0 0
      %2978 = vmatpush.bf16.msra.mxu0 0
      %2979 = vmatpush.bf16.msra.mxu0 0
      %2980 = vmatpush.bf16.msra.mxu0 %v2823
      %2981 = vmatpush.bf16.msra.mxu0 %v2815
      %2982 = vmatmul.bf16.gmra.mxu0 %v2958
      %v2983 = vpop.f32.mrf.mxu0
      %v2984 = vadd.f32 %v2864, %v2983
      %v2985 = vpop.f32.mrf.mxu0
      %v2986 = vadd.f32 %v2866, %v2985
      %2987 = vdwg.mxu0
      %2988 = vmatpush.bf16.msra.mxu0 0
      %2989 = vmatpush.bf16.msra.mxu0 0
      %2990 = vmatpush.bf16.msra.mxu0 0
      %2991 = vmatpush.bf16.msra.mxu0 0
      %2992 = vmatpush.bf16.msra.mxu0 0
      %2993 = vmatpush.bf16.msra.mxu0 0
      %2994 = vmatpush.bf16.msra.mxu0 %v2824
      %2995 = vmatpush.bf16.msra.mxu0 %v2816
      %2996 = vmatmul.bf16.gmra.mxu0 %v2958
      %v2997 = vpop.f32.mrf.mxu0
      %v2998 = vadd.f32 %v2878, %v2997
      %v2999 = vpop.f32.mrf.mxu0
      %v3000 = vadd.f32 %v2880, %v2999
      %3001 = vdwg.mxu0
      %3002 = vmatpush.bf16.msra.mxu0 0
      %3003 = vmatpush.bf16.msra.mxu0 0
      %3004 = vmatpush.bf16.msra.mxu0 0
      %3005 = vmatpush.bf16.msra.mxu0 0
      %3006 = vmatpush.bf16.msra.mxu0 0
      %3007 = vmatpush.bf16.msra.mxu0 0
      %3008 = vmatpush.bf16.msra.mxu0 %v2825
      %3009 = vmatpush.bf16.msra.mxu0 %v2817
      %3010 = vmatmul.bf16.gmra.mxu0 %v2958
      %v3011 = vpop.f32.mrf.mxu0
      %v3012 = vadd.f32 %v2892, %v3011
      %v3013 = vpop.f32.mrf.mxu0
      %v3014 = vadd.f32 %v2894, %v3013
      %3015 = vdwg.mxu0
      %3016 = vmatpush.bf16.msra.mxu0 0
      %3017 = vmatpush.bf16.msra.mxu0 0
      %3018 = vmatpush.bf16.msra.mxu0 0
      %3019 = vmatpush.bf16.msra.mxu0 0
      %3020 = vmatpush.bf16.msra.mxu0 0
      %3021 = vmatpush.bf16.msra.mxu0 0
      %3022 = vmatpush.bf16.msra.mxu0 %v2826
      %3023 = vmatpush.bf16.msra.mxu0 %v2818
      %3024 = vmatmul.bf16.gmra.mxu0 %v2958
      %v3025 = vpop.f32.mrf.mxu0
      %v3026 = vadd.f32 %v2906, %v3025
      %v3027 = vpop.f32.mrf.mxu0
      %v3028 = vadd.f32 %v2908, %v3027
      %3029 = vdwg.mxu0
      %3030 = vmatpush.bf16.msra.mxu0 0
      %3031 = vmatpush.bf16.msra.mxu0 0
      %3032 = vmatpush.bf16.msra.mxu0 0
      %3033 = vmatpush.bf16.msra.mxu0 0
      %3034 = vmatpush.bf16.msra.mxu0 0
      %3035 = vmatpush.bf16.msra.mxu0 0
      %3036 = vmatpush.bf16.msra.mxu0 %v2827
      %3037 = vmatpush.bf16.msra.mxu0 %v2819
      %3038 = vmatmul.bf16.gmra.mxu0 %v2958
      %v3039 = vpop.f32.mrf.mxu0
      %v3040 = vadd.f32 %v2920, %v3039
      %v3041 = vpop.f32.mrf.mxu0
      %v3042 = vadd.f32 %v2922, %v3041
      %3043 = vdwg.mxu0
      %3044 = vmatpush.bf16.msra.mxu0 0
      %3045 = vmatpush.bf16.msra.mxu0 0
      %3046 = vmatpush.bf16.msra.mxu0 0
      %3047 = vmatpush.bf16.msra.mxu0 0
      %3048 = vmatpush.bf16.msra.mxu0 0
      %3049 = vmatpush.bf16.msra.mxu0 0
      %3050 = vmatpush.bf16.msra.mxu0 %v2828
      %3051 = vmatpush.bf16.msra.mxu0 %v2820
      %3052 = vmatmul.bf16.gmra.mxu0 %v2958
      %v3053 = vpop.f32.mrf.mxu0
      %v3054 = vadd.f32 %v2934, %v3053
      %v3055 = vpop.f32.mrf.mxu0
      %v3056 = vadd.f32 %v2936, %v3055
      %3057 = vdwg.mxu0
      %3058 = vmatpush.bf16.msra.mxu0 0
      %3059 = vmatpush.bf16.msra.mxu0 0
      %3060 = vmatpush.bf16.msra.mxu0 0
      %3061 = vmatpush.bf16.msra.mxu0 0
      %3062 = vmatpush.bf16.msra.mxu0 0
      %3063 = vmatpush.bf16.msra.mxu0 0
      %3064 = vmatpush.bf16.msra.mxu0 %v2829
      %3065 = vmatpush.bf16.msra.mxu0 %v2821
      %3066 = vmatmul.bf16.gmra.mxu0 %v2958
      %v3067 = vpop.f32.mrf.mxu0
      %v3068 = vadd.f32 %v2948, %v3067
      %v3069 = vpop.f32.mrf.mxu0
      %v3070 = vadd.f32 %v2950, %v3069
      %3071 = vdwg.mxu0
      %v3072 = vld [vmem:[%s8] sm:$0xff]
      %v3073 = vld [vmem:[%s8 + $0x8] sm:$0xff]
      %3075 = vset.pattern.permute.xlu0 0
      %3076 = vperm.xlu0 %3075, %v3072
      %v3077 = vpop.permute.xlu0 %3076
      %3080 = vset.pattern.permute.xlu0 0
      %3081 = vperm.xlu0 %3080, %v3073
      %v3082 = vpop.permute.xlu0 %3081
      %v3084 = vadd.f32 %v2970, %v3077
      %v3085 = vadd.f32 %v2984, %v3077
      %v3086 = vadd.f32 %v2998, %v3077
      %v3087 = vadd.f32 %v3012, %v3077
      %v3088 = vadd.f32 %v3026, %v3077
      %v3089 = vadd.f32 %v3040, %v3077
      %v3090 = vadd.f32 %v3054, %v3077
      %v3091 = vadd.f32 %v3068, %v3077
      %v3092 = vadd.f32 %v2972, %v3082
      %v3093 = vadd.f32 %v2986, %v3082
      %v3094 = vadd.f32 %v3000, %v3082
      %v3095 = vadd.f32 %v3014, %v3082
      %v3096 = vadd.f32 %v3028, %v3082
      %v3097 = vadd.f32 %v3042, %v3082
      %v3098 = vadd.f32 %v3056, %v3082
      %v3099 = vadd.f32 %v3070, %v3082
      %v3100 = vmax.f32 %v3084, 0.0
      %v3101 = vmax.f32 %v3085, 0.0
      %v3102 = vmax.f32 %v3086, 0.0
      %v3103 = vmax.f32 %v3087, 0.0
      %v3104 = vmax.f32 %v3088, 0.0
      %v3105 = vmax.f32 %v3089, 0.0
      %v3106 = vmax.f32 %v3090, 0.0
      %v3107 = vmax.f32 %v3091, 0.0
      %v3108 = vmax.f32 %v3092, 0.0
      %v3109 = vmax.f32 %v3093, 0.0
      %v3110 = vmax.f32 %v3094, 0.0
      %v3111 = vmax.f32 %v3095, 0.0
      %v3112 = vmax.f32 %v3096, 0.0
      %v3113 = vmax.f32 %v3097, 0.0
      %v3114 = vmax.f32 %v3098, 0.0
      %v3115 = vmax.f32 %v3099, 0.0
      %v3116 = vld [vmem:[%s9] sm:$0x3]
      %v3117 = vpack.c.bf16 %v3108, %v3100
      %v3118 = vpack.c.bf16 %v3109, %v3101
      %v3119 = vpack.c.bf16 %v3110, %v3102
      %v3120 = vpack.c.bf16 %v3111, %v3103
      %v3121 = vpack.c.bf16 %v3112, %v3104
      %v3122 = vpack.c.bf16 %v3113, %v3105
      %v3123 = vpack.c.bf16 %v3114, %v3106
      %v3124 = vpack.c.bf16 %v3115, %v3107
      %v3125 = vld [vmem:[%s10] sm:$0x7]
      %3127 = vset.pattern.permute.xlu0 0
      %3128 = vperm.xlu0 %3127, %v3125
      %v3129 = vpop.permute.xlu0 %3128
      %vm3131 = vcmask 130048
      %v3133 = vsel %vm3131, %v3116, 0
      %3135 = vmatpush.bf16.msra.mxu0 0
      %3136 = vmatpush.bf16.msra.mxu0 0
      %3137 = vmatpush.bf16.msra.mxu0 0
      %3138 = vmatpush.bf16.msra.mxu0 0
      %3139 = vmatpush.bf16.msra.mxu0 0
      %3140 = vmatpush.bf16.msra.mxu0 0
      %3141 = vmatpush.bf16.msra.mxu0 0
      %3142 = vmatpush.bf16.msra.mxu0 %v3117
      %3143 = vmatmul.bf16.gmra.mxu0 %v3133
      %v3144 = vpop.f32.mrf.mxu0
      %v3145 = vadd.f32 %v3129, %v3144
      %v3146 = vpop.f32.mrf.mxu0
      %3147 = vdwg.mxu0
      %3148 = vmatpush.bf16.msra.mxu0 0
      %3149 = vmatpush.bf16.msra.mxu0 0
      %3150 = vmatpush.bf16.msra.mxu0 0
      %3151 = vmatpush.bf16.msra.mxu0 0
      %3152 = vmatpush.bf16.msra.mxu0 0
      %3153 = vmatpush.bf16.msra.mxu0 0
      %3154 = vmatpush.bf16.msra.mxu0 0
      %3155 = vmatpush.bf16.msra.mxu0 %v3118
      %3156 = vmatmul.bf16.gmra.mxu0 %v3133
      %v3157 = vpop.f32.mrf.mxu0
      %v3158 = vadd.f32 %v3129, %v3157
      %v3159 = vpop.f32.mrf.mxu0
      %3160 = vdwg.mxu0
      %3161 = vmatpush.bf16.msra.mxu0 0
      %3162 = vmatpush.bf16.msra.mxu0 0
      %3163 = vmatpush.bf16.msra.mxu0 0
      %3164 = vmatpush.bf16.msra.mxu0 0
      %3165 = vmatpush.bf16.msra.mxu0 0
      %3166 = vmatpush.bf16.msra.mxu0 0
      %3167 = vmatpush.bf16.msra.mxu0 0
      %3168 = vmatpush.bf16.msra.mxu0 %v3119
      %3169 = vmatmul.bf16.gmra.mxu0 %v3133
      %v3170 = vpop.f32.mrf.mxu0
      %v3171 = vadd.f32 %v3129, %v3170
      %v3172 = vpop.f32.mrf.mxu0
      %3173 = vdwg.mxu0
      %3174 = vmatpush.bf16.msra.mxu0 0
      %3175 = vmatpush.bf16.msra.mxu0 0
      %3176 = vmatpush.bf16.msra.mxu0 0
      %3177 = vmatpush.bf16.msra.mxu0 0
      %3178 = vmatpush.bf16.msra.mxu0 0
      %3179 = vmatpush.bf16.msra.mxu0 0
      %3180 = vmatpush.bf16.msra.mxu0 0
      %3181 = vmatpush.bf16.msra.mxu0 %v3120
      %3182 = vmatmul.bf16.gmra.mxu0 %v3133
      %v3183 = vpop.f32.mrf.mxu0
      %v3184 = vadd.f32 %v3129, %v3183
      %v3185 = vpop.f32.mrf.mxu0
      %3186 = vdwg.mxu0
      %3187 = vmatpush.bf16.msra.mxu0 0
      %3188 = vmatpush.bf16.msra.mxu0 0
      %3189 = vmatpush.bf16.msra.mxu0 0
      %3190 = vmatpush.bf16.msra.mxu0 0
      %3191 = vmatpush.bf16.msra.mxu0 0
      %3192 = vmatpush.bf16.msra.mxu0 0
      %3193 = vmatpush.bf16.msra.mxu0 0
      %3194 = vmatpush.bf16.msra.mxu0 %v3121
      %3195 = vmatmul.bf16.gmra.mxu0 %v3133
      %v3196 = vpop.f32.mrf.mxu0
      %v3197 = vadd.f32 %v3129, %v3196
      %v3198 = vpop.f32.mrf.mxu0
      %3199 = vdwg.mxu0
      %3200 = vmatpush.bf16.msra.mxu0 0
      %3201 = vmatpush.bf16.msra.mxu0 0
      %3202 = vmatpush.bf16.msra.mxu0 0
      %3203 = vmatpush.bf16.msra.mxu0 0
      %3204 = vmatpush.bf16.msra.mxu0 0
      %3205 = vmatpush.bf16.msra.mxu0 0
      %3206 = vmatpush.bf16.msra.mxu0 0
      %3207 = vmatpush.bf16.msra.mxu0 %v3122
      %3208 = vmatmul.bf16.gmra.mxu0 %v3133
      %v3209 = vpop.f32.mrf.mxu0
      %v3210 = vadd.f32 %v3129, %v3209
      %v3211 = vpop.f32.mrf.mxu0
      %3212 = vdwg.mxu0
      %3213 = vmatpush.bf16.msra.mxu0 0
      %3214 = vmatpush.bf16.msra.mxu0 0
      %3215 = vmatpush.bf16.msra.mxu0 0
      %3216 = vmatpush.bf16.msra.mxu0 0
      %3217 = vmatpush.bf16.msra.mxu0 0
      %3218 = vmatpush.bf16.msra.mxu0 0
      %3219 = vmatpush.bf16.msra.mxu0 0
      %3220 = vmatpush.bf16.msra.mxu0 %v3123
      %3221 = vmatmul.bf16.gmra.mxu0 %v3133
      %v3222 = vpop.f32.mrf.mxu0
      %v3223 = vadd.f32 %v3129, %v3222
      %v3224 = vpop.f32.mrf.mxu0
      %3225 = vdwg.mxu0
      %3226 = vmatpush.bf16.msra.mxu0 0
      %3227 = vmatpush.bf16.msra.mxu0 0
      %3228 = vmatpush.bf16.msra.mxu0 0
      %3229 = vmatpush.bf16.msra.mxu0 0
      %3230 = vmatpush.bf16.msra.mxu0 0
      %3231 = vmatpush.bf16.msra.mxu0 0
      %3232 = vmatpush.bf16.msra.mxu0 0
      %3233 = vmatpush.bf16.msra.mxu0 %v3124
      %3234 = vmatmul.bf16.gmra.mxu0 %v3133
      %v3235 = vpop.f32.mrf.mxu0
      %v3236 = vadd.f32 %v3129, %v3235
      %v3237 = vpop.f32.mrf.mxu0
      %3238 = vdwg.mxu0
      %v3247 = vrot.slane %v3158, 4
      %v3248 = vrot.slane %v3184, 4
      %v3249 = vrot.slane %v3210, 4
      %v3250 = vrot.slane %v3236, 4
      %vm3251 = vcmask 1043456
      %v3252 = vsel %vm3251, %v3145, %v3247
      %v3253 = vsel %vm3251, %v3171, %v3248
      %v3254 = vsel %vm3251, %v3197, %v3249
      %v3255 = vsel %vm3251, %v3223, %v3250
      %3260 = vst [vmem:[%s388] sm:$0x77] %v3252
      %3261 = vst [vmem:[%s388 + $0x8] sm:$0x77] %v3253
      %3262 = vst [vmem:[%s388 + $0x10] sm:$0x77] %v3254
      %3263 = vst [vmem:[%s388 + $0x18] sm:$0x77] %v3255
      %v3272 = vrot.slane %v2671, 7
      %v3273 = vrot.slane %v2694, 6
      %v3274 = vrot.slane %v2717, 5
      %v3275 = vrot.slane %v2740, 4
      %v3276 = vrot.slane %v2763, 3
      %v3277 = vrot.slane %v2786, 2
      %v3278 = vrot.slane %v2809, 1
      %vm3279 = vcmask 1040384
      %v3280 = vsel %vm3279, %v2648, %v3272
      %vm3281 = vcmask 1042434
      %v3282 = vsel %vm3281, %v3273, %v3274
      %vm3283 = vcmask 1041408
      %v3284 = vsel %vm3283, %v3280, %v3282
      %vm3285 = vcmask 1044484
      %v3286 = vsel %vm3285, %v3275, %v3276
      %vm3287 = vcmask 1046534
      %v3288 = vsel %vm3287, %v3277, %v3278
      %vm3289 = vcmask 1045508
      %v3290 = vsel %vm3289, %v3286, %v3288
      %v3291 = vsel %vm3251, %v3284, %v3290
      %s3293 = scalar_lea.vmem %s388, 3
      %3294 = vst [vmem:[%s3293] ss:$4 sm:$0xff] %v3291
      %s3295 = smul.u32 8, %s22
      %p3296 = scmp.lt.s32.totalorder %s3295, 63
      %s3297 = scalar_select %p3296, %s3295, 63
      %s3298 = smul.addr %s3297, 4
      %s3299 = scalar_lea.vmem %s11, %s3298
      // Predicated region
      $region65: #{nerf_forward.1} parent=63 // pred_check
        %p3300 = pneg %p276
      $region66: #{nerf_forward.1} parent=63 // pred_check_branch
        %3302 = sbr.rel (%p3300) target = $region68
      $region67: #{nerf_forward.1} parent=63 // pred_region
        %s3303 = smul.u32 8, %s22
      $region68: #{nerf_forward.1} parent=63 // pred_fallthru
        _
    $region64: #{nerf_forward.1} parent=5 // pred_fallthru
      _
    %p3304 = scmp.le.s32.totalorder 2, %s17
    // Predicated region
    $region69: #{nerf_forward.1} parent=5 // pred_check
      %p3305 = pneg %p3304
    $region70: #{nerf_forward.1} parent=5 // pred_check_branch
      %3307 = sbr.rel (%p3305) target = $region72
    $region71: #{nerf_forward.1} parent=5 // pred_region
      %s3308 = ssub.s32 %s17, 2
      // Predicated region
      $region73: #{nerf_forward.1} parent=71 // pred_check
        %p3309 = pneg %p282
      $region74: #{nerf_forward.1} parent=71 // pred_check_branch
        %3311 = sbr.rel (%p3309) target = $region76
      $region75: #{nerf_forward.1} parent=71 // pred_region
        %s3312 = smul.u32 8, %s23
        %p3313 = scmp.lt.s32.totalorder %s3312, 63
        %s3314 = scalar_select %p3313, %s3312, 63
        %s3315 = smul.addr %s3314, 4
        %s3316 = scalar_lea.vmem %s11, %s3315
      $region76: #{nerf_forward.1} parent=71 // pred_fallthru
        _
    $region72: #{nerf_forward.1} parent=5 // pred_fallthru
      _
  $region6: #{nerf_forward.1} parent=0 // loop_footer
    %s21 = sadd.s32 1, %s17
  $region7: #{nerf_forward.1} parent=0 // loop_footer_branch
    %16 = sbr.rel target = $region3
  $region8: #{nerf_forward.1} parent=0 // loop_exit
    _

</llo_original>
